<compile_context>
chip_gen: v7x
topology: tpu7x:2x2x1
jax: 0.10.0
libtpu: 0.0.40
codegen_flags: <defaults>
</compile_context>

<pallas_src>
import jax
import jax.numpy as jnp
from jax.experimental import pallas as pl
from jax.experimental.pallas import tpu as pltpu


def transfer_kernel(v_ref, w2_ref, fc1w_ref, fc1b_ref, o_ref):
    # v_ref:    (B_blk, C, S)  feature-map block, native NCHW-flattened layout
    # w2_ref:   (H, C)         conv2 1x1 weight (resident across the batch grid)
    # fc1w_ref: (P, S)         fc1 weight in its native (out_features, in_features) form
    # fc1b_ref: (P, 1)         fc1 bias as a column
    # o_ref:    (B_blk, P, H)  final output block (already in the PyTorch layout)
    bias = fc1b_ref[...]                                    # (P, 1) -- tiny, hoisted
    b_blk = o_ref.shape[0]
    for i in range(b_blk):                                  # static, fully unrolled
        # 1x1 conv == channel matmul on the MXU: (H, C) @ (C, S) -> (H, S), f32 acc.
        a = jnp.dot(w2_ref[...], v_ref[i],
                    preferred_element_type=jnp.float32)
        # fc1 + final transpose fused into one MXU call (A @ B^T, contracts S):
        #   out_t[p, h] = sum_s fc1_w[p, s] * a[h, s]
        out_t = jax.lax.dot_general(
            fc1w_ref[...], a,
            dimension_numbers=(((1,), (1,)), ((), ())),
            preferred_element_type=jnp.float32)             # (P, H)
        o_ref[i] = (out_t + bias).astype(o_ref.dtype)


def _round_up(x, m):
    return (x + m - 1) // m * m


def _padded_tile_bytes(rows, cols, itemsize):
    # VMEM tiles pad the sublane dim to a packed multiple of 8 and the lane dim to 128.
    sub = 8 * (4 // itemsize)            # 8 rows/vreg for f32, 16 for bf16
    return _round_up(rows, sub) * _round_up(cols, 128) * itemsize


def _pick_block_b(batch, C, S, H, P, in_itemsize,
                  vmem_budget=16 * 1024 * 1024, max_block=8):
    """Largest batch block that fits a conservative VMEM budget (double-buffered),
    capped at `max_block`, preferring >= 2 grid steps (megacore on v7x)."""
    per_elem = (2 * _padded_tile_bytes(C, S, in_itemsize)    # input block, 2 buffers
                + 2 * _padded_tile_bytes(P, H, 4))           # output block, 2 buffers
    resident = (2 * _padded_tile_bytes(H, C, in_itemsize)
                + 2 * _padded_tile_bytes(P, S, 4)
                + 2 * _padded_tile_bytes(P, 1, 4))
    best = 1
    for bb in range(1, min(batch, max_block) + 1):
        if batch % bb == 0 and resident + bb * per_elem <= vmem_budget:
            best = bb
    if batch // best < 2:                                    # keep >= 2 steps if possible
        for bb in range(best - 1, 0, -1):
            if batch % bb == 0 and batch // bb >= 2:
                best = bb
                break
    return best


def transfer_forward(feat_nchw, w2, fc1_w, fc1_b, *, block_b=None, cast_bf16=True):
    """feat_nchw: (B, 2048, 7, 7) float32 backbone output (NCHW)
       w2:        (H, 2048)  conv2 1x1 weight (out_ch, in_ch)
       fc1_w:     (P, 49)    fc1 weight
       fc1_b:     (P,)       fc1 bias
       returns    (B, P, H)  float32
    """
    B, C, Hh, Ww = feat_nchw.shape
    S = Hh * Ww                        # 49
    H = w2.shape[0]                    # hidden_size
    P = fc1_w.shape[0]                 # max_position_embeddings

    in_itemsize = 2 if cast_bf16 else 4
    if block_b is None:
        block_b = _pick_block_b(B, C, S, H, P, in_itemsize)
    assert B % block_b == 0, (B, block_b)

    # Free reshape of the contiguous NCHW map; NO big feature-map transpose anywhere,
    # and no output transpose either (the kernel emits (B, P, H) directly).
    v = feat_nchw.reshape(B, C, S)
    w2k = w2
    if cast_bf16:
        v = v.astype(jnp.bfloat16)
        w2k = w2.astype(jnp.bfloat16)
    fc1_b_col = fc1_b.reshape(P, 1)

    bytes_accessed = (B * C * S * in_itemsize      # feature map
                      + H * C * in_itemsize        # conv2 weight
                      + P * S * 4 + P * 4          # fc1 weight + bias
                      + B * P * H * 4)             # output
    cost = pl.CostEstimate(
        flops=2 * B * H * S * (C + P),
        transcendentals=0,
        bytes_accessed=int(bytes_accessed),
    )

    return pl.pallas_call(
        transfer_kernel,
        out_shape=jax.ShapeDtypeStruct((B, P, H), jnp.float32),
        grid_spec=pltpu.PrefetchScalarGridSpec(
            num_scalar_prefetch=0,
            grid=(B // block_b,),
            in_specs=[
                pl.BlockSpec((block_b, C, S), lambda b: (b, 0, 0)),
                pl.BlockSpec((H, C), lambda b: (0, 0)),
                pl.BlockSpec((P, S), lambda b: (0, 0)),
                pl.BlockSpec((P, 1), lambda b: (0, 0)),
            ],
            out_specs=pl.BlockSpec((block_b, P, H), lambda b: (b, 0, 0)),
        ),
        compiler_params=pltpu.CompilerParams(
            dimension_semantics=("parallel",),
        ),
        cost_estimate=cost,
    )(v, w2k, fc1_w, fc1_b_col)


def transfer_reference(feat_nchw, w2, fc1_w, fc1_b):
    """Pure-JAX reference matching the PyTorch semantics exactly (float32)."""
    B, C, Hh, Ww = feat_nchw.shape
    H = w2.shape[0]
    # 1x1 conv, no bias: out[b,h,y,x] = sum_c w2[h,c] * feat[b,c,y,x]
    v = jnp.einsum("hc,bcyx->bhyx", w2, feat_nchw)
    v = v.reshape(B, H, Hh * Ww)                          # (B, H, 49)
    v = jnp.einsum("ps,bhs->bhp", fc1_w, v) + fc1_b       # Linear over last dim
    return jnp.transpose(v, (0, 2, 1))                    # (B, P, H)


if __name__ == "__main__":
    # Small, deterministic shapes consistent with the module:
    #   conv2 in_channels fixed to 2048 by the module; spatial must be 7x7 (view to 49).
    B = 4
    C_IN = 2048
    SP = 7
    HIDDEN = 64                   # args.hidden_size
    MAX_POS = 32                  # args.max_position_embeddings

    key = jax.random.PRNGKey(0)
    k_feat, k_w2, k_fw, k_fb = jax.random.split(key, 4)

    # "feat" here is the backbone output feature map (see TODO(synk) above).
    feat = jax.random.normal(k_feat, (B, C_IN, SP, SP), dtype=jnp.float32)
    w2 = jax.random.normal(k_w2, (HIDDEN, C_IN), dtype=jnp.float32) * 0.02
    fc1_w = jax.random.normal(k_fw, (MAX_POS, SP * SP), dtype=jnp.float32) * 0.1
    fc1_b = jax.random.normal(k_fb, (MAX_POS,), dtype=jnp.float32) * 0.1

    ref = transfer_reference(feat, w2, fc1_w, fc1_b)

    # 1) Exact-semantics path (f32 inputs): tight tolerance.
    out_f32 = jax.block_until_ready(
        transfer_forward(feat, w2, fc1_w, fc1_b, cast_bf16=False))
    assert out_f32.shape == (B, MAX_POS, HIDDEN), out_f32.shape
    assert jnp.allclose(out_f32, ref, atol=2e-3, rtol=2e-3), \
        float(jnp.max(jnp.abs(out_f32 - ref)))

    # 2) Optimized path (bf16 feature map + conv2 weight, f32 accumulation):
    #    bf16 input quantization over K=2048 -> bf16-appropriate tolerance.
    out = jax.block_until_ready(transfer_forward(feat, w2, fc1_w, fc1_b, cast_bf16=True))
    assert out.shape == (B, MAX_POS, HIDDEN), out.shape
    assert jnp.allclose(out, ref, atol=2.5e-2, rtol=2.5e-2), \
        float(jnp.max(jnp.abs(out - ref)))

    print("KERNEL_OK")
</pallas_src>

<mosaic_0001>
module attributes {stable_mosaic.version = 11 : i64} {
  func.func @transfer_kernel(%arg0: i32, %arg1: memref<2x2048x49xf32, #tpu.memory_space<vmem>>, %arg2: memref<64x2048xf32, #tpu.memory_space<vmem>>, %arg3: memref<32x49xf32, #tpu.memory_space<vmem>>, %arg4: memref<32x1xf32, #tpu.memory_space<vmem>>, %arg5: memref<2x32x64xf32, #tpu.memory_space<vmem>>) attributes {dimension_semantics = [#tpu.dimension_semantics<parallel>], iteration_bounds = array<i64: 2>, scalar_prefetch = 0 : i64, scratch_operands = 0 : i64, tpu.core_type = #tpu.core_type<tc>, window_params = [{transform_indices = @transform_0, window_bounds = array<i64: 2, 2048, 49>}, {pipeline_mode = #tpu.pipeline_mode<synchronous>, transform_indices = @transform_1, window_bounds = array<i64: 64, 2048>}, {pipeline_mode = #tpu.pipeline_mode<synchronous>, transform_indices = @transform_2, window_bounds = array<i64: 32, 49>}, {pipeline_mode = #tpu.pipeline_mode<synchronous>, transform_indices = @transform_3, window_bounds = array<i64: 32, 1>}, {transform_indices = @transform_4, window_bounds = array<i64: 2, 32, 64>}]} {
    %c0 = arith.constant 0 : index
    %c0_0 = arith.constant 0 : index
    %0 = vector.load %arg4[%c0, %c0_0] : memref<32x1xf32, #tpu.memory_space<vmem>>, vector<32x1xf32>
    %c0_1 = arith.constant 0 : index
    %c0_2 = arith.constant 0 : index
    %1 = vector.load %arg2[%c0_1, %c0_2] : memref<64x2048xf32, #tpu.memory_space<vmem>>, vector<64x2048xf32>
    %c0_3 = arith.constant 0 : index
    %c0_4 = arith.constant 0 : index
    %c0_5 = arith.constant 0 : index
    %2 = vector.load %arg1[%c0_3, %c0_4, %c0_5] : memref<2x2048x49xf32, #tpu.memory_space<vmem>>, vector<1x2048x49xf32>
    %3 = vector.shape_cast %2 : vector<1x2048x49xf32> to vector<2048x49xf32>
    %cst = arith.constant dense<0.000000e+00> : vector<64x49xf32>
    %4 = tpu.matmul %1, %3, %cst {dimension_numbers = #tpu.dot_dimension_numbers<[1], [0], [0], [1], [0, 0, 1, 1], [], []>} : vector<64x2048xf32>, vector<2048x49xf32>, vector<64x49xf32> -> vector<64x49xf32>
    %c0_6 = arith.constant 0 : index
    %c0_7 = arith.constant 0 : index
    %5 = vector.load %arg3[%c0_6, %c0_7] : memref<32x49xf32, #tpu.memory_space<vmem>>, vector<32x49xf32>
    %cst_8 = arith.constant dense<0.000000e+00> : vector<32x64xf32>
    %6 = tpu.matmul %5, %4, %cst_8 {dimension_numbers = #tpu.dot_dimension_numbers<[1], [1], [0], [0], [0, 0, 1, 0], [], []>} : vector<32x49xf32>, vector<64x49xf32>, vector<32x64xf32> -> vector<32x64xf32>
    %7 = vector.broadcast %0 : vector<32x1xf32> to vector<32x64xf32>
    %8 = arith.addf %6, %7 : vector<32x64xf32>
    %c0_9 = arith.constant 0 : index
    %c0_10 = arith.constant 0 : index
    %c0_11 = arith.constant 0 : index
    %9 = vector.load %arg5[%c0_9, %c0_10, %c0_11] : memref<2x32x64xf32, #tpu.memory_space<vmem>>, vector<1x32x64xf32>
    %10 = vector.shape_cast %9 : vector<1x32x64xf32> to vector<32x64xf32>
    %11 = vector.shape_cast %8 : vector<32x64xf32> to vector<1x32x64xf32>
    tpu.vector_store %arg5[%c0_9, %c0_10, %c0_11], %11 {strides = array<i32>} : memref<2x32x64xf32, #tpu.memory_space<vmem>>, vector<1x32x64xf32>,
    %c0_12 = arith.constant 0 : index
    %c0_13 = arith.constant 0 : index
    %12 = vector.load %arg2[%c0_12, %c0_13] : memref<64x2048xf32, #tpu.memory_space<vmem>>, vector<64x2048xf32>
    %c1 = arith.constant 1 : index
    %c0_14 = arith.constant 0 : index
    %c0_15 = arith.constant 0 : index
    %13 = vector.load %arg1[%c1, %c0_14, %c0_15] : memref<2x2048x49xf32, #tpu.memory_space<vmem>>, vector<1x2048x49xf32>
    %14 = vector.shape_cast %13 : vector<1x2048x49xf32> to vector<2048x49xf32>
    %cst_16 = arith.constant dense<0.000000e+00> : vector<64x49xf32>
    %15 = tpu.matmul %12, %14, %cst_16 {dimension_numbers = #tpu.dot_dimension_numbers<[1], [0], [0], [1], [0, 0, 1, 1], [], []>} : vector<64x2048xf32>, vector<2048x49xf32>, vector<64x49xf32> -> vector<64x49xf32>
    %c0_17 = arith.constant 0 : index
    %c0_18 = arith.constant 0 : index
    %16 = vector.load %arg3[%c0_17, %c0_18] : memref<32x49xf32, #tpu.memory_space<vmem>>, vector<32x49xf32>
    %cst_19 = arith.constant dense<0.000000e+00> : vector<32x64xf32>
    %17 = tpu.matmul %16, %15, %cst_19 {dimension_numbers = #tpu.dot_dimension_numbers<[1], [1], [0], [0], [0, 0, 1, 0], [], []>} : vector<32x49xf32>, vector<64x49xf32>, vector<32x64xf32> -> vector<32x64xf32>
    %18 = vector.broadcast %0 : vector<32x1xf32> to vector<32x64xf32>
    %19 = arith.addf %17, %18 : vector<32x64xf32>
    %c1_20 = arith.constant 1 : index
    %c0_21 = arith.constant 0 : index
    %c0_22 = arith.constant 0 : index
    %20 = vector.load %arg5[%c1_20, %c0_21, %c0_22] : memref<2x32x64xf32, #tpu.memory_space<vmem>>, vector<1x32x64xf32>
    %21 = vector.shape_cast %20 : vector<1x32x64xf32> to vector<32x64xf32>
    %22 = vector.shape_cast %19 : vector<32x64xf32> to vector<1x32x64xf32>
    tpu.vector_store %arg5[%c1_20, %c0_21, %c0_22], %22 {strides = array<i32>} : memref<2x32x64xf32, #tpu.memory_space<vmem>>, vector<1x32x64xf32>,
    return
  }
  func.func @transform_0(%arg0: i32) -> (i32, i32, i32) {
    %c0_i32 = arith.constant 0 : i32
    %c0_i32_0 = arith.constant 0 : i32
    %c0_i32_1 = arith.constant 0 : i32
    return %arg0, %c0_i32, %c0_i32_0 : i32, i32, i32
  }
  func.func @transform_1(%arg0: i32) -> (i32, i32) {
    %c0_i32 = arith.constant 0 : i32
    %c0_i32_0 = arith.constant 0 : i32
    %c0_i32_1 = arith.constant 0 : i32
    return %c0_i32, %c0_i32_0 : i32, i32
  }
  func.func @transform_2(%arg0: i32) -> (i32, i32) {
    %c0_i32 = arith.constant 0 : i32
    %c0_i32_0 = arith.constant 0 : i32
    %c0_i32_1 = arith.constant 0 : i32
    return %c0_i32, %c0_i32_0 : i32, i32
  }
  func.func @transform_3(%arg0: i32) -> (i32, i32) {
    %c0_i32 = arith.constant 0 : i32
    %c0_i32_0 = arith.constant 0 : i32
    %c0_i32_1 = arith.constant 0 : i32
    return %c0_i32, %c0_i32_0 : i32, i32
  }
  func.func @transform_4(%arg0: i32) -> (i32, i32, i32) {
    %c0_i32 = arith.constant 0 : i32
    %c0_i32_0 = arith.constant 0 : i32
    %c0_i32_1 = arith.constant 0 : i32
    return %arg0, %c0_i32, %c0_i32_0 : i32, i32, i32
  }
}

</mosaic_0001>

<llo_original>
// kernel: tpu_custom_call.1
$region0: #{tpu_custom_call.1}
  #allocation0 [shape = 'u32[]', space=smem, size = 0x4, offset = 0x4, fixed_abs, tag = 'smem constant byte address 0x4 - core index']
  #allocation1 [shape = 'u32[144,128]{1,0:T(1,128)}', space=vmem, size = 0x12000, scoped, tag = 'internal scratch']
  %s0 = inlined_call_operand.vmem [shape: f32[4,2048,49], index: 0, kind: input, shape index: {}]
  %s1 = inlined_call_operand.vmem [shape: f32[64,2048], index: 1, kind: input, shape index: {}]
  %s2 = inlined_call_operand.vmem [shape: f32[32,49], index: 2, kind: input, shape index: {}]
  %s3 = inlined_call_operand.vmem [shape: f32[32,1], index: 3, kind: input, shape index: {}]
  %s4 = inlined_call_operand.hbm [shape: f32[4,32,64], index: 4, kind: output, shape index: {}]
  %s5 = sld [smem:[#allocation0]]
  $region49: #{tpu_custom_call.1} parent=0
    _
  %s7 = ssub.s32 1, %s5
  %s8 = scalar_select 0, %s7, %s5
  $region1: #{tpu_custom_call.1} parent=0
    #allocation2 [shape = 'u8[65536]{0}', space=vmem, size = 0x10000, scoped, tag = 'output window, operand 0']
    #allocation3 [shape = 's32[2]{0}', space=sflag, size = 0x8, scoped, tag = 'scoped memory for tpu_custom_call.1']
    %9 = vsyncpa [#allocation3], 0
    %s10 = scalar_lea.sflag [#allocation3], 1
    %11 = vsyncpa %s10, 0
    loop: start=0, step=1, limit=4
    $region2: #{tpu_custom_call.1} parent=1 // loop_pre_header
      _
    $region3: #{tpu_custom_call.1} parent=1 // loop_header
      %s13 = sphi 0, %s17
      %p14 = scmp.ge.s32.totalorder %s13, 4
      %s23 = sphi 0, %s25
      %s26 = sphi 0, %s23
      %s27 = sphi 0, %s26
      %s43 = sphi 0, %s27
      %s47 = sphi 0, %s47
      %s49 = sphi 0, %s47
      %s50 = sphi 0, %s49
      %s64 = sphi 0, %s50
      %s68 = sphi 0, %s68
      %s70 = sphi 0, %s68
      %s71 = sphi 0, %s70
      %s85 = sphi 0, %s71
      %s89 = sphi 0, %s89
      %s91 = sphi 0, %s89
      %s92 = sphi 0, %s91
      %s106 = sphi 0, %s92
      %s112 = sphi 0, %s114
      %s115 = sphi 0, %s112
      %s116 = sphi 0, %s115
      %s132 = sphi 0, %s116
    $region4: #{tpu_custom_call.1} parent=1 // loop_header_branch
      %16 = sbr.rel (%p14) target = $region8
    $region5: #{tpu_custom_call.1} parent=1 // loop_body
      %s18 = ssub.s32 %s13, 1
      %s19 = ssub.s32 %s13, 2
      %s20 = sadd.s32 %s13, 1
      %s21 = ssub.s32 %s13, %s20
      %p22 = scmp.eq.s32.totalorder %s21, 0
      %s24 = sadd.s32 %s23, 1
      %s25 = scalar_select %p22, %s23, %s24
      %p28 = pneg %p22
      %p29 = scmp.eq.s32.totalorder %s13, 1
      %p30 = por %p28, %p29
      %p31 = scmp.ne.s32.totalorder %s23, %s26
      %p32 = scmp.eq.s32.totalorder %s13, 0
      %p33 = por %p31, %p32
      %p34 = scmp.ne.s32.totalorder %s23, %s26
      %p35 = scmp.eq.s32.totalorder %s18, 1
      %p36 = por %p34, %p35
      %p37 = scmp.ne.s32.totalorder %s26, %s27
      %p38 = scmp.eq.s32.totalorder %s18, 0
      %p39 = por %p37, %p38
      %p40 = scmp.ne.s32.totalorder %s26, %s27
      %p41 = scmp.eq.s32.totalorder %s19, 1
      %p42 = por %p40, %p41
      %p44 = scmp.ne.s32.totalorder %s27, %s43
      %p45 = scmp.eq.s32.totalorder %s19, 0
      %p46 = por %p44, %p45
      %s48 = sadd.s32 %s47, 1
      %p51 = scmp.eq.s32.totalorder %s13, 1
      %p52 = scmp.ne.s32.totalorder %s47, %s49
      %p53 = scmp.eq.s32.totalorder %s13, 0
      %p54 = por %p52, %p53
      %p55 = scmp.ne.s32.totalorder %s47, %s49
      %p56 = scmp.eq.s32.totalorder %s18, 1
      %p57 = por %p55, %p56
      %p58 = scmp.ne.s32.totalorder %s49, %s50
      %p59 = scmp.eq.s32.totalorder %s18, 0
      %p60 = por %p58, %p59
      %p61 = scmp.ne.s32.totalorder %s49, %s50
      %p62 = scmp.eq.s32.totalorder %s19, 1
      %p63 = por %p61, %p62
      %p65 = scmp.ne.s32.totalorder %s50, %s64
      %p66 = scmp.eq.s32.totalorder %s19, 0
      %p67 = por %p65, %p66
      %s69 = sadd.s32 %s68, 1
      %p72 = scmp.eq.s32.totalorder %s13, 1
      %p73 = scmp.ne.s32.totalorder %s68, %s70
      %p74 = scmp.eq.s32.totalorder %s13, 0
      %p75 = por %p73, %p74
      %p76 = scmp.ne.s32.totalorder %s68, %s70
      %p77 = scmp.eq.s32.totalorder %s18, 1
      %p78 = por %p76, %p77
      %p79 = scmp.ne.s32.totalorder %s70, %s71
      %p80 = scmp.eq.s32.totalorder %s18, 0
      %p81 = por %p79, %p80
      %p82 = scmp.ne.s32.totalorder %s70, %s71
      %p83 = scmp.eq.s32.totalorder %s19, 1
      %p84 = por %p82, %p83
      %p86 = scmp.ne.s32.totalorder %s71, %s85
      %p87 = scmp.eq.s32.totalorder %s19, 0
      %p88 = por %p86, %p87
      %s90 = sadd.s32 %s89, 1
      %p93 = scmp.eq.s32.totalorder %s13, 1
      %p94 = scmp.ne.s32.totalorder %s89, %s91
      %p95 = scmp.eq.s32.totalorder %s13, 0
      %p96 = por %p94, %p95
      %p97 = scmp.ne.s32.totalorder %s89, %s91
      %p98 = scmp.eq.s32.totalorder %s18, 1
      %p99 = por %p97, %p98
      %p100 = scmp.ne.s32.totalorder %s91, %s92
      %p101 = scmp.eq.s32.totalorder %s18, 0
      %p102 = por %p100, %p101
      %p103 = scmp.ne.s32.totalorder %s91, %s92
      %p104 = scmp.eq.s32.totalorder %s19, 1
      %p105 = por %p103, %p104
      %p107 = scmp.ne.s32.totalorder %s92, %s106
      %p108 = scmp.eq.s32.totalorder %s19, 0
      %p109 = por %p107, %p108
      %s110 = ssub.s32 %s13, %s20
      %p111 = scmp.eq.s32.totalorder %s110, 0
      %s113 = sadd.s32 %s112, 1
      %s114 = scalar_select %p111, %s112, %s113
      %p117 = pneg %p111
      %p118 = scmp.eq.s32.totalorder %s13, 1
      %p119 = por %p117, %p118
      %p120 = scmp.ne.s32.totalorder %s112, %s115
      %p121 = scmp.eq.s32.totalorder %s13, 0
      %p122 = por %p120, %p121
      %p123 = scmp.ne.s32.totalorder %s112, %s115
      %p124 = scmp.eq.s32.totalorder %s18, 1
      %p125 = por %p123, %p124
      %p126 = scmp.ne.s32.totalorder %s115, %s116
      %p127 = scmp.eq.s32.totalorder %s18, 0
      %p128 = por %p126, %p127
      %p129 = scmp.ne.s32.totalorder %s115, %s116
      %p130 = scmp.eq.s32.totalorder %s19, 1
      %p131 = por %p129, %p130
      %p133 = scmp.ne.s32.totalorder %s116, %s132
      %p134 = scmp.eq.s32.totalorder %s19, 0
      %p135 = por %p133, %p134
      %p136 = scmp.le.s32.totalorder 1, %s13
      %p137 = scmp.lt.s32.totalorder %s13, 3
      %p138 = pnand %p136, %p137
      %p139 = pneg %p138
      // Predicated region
      $region9: #{tpu_custom_call.1} parent=5 // pred_check
        _
      $region10: #{tpu_custom_call.1} parent=5 // pred_check_branch
        %141 = sbr.rel (%p138) target = $region12
      $region11: #{tpu_custom_call.1} parent=5 // pred_region
        %s142 = ssub.s32 %s13, 1
        // Predicated region
        $region13: #{tpu_custom_call.1} parent=11 // pred_check
          %p143 = pneg %p60
        $region14: #{tpu_custom_call.1} parent=11 // pred_check_branch
          %145 = sbr.rel (%p143) target = $region16
        $region15: #{tpu_custom_call.1} parent=11 // pred_region
          _
        $region16: #{tpu_custom_call.1} parent=11 // pred_fallthru
          _
        // Predicated region
        $region17: #{tpu_custom_call.1} parent=11 // pred_check
          %p146 = pneg %p81
        $region18: #{tpu_custom_call.1} parent=11 // pred_check_branch
          %148 = sbr.rel (%p146) target = $region20
        $region19: #{tpu_custom_call.1} parent=11 // pred_region
          _
        $region20: #{tpu_custom_call.1} parent=11 // pred_fallthru
          _
        // Predicated region
        $region21: #{tpu_custom_call.1} parent=11 // pred_check
          %p149 = pneg %p102
        $region22: #{tpu_custom_call.1} parent=11 // pred_check_branch
          %151 = sbr.rel (%p149) target = $region24
        $region23: #{tpu_custom_call.1} parent=11 // pred_region
          _
        $region24: #{tpu_custom_call.1} parent=11 // pred_fallthru
          _
      $region12: #{tpu_custom_call.1} parent=5 // pred_fallthru
        _
      %p152 = scmp.lt.s32.totalorder %s13, 2
      // Predicated region
      $region25: #{tpu_custom_call.1} parent=5 // pred_check
        %p153 = pneg %p152
      $region26: #{tpu_custom_call.1} parent=5 // pred_check_branch
        %155 = sbr.rel (%p153) target = $region28
      $region27: #{tpu_custom_call.1} parent=5 // pred_region
        // Predicated region
        $region29: #{tpu_custom_call.1} parent=27 // pred_check
          %p156 = pneg %p33
        $region30: #{tpu_custom_call.1} parent=27 // pred_check_branch
          %158 = sbr.rel (%p156) target = $region32
        $region31: #{tpu_custom_call.1} parent=27 // pred_region
          %s159 = smul.u32 2, %s13
          %p160 = scmp.lt.s32.totalorder %s159, 3
          %s161 = scalar_select %p160, %s159, 3
          %s162 = smul.addr %s161, 256
          %s163 = smul.addr %s162, 8
          %s164 = scalar_lea.vmem %s0, %s163
          %s165 = smul.u32 2, %s13
        $region32: #{tpu_custom_call.1} parent=27 // pred_fallthru
          _
      $region28: #{tpu_custom_call.1} parent=5 // pred_fallthru
        _
      %p166 = scmp.le.s32.totalorder 1, %s13
      %p167 = scmp.lt.s32.totalorder %s13, 3
      %p168 = pnand %p166, %p167
      %p169 = pneg %p168
      // Predicated region
      $region33: #{tpu_custom_call.1} parent=5 // pred_check
        _
      $region34: #{tpu_custom_call.1} parent=5 // pred_check_branch
        %171 = sbr.rel (%p168) target = $region36
      $region35: #{tpu_custom_call.1} parent=5 // pred_region
        %s172 = ssub.s32 %s13, 1
        %s173 = smul.u32 2, %s18
        %p174 = scmp.lt.s32.totalorder %s173, 3
        %s175 = scalar_select %p174, %s173, 3
        %s176 = smul.addr %s175, 256
        %s177 = smul.addr %s176, 8
        %s178 = scalar_lea.vmem %s0, %s177
        %p179 = pneg %p39
        %p180 = pneg %p36
        %p181 = pneg %p60
        %p182 = pneg %p57
        %p183 = pneg %p81
        %p184 = pneg %p78
        %p185 = pneg %p102
        %p186 = pneg %p99
        %p187 = pneg %p128
        %p188 = pneg %p125
        %s189 = sand.u32 %s115, 1
        %s190 = scalar_lea.sflag [#allocation3], %s189
        %s191 = sand.u32 %s115, 1
        %s192 = smul.addr %s191, 64
        %s193 = scalar_lea.vmem [#allocation2], %s192
        %s194 = smul.u32 2, %s18
        %p195 = scmp.lt.s32.totalorder %s194, 3
        %s196 = scalar_select %p195, %s194, 3
        %s197 = smul.addr %s196, 256
        %s198 = smul.addr %s197, 8
        %s199 = scalar_lea.vmem %s0, %s198
        %s200 = smul.u32 2, %s18
        %s201 = smul.u32 2, %s18
        %v202 = vld [vmem:[%s3] sm:$0xff]
        %v203 = vld [vmem:[%s3 + $0x8] sm:$0xff]
        %v204 = vld [vmem:[%s3 + $0x10] sm:$0xff]
        %v205 = vld [vmem:[%s3 + $0x18] sm:$0xff]
        %v206 = vld [vmem:[%s1] sm:$0xff]
        %v207 = vld [vmem:[%s1 + $0x8] sm:$0xff]
        %v208 = vld [vmem:[%s1 + $0x10] sm:$0xff]
        %v209 = vld [vmem:[%s1 + $0x18] sm:$0xff]
        %v210 = vld [vmem:[%s1 + $0x20] sm:$0xff]
        %v211 = vld [vmem:[%s1 + $0x28] sm:$0xff]
        %v212 = vld [vmem:[%s1 + $0x30] sm:$0xff]
        %v213 = vld [vmem:[%s1 + $0x38] sm:$0xff]
        %v214 = vld [vmem:[%s1 + $0x40] sm:$0xff]
        %v215 = vld [vmem:[%s1 + $0x48] sm:$0xff]
        %v216 = vld [vmem:[%s1 + $0x50] sm:$0xff]
        %v217 = vld [vmem:[%s1 + $0x58] sm:$0xff]
        %v218 = vld [vmem:[%s1 + $0x60] sm:$0xff]
        %v219 = vld [vmem:[%s1 + $0x68] sm:$0xff]
        %v220 = vld [vmem:[%s1 + $0x70] sm:$0xff]
        %v221 = vld [vmem:[%s1 + $0x78] sm:$0xff]
        %v222 = vld [vmem:[%s1 + $0x80] sm:$0xff]
        %v223 = vld [vmem:[%s1 + $0x88] sm:$0xff]
        %v224 = vld [vmem:[%s1 + $0x90] sm:$0xff]
        %v225 = vld [vmem:[%s1 + $0x98] sm:$0xff]
        %v226 = vld [vmem:[%s1 + $0xa0] sm:$0xff]
        %v227 = vld [vmem:[%s1 + $0xa8] sm:$0xff]
        %v228 = vld [vmem:[%s1 + $0xb0] sm:$0xff]
        %v229 = vld [vmem:[%s1 + $0xb8] sm:$0xff]
        %v230 = vld [vmem:[%s1 + $0xc0] sm:$0xff]
        %v231 = vld [vmem:[%s1 + $0xc8] sm:$0xff]
        %v232 = vld [vmem:[%s1 + $0xd0] sm:$0xff]
        %v233 = vld [vmem:[%s1 + $0xd8] sm:$0xff]
        %v234 = vld [vmem:[%s1 + $0xe0] sm:$0xff]
        %v235 = vld [vmem:[%s1 + $0xe8] sm:$0xff]
        %v236 = vld [vmem:[%s1 + $0xf0] sm:$0xff]
        %v237 = vld [vmem:[%s1 + $0xf8] sm:$0xff]
        %v238 = vld [vmem:[%s1 + $0x100] sm:$0xff]
        %v239 = vld [vmem:[%s1 + $0x108] sm:$0xff]
        %v240 = vld [vmem:[%s1 + $0x110] sm:$0xff]
        %v241 = vld [vmem:[%s1 + $0x118] sm:$0xff]
        %v242 = vld [vmem:[%s1 + $0x120] sm:$0xff]
        %v243 = vld [vmem:[%s1 + $0x128] sm:$0xff]
        %v244 = vld [vmem:[%s1 + $0x130] sm:$0xff]
        %v245 = vld [vmem:[%s1 + $0x138] sm:$0xff]
        %v246 = vld [vmem:[%s1 + $0x140] sm:$0xff]
        %v247 = vld [vmem:[%s1 + $0x148] sm:$0xff]
        %v248 = vld [vmem:[%s1 + $0x150] sm:$0xff]
        %v249 = vld [vmem:[%s1 + $0x158] sm:$0xff]
        %v250 = vld [vmem:[%s1 + $0x160] sm:$0xff]
        %v251 = vld [vmem:[%s1 + $0x168] sm:$0xff]
        %v252 = vld [vmem:[%s1 + $0x170] sm:$0xff]
        %v253 = vld [vmem:[%s1 + $0x178] sm:$0xff]
        %v254 = vld [vmem:[%s1 + $0x180] sm:$0xff]
        %v255 = vld [vmem:[%s1 + $0x188] sm:$0xff]
        %v256 = vld [vmem:[%s1 + $0x190] sm:$0xff]
        %v257 = vld [vmem:[%s1 + $0x198] sm:$0xff]
        %v258 = vld [vmem:[%s1 + $0x1a0] sm:$0xff]
        %v259 = vld [vmem:[%s1 + $0x1a8] sm:$0xff]
        %v260 = vld [vmem:[%s1 + $0x1b0] sm:$0xff]
        %v261 = vld [vmem:[%s1 + $0x1b8] sm:$0xff]
        %v262 = vld [vmem:[%s1 + $0x1c0] sm:$0xff]
        %v263 = vld [vmem:[%s1 + $0x1c8] sm:$0xff]
        %v264 = vld [vmem:[%s1 + $0x1d0] sm:$0xff]
        %v265 = vld [vmem:[%s1 + $0x1d8] sm:$0xff]
        %v266 = vld [vmem:[%s1 + $0x1e0] sm:$0xff]
        %v267 = vld [vmem:[%s1 + $0x1e8] sm:$0xff]
        %v268 = vld [vmem:[%s1 + $0x1f0] sm:$0xff]
        %v269 = vld [vmem:[%s1 + $0x1f8] sm:$0xff]
        %v270 = vld [vmem:[%s1 + $0x200] sm:$0xff]
        %v271 = vld [vmem:[%s1 + $0x208] sm:$0xff]
        %v272 = vld [vmem:[%s1 + $0x210] sm:$0xff]
        %v273 = vld [vmem:[%s1 + $0x218] sm:$0xff]
        %v274 = vld [vmem:[%s1 + $0x220] sm:$0xff]
        %v275 = vld [vmem:[%s1 + $0x228] sm:$0xff]
        %v276 = vld [vmem:[%s1 + $0x230] sm:$0xff]
        %v277 = vld [vmem:[%s1 + $0x238] sm:$0xff]
        %v278 = vld [vmem:[%s1 + $0x240] sm:$0xff]
        %v279 = vld [vmem:[%s1 + $0x248] sm:$0xff]
        %v280 = vld [vmem:[%s1 + $0x250] sm:$0xff]
        %v281 = vld [vmem:[%s1 + $0x258] sm:$0xff]
        %v282 = vld [vmem:[%s1 + $0x260] sm:$0xff]
        %v283 = vld [vmem:[%s1 + $0x268] sm:$0xff]
        %v284 = vld [vmem:[%s1 + $0x270] sm:$0xff]
        %v285 = vld [vmem:[%s1 + $0x278] sm:$0xff]
        %v286 = vld [vmem:[%s1 + $0x280] sm:$0xff]
        %v287 = vld [vmem:[%s1 + $0x288] sm:$0xff]
        %v288 = vld [vmem:[%s1 + $0x290] sm:$0xff]
        %v289 = vld [vmem:[%s1 + $0x298] sm:$0xff]
        %v290 = vld [vmem:[%s1 + $0x2a0] sm:$0xff]
        %v291 = vld [vmem:[%s1 + $0x2a8] sm:$0xff]
        %v292 = vld [vmem:[%s1 + $0x2b0] sm:$0xff]
        %v293 = vld [vmem:[%s1 + $0x2b8] sm:$0xff]
        %v294 = vld [vmem:[%s1 + $0x2c0] sm:$0xff]
        %v295 = vld [vmem:[%s1 + $0x2c8] sm:$0xff]
        %v296 = vld [vmem:[%s1 + $0x2d0] sm:$0xff]
        %v297 = vld [vmem:[%s1 + $0x2d8] sm:$0xff]
        %v298 = vld [vmem:[%s1 + $0x2e0] sm:$0xff]
        %v299 = vld [vmem:[%s1 + $0x2e8] sm:$0xff]
        %v300 = vld [vmem:[%s1 + $0x2f0] sm:$0xff]
        %v301 = vld [vmem:[%s1 + $0x2f8] sm:$0xff]
        %v302 = vld [vmem:[%s1 + $0x300] sm:$0xff]
        %v303 = vld [vmem:[%s1 + $0x308] sm:$0xff]
        %v304 = vld [vmem:[%s1 + $0x310] sm:$0xff]
        %v305 = vld [vmem:[%s1 + $0x318] sm:$0xff]
        %v306 = vld [vmem:[%s1 + $0x320] sm:$0xff]
        %v307 = vld [vmem:[%s1 + $0x328] sm:$0xff]
        %v308 = vld [vmem:[%s1 + $0x330] sm:$0xff]
        %v309 = vld [vmem:[%s1 + $0x338] sm:$0xff]
        %v310 = vld [vmem:[%s1 + $0x340] sm:$0xff]
        %v311 = vld [vmem:[%s1 + $0x348] sm:$0xff]
        %v312 = vld [vmem:[%s1 + $0x350] sm:$0xff]
        %v313 = vld [vmem:[%s1 + $0x358] sm:$0xff]
        %v314 = vld [vmem:[%s1 + $0x360] sm:$0xff]
        %v315 = vld [vmem:[%s1 + $0x368] sm:$0xff]
        %v316 = vld [vmem:[%s1 + $0x370] sm:$0xff]
        %v317 = vld [vmem:[%s1 + $0x378] sm:$0xff]
        %v318 = vld [vmem:[%s1 + $0x380] sm:$0xff]
        %v319 = vld [vmem:[%s1 + $0x388] sm:$0xff]
        %v320 = vld [vmem:[%s1 + $0x390] sm:$0xff]
        %v321 = vld [vmem:[%s1 + $0x398] sm:$0xff]
        %v322 = vld [vmem:[%s1 + $0x3a0] sm:$0xff]
        %v323 = vld [vmem:[%s1 + $0x3a8] sm:$0xff]
        %v324 = vld [vmem:[%s1 + $0x3b0] sm:$0xff]
        %v325 = vld [vmem:[%s1 + $0x3b8] sm:$0xff]
        %v326 = vld [vmem:[%s1 + $0x3c0] sm:$0xff]
        %v327 = vld [vmem:[%s1 + $0x3c8] sm:$0xff]
        %v328 = vld [vmem:[%s1 + $0x3d0] sm:$0xff]
        %v329 = vld [vmem:[%s1 + $0x3d8] sm:$0xff]
        %v330 = vld [vmem:[%s1 + $0x3e0] sm:$0xff]
        %v331 = vld [vmem:[%s1 + $0x3e8] sm:$0xff]
        %v332 = vld [vmem:[%s1 + $0x3f0] sm:$0xff]
        %v333 = vld [vmem:[%s1 + $0x3f8] sm:$0xff]
        %v334 = vld [vmem:[%s199] sm:$0xff]
        %v335 = vld [vmem:[%s199 + $0x8] sm:$0xff]
        %v336 = vld [vmem:[%s199 + $0x10] sm:$0xff]
        %v337 = vld [vmem:[%s199 + $0x18] sm:$0xff]
        %v338 = vld [vmem:[%s199 + $0x20] sm:$0xff]
        %v339 = vld [vmem:[%s199 + $0x28] sm:$0xff]
        %v340 = vld [vmem:[%s199 + $0x30] sm:$0xff]
        %v341 = vld [vmem:[%s199 + $0x38] sm:$0xff]
        %v342 = vld [vmem:[%s199 + $0x40] sm:$0xff]
        %v343 = vld [vmem:[%s199 + $0x48] sm:$0xff]
        %v344 = vld [vmem:[%s199 + $0x50] sm:$0xff]
        %v345 = vld [vmem:[%s199 + $0x58] sm:$0xff]
        %v346 = vld [vmem:[%s199 + $0x60] sm:$0xff]
        %v347 = vld [vmem:[%s199 + $0x68] sm:$0xff]
        %v348 = vld [vmem:[%s199 + $0x70] sm:$0xff]
        %v349 = vld [vmem:[%s199 + $0x78] sm:$0xff]
        %v350 = vld [vmem:[%s199 + $0x80] sm:$0xff]
        %v351 = vld [vmem:[%s199 + $0x88] sm:$0xff]
        %v352 = vld [vmem:[%s199 + $0x90] sm:$0xff]
        %v353 = vld [vmem:[%s199 + $0x98] sm:$0xff]
        %v354 = vld [vmem:[%s199 + $0xa0] sm:$0xff]
        %v355 = vld [vmem:[%s199 + $0xa8] sm:$0xff]
        %v356 = vld [vmem:[%s199 + $0xb0] sm:$0xff]
        %v357 = vld [vmem:[%s199 + $0xb8] sm:$0xff]
        %v358 = vld [vmem:[%s199 + $0xc0] sm:$0xff]
        %v359 = vld [vmem:[%s199 + $0xc8] sm:$0xff]
        %v360 = vld [vmem:[%s199 + $0xd0] sm:$0xff]
        %v361 = vld [vmem:[%s199 + $0xd8] sm:$0xff]
        %v362 = vld [vmem:[%s199 + $0xe0] sm:$0xff]
        %v363 = vld [vmem:[%s199 + $0xe8] sm:$0xff]
        %v364 = vld [vmem:[%s199 + $0xf0] sm:$0xff]
        %v365 = vld [vmem:[%s199 + $0xf8] sm:$0xff]
        %v366 = vld [vmem:[%s199 + $0x100] sm:$0xff]
        %v367 = vld [vmem:[%s199 + $0x108] sm:$0xff]
        %v368 = vld [vmem:[%s199 + $0x110] sm:$0xff]
        %v369 = vld [vmem:[%s199 + $0x118] sm:$0xff]
        %v370 = vld [vmem:[%s199 + $0x120] sm:$0xff]
        %v371 = vld [vmem:[%s199 + $0x128] sm:$0xff]
        %v372 = vld [vmem:[%s199 + $0x130] sm:$0xff]
        %v373 = vld [vmem:[%s199 + $0x138] sm:$0xff]
        %v374 = vld [vmem:[%s199 + $0x140] sm:$0xff]
        %v375 = vld [vmem:[%s199 + $0x148] sm:$0xff]
        %v376 = vld [vmem:[%s199 + $0x150] sm:$0xff]
        %v377 = vld [vmem:[%s199 + $0x158] sm:$0xff]
        %v378 = vld [vmem:[%s199 + $0x160] sm:$0xff]
        %v379 = vld [vmem:[%s199 + $0x168] sm:$0xff]
        %v380 = vld [vmem:[%s199 + $0x170] sm:$0xff]
        %v381 = vld [vmem:[%s199 + $0x178] sm:$0xff]
        %v382 = vld [vmem:[%s199 + $0x180] sm:$0xff]
        %v383 = vld [vmem:[%s199 + $0x188] sm:$0xff]
        %v384 = vld [vmem:[%s199 + $0x190] sm:$0xff]
        %v385 = vld [vmem:[%s199 + $0x198] sm:$0xff]
        %v386 = vld [vmem:[%s199 + $0x1a0] sm:$0xff]
        %v387 = vld [vmem:[%s199 + $0x1a8] sm:$0xff]
        %v388 = vld [vmem:[%s199 + $0x1b0] sm:$0xff]
        %v389 = vld [vmem:[%s199 + $0x1b8] sm:$0xff]
        %v390 = vld [vmem:[%s199 + $0x1c0] sm:$0xff]
        %v391 = vld [vmem:[%s199 + $0x1c8] sm:$0xff]
        %v392 = vld [vmem:[%s199 + $0x1d0] sm:$0xff]
        %v393 = vld [vmem:[%s199 + $0x1d8] sm:$0xff]
        %v394 = vld [vmem:[%s199 + $0x1e0] sm:$0xff]
        %v395 = vld [vmem:[%s199 + $0x1e8] sm:$0xff]
        %v396 = vld [vmem:[%s199 + $0x1f0] sm:$0xff]
        %v397 = vld [vmem:[%s199 + $0x1f8] sm:$0xff]
        %v398 = vld [vmem:[%s199 + $0x200] sm:$0xff]
        %v399 = vld [vmem:[%s199 + $0x208] sm:$0xff]
        %v400 = vld [vmem:[%s199 + $0x210] sm:$0xff]
        %v401 = vld [vmem:[%s199 + $0x218] sm:$0xff]
        %v402 = vld [vmem:[%s199 + $0x220] sm:$0xff]
        %v403 = vld [vmem:[%s199 + $0x228] sm:$0xff]
        %v404 = vld [vmem:[%s199 + $0x230] sm:$0xff]
        %v405 = vld [vmem:[%s199 + $0x238] sm:$0xff]
        %v406 = vld [vmem:[%s199 + $0x240] sm:$0xff]
        %v407 = vld [vmem:[%s199 + $0x248] sm:$0xff]
        %v408 = vld [vmem:[%s199 + $0x250] sm:$0xff]
        %v409 = vld [vmem:[%s199 + $0x258] sm:$0xff]
        %v410 = vld [vmem:[%s199 + $0x260] sm:$0xff]
        %v411 = vld [vmem:[%s199 + $0x268] sm:$0xff]
        %v412 = vld [vmem:[%s199 + $0x270] sm:$0xff]
        %v413 = vld [vmem:[%s199 + $0x278] sm:$0xff]
        %v414 = vld [vmem:[%s199 + $0x280] sm:$0xff]
        %v415 = vld [vmem:[%s199 + $0x288] sm:$0xff]
        %v416 = vld [vmem:[%s199 + $0x290] sm:$0xff]
        %v417 = vld [vmem:[%s199 + $0x298] sm:$0xff]
        %v418 = vld [vmem:[%s199 + $0x2a0] sm:$0xff]
        %v419 = vld [vmem:[%s199 + $0x2a8] sm:$0xff]
        %v420 = vld [vmem:[%s199 + $0x2b0] sm:$0xff]
        %v421 = vld [vmem:[%s199 + $0x2b8] sm:$0xff]
        %v422 = vld [vmem:[%s199 + $0x2c0] sm:$0xff]
        %v423 = vld [vmem:[%s199 + $0x2c8] sm:$0xff]
        %v424 = vld [vmem:[%s199 + $0x2d0] sm:$0xff]
        %v425 = vld [vmem:[%s199 + $0x2d8] sm:$0xff]
        %v426 = vld [vmem:[%s199 + $0x2e0] sm:$0xff]
        %v427 = vld [vmem:[%s199 + $0x2e8] sm:$0xff]
        %v428 = vld [vmem:[%s199 + $0x2f0] sm:$0xff]
        %v429 = vld [vmem:[%s199 + $0x2f8] sm:$0xff]
        %v430 = vld [vmem:[%s199 + $0x300] sm:$0xff]
        %v431 = vld [vmem:[%s199 + $0x308] sm:$0xff]
        %v432 = vld [vmem:[%s199 + $0x310] sm:$0xff]
        %v433 = vld [vmem:[%s199 + $0x318] sm:$0xff]
        %v434 = vld [vmem:[%s199 + $0x320] sm:$0xff]
        %v435 = vld [vmem:[%s199 + $0x328] sm:$0xff]
        %v436 = vld [vmem:[%s199 + $0x330] sm:$0xff]
        %v437 = vld [vmem:[%s199 + $0x338] sm:$0xff]
        %v438 = vld [vmem:[%s199 + $0x340] sm:$0xff]
        %v439 = vld [vmem:[%s199 + $0x348] sm:$0xff]
        %v440 = vld [vmem:[%s199 + $0x350] sm:$0xff]
        %v441 = vld [vmem:[%s199 + $0x358] sm:$0xff]
        %v442 = vld [vmem:[%s199 + $0x360] sm:$0xff]
        %v443 = vld [vmem:[%s199 + $0x368] sm:$0xff]
        %v444 = vld [vmem:[%s199 + $0x370] sm:$0xff]
        %v445 = vld [vmem:[%s199 + $0x378] sm:$0xff]
        %v446 = vld [vmem:[%s199 + $0x380] sm:$0xff]
        %v447 = vld [vmem:[%s199 + $0x388] sm:$0xff]
        %v448 = vld [vmem:[%s199 + $0x390] sm:$0xff]
        %v449 = vld [vmem:[%s199 + $0x398] sm:$0xff]
        %v450 = vld [vmem:[%s199 + $0x3a0] sm:$0xff]
        %v451 = vld [vmem:[%s199 + $0x3a8] sm:$0xff]
        %v452 = vld [vmem:[%s199 + $0x3b0] sm:$0xff]
        %v453 = vld [vmem:[%s199 + $0x3b8] sm:$0xff]
        %v454 = vld [vmem:[%s199 + $0x3c0] sm:$0xff]
        %v455 = vld [vmem:[%s199 + $0x3c8] sm:$0xff]
        %v456 = vld [vmem:[%s199 + $0x3d0] sm:$0xff]
        %v457 = vld [vmem:[%s199 + $0x3d8] sm:$0xff]
        %v458 = vld [vmem:[%s199 + $0x3e0] sm:$0xff]
        %v459 = vld [vmem:[%s199 + $0x3e8] sm:$0xff]
        %v460 = vld [vmem:[%s199 + $0x3f0] sm:$0xff]
        %v461 = vld [vmem:[%s199 + $0x3f8] sm:$0xff]
        %v462 = vld [vmem:[%s199 + $0x400] sm:$0xff]
        %v463 = vld [vmem:[%s199 + $0x408] sm:$0xff]
        %v464 = vld [vmem:[%s199 + $0x410] sm:$0xff]
        %v465 = vld [vmem:[%s199 + $0x418] sm:$0xff]
        %v466 = vld [vmem:[%s199 + $0x420] sm:$0xff]
        %v467 = vld [vmem:[%s199 + $0x428] sm:$0xff]
        %v468 = vld [vmem:[%s199 + $0x430] sm:$0xff]
        %v469 = vld [vmem:[%s199 + $0x438] sm:$0xff]
        %v470 = vld [vmem:[%s199 + $0x440] sm:$0xff]
        %v471 = vld [vmem:[%s199 + $0x448] sm:$0xff]
        %v472 = vld [vmem:[%s199 + $0x450] sm:$0xff]
        %v473 = vld [vmem:[%s199 + $0x458] sm:$0xff]
        %v474 = vld [vmem:[%s199 + $0x460] sm:$0xff]
        %v475 = vld [vmem:[%s199 + $0x468] sm:$0xff]
        %v476 = vld [vmem:[%s199 + $0x470] sm:$0xff]
        %v477 = vld [vmem:[%s199 + $0x478] sm:$0xff]
        %v478 = vld [vmem:[%s199 + $0x480] sm:$0xff]
        %v479 = vld [vmem:[%s199 + $0x488] sm:$0xff]
        %v480 = vld [vmem:[%s199 + $0x490] sm:$0xff]
        %v481 = vld [vmem:[%s199 + $0x498] sm:$0xff]
        %v482 = vld [vmem:[%s199 + $0x4a0] sm:$0xff]
        %v483 = vld [vmem:[%s199 + $0x4a8] sm:$0xff]
        %v484 = vld [vmem:[%s199 + $0x4b0] sm:$0xff]
        %v485 = vld [vmem:[%s199 + $0x4b8] sm:$0xff]
        %v486 = vld [vmem:[%s199 + $0x4c0] sm:$0xff]
        %v487 = vld [vmem:[%s199 + $0x4c8] sm:$0xff]
        %v488 = vld [vmem:[%s199 + $0x4d0] sm:$0xff]
        %v489 = vld [vmem:[%s199 + $0x4d8] sm:$0xff]
        %v490 = vld [vmem:[%s199 + $0x4e0] sm:$0xff]
        %v491 = vld [vmem:[%s199 + $0x4e8] sm:$0xff]
        %v492 = vld [vmem:[%s199 + $0x4f0] sm:$0xff]
        %v493 = vld [vmem:[%s199 + $0x4f8] sm:$0xff]
        %v494 = vld [vmem:[%s199 + $0x500] sm:$0xff]
        %v495 = vld [vmem:[%s199 + $0x508] sm:$0xff]
        %v496 = vld [vmem:[%s199 + $0x510] sm:$0xff]
        %v497 = vld [vmem:[%s199 + $0x518] sm:$0xff]
        %v498 = vld [vmem:[%s199 + $0x520] sm:$0xff]
        %v499 = vld [vmem:[%s199 + $0x528] sm:$0xff]
        %v500 = vld [vmem:[%s199 + $0x530] sm:$0xff]
        %v501 = vld [vmem:[%s199 + $0x538] sm:$0xff]
        %v502 = vld [vmem:[%s199 + $0x540] sm:$0xff]
        %v503 = vld [vmem:[%s199 + $0x548] sm:$0xff]
        %v504 = vld [vmem:[%s199 + $0x550] sm:$0xff]
        %v505 = vld [vmem:[%s199 + $0x558] sm:$0xff]
        %v506 = vld [vmem:[%s199 + $0x560] sm:$0xff]
        %v507 = vld [vmem:[%s199 + $0x568] sm:$0xff]
        %v508 = vld [vmem:[%s199 + $0x570] sm:$0xff]
        %v509 = vld [vmem:[%s199 + $0x578] sm:$0xff]
        %v510 = vld [vmem:[%s199 + $0x580] sm:$0xff]
        %v511 = vld [vmem:[%s199 + $0x588] sm:$0xff]
        %v512 = vld [vmem:[%s199 + $0x590] sm:$0xff]
        %v513 = vld [vmem:[%s199 + $0x598] sm:$0xff]
        %v514 = vld [vmem:[%s199 + $0x5a0] sm:$0xff]
        %v515 = vld [vmem:[%s199 + $0x5a8] sm:$0xff]
        %v516 = vld [vmem:[%s199 + $0x5b0] sm:$0xff]
        %v517 = vld [vmem:[%s199 + $0x5b8] sm:$0xff]
        %v518 = vld [vmem:[%s199 + $0x5c0] sm:$0xff]
        %v519 = vld [vmem:[%s199 + $0x5c8] sm:$0xff]
        %v520 = vld [vmem:[%s199 + $0x5d0] sm:$0xff]
        %v521 = vld [vmem:[%s199 + $0x5d8] sm:$0xff]
        %v522 = vld [vmem:[%s199 + $0x5e0] sm:$0xff]
        %v523 = vld [vmem:[%s199 + $0x5e8] sm:$0xff]
        %v524 = vld [vmem:[%s199 + $0x5f0] sm:$0xff]
        %v525 = vld [vmem:[%s199 + $0x5f8] sm:$0xff]
        %v526 = vld [vmem:[%s199 + $0x600] sm:$0xff]
        %v527 = vld [vmem:[%s199 + $0x608] sm:$0xff]
        %v528 = vld [vmem:[%s199 + $0x610] sm:$0xff]
        %v529 = vld [vmem:[%s199 + $0x618] sm:$0xff]
        %v530 = vld [vmem:[%s199 + $0x620] sm:$0xff]
        %v531 = vld [vmem:[%s199 + $0x628] sm:$0xff]
        %v532 = vld [vmem:[%s199 + $0x630] sm:$0xff]
        %v533 = vld [vmem:[%s199 + $0x638] sm:$0xff]
        %v534 = vld [vmem:[%s199 + $0x640] sm:$0xff]
        %v535 = vld [vmem:[%s199 + $0x648] sm:$0xff]
        %v536 = vld [vmem:[%s199 + $0x650] sm:$0xff]
        %v537 = vld [vmem:[%s199 + $0x658] sm:$0xff]
        %v538 = vld [vmem:[%s199 + $0x660] sm:$0xff]
        %v539 = vld [vmem:[%s199 + $0x668] sm:$0xff]
        %v540 = vld [vmem:[%s199 + $0x670] sm:$0xff]
        %v541 = vld [vmem:[%s199 + $0x678] sm:$0xff]
        %v542 = vld [vmem:[%s199 + $0x680] sm:$0xff]
        %v543 = vld [vmem:[%s199 + $0x688] sm:$0xff]
        %v544 = vld [vmem:[%s199 + $0x690] sm:$0xff]
        %v545 = vld [vmem:[%s199 + $0x698] sm:$0xff]
        %v546 = vld [vmem:[%s199 + $0x6a0] sm:$0xff]
        %v547 = vld [vmem:[%s199 + $0x6a8] sm:$0xff]
        %v548 = vld [vmem:[%s199 + $0x6b0] sm:$0xff]
        %v549 = vld [vmem:[%s199 + $0x6b8] sm:$0xff]
        %v550 = vld [vmem:[%s199 + $0x6c0] sm:$0xff]
        %v551 = vld [vmem:[%s199 + $0x6c8] sm:$0xff]
        %v552 = vld [vmem:[%s199 + $0x6d0] sm:$0xff]
        %v553 = vld [vmem:[%s199 + $0x6d8] sm:$0xff]
        %v554 = vld [vmem:[%s199 + $0x6e0] sm:$0xff]
        %v555 = vld [vmem:[%s199 + $0x6e8] sm:$0xff]
        %v556 = vld [vmem:[%s199 + $0x6f0] sm:$0xff]
        %v557 = vld [vmem:[%s199 + $0x6f8] sm:$0xff]
        %v558 = vld [vmem:[%s199 + $0x700] sm:$0xff]
        %v559 = vld [vmem:[%s199 + $0x708] sm:$0xff]
        %v560 = vld [vmem:[%s199 + $0x710] sm:$0xff]
        %v561 = vld [vmem:[%s199 + $0x718] sm:$0xff]
        %v562 = vld [vmem:[%s199 + $0x720] sm:$0xff]
        %v563 = vld [vmem:[%s199 + $0x728] sm:$0xff]
        %v564 = vld [vmem:[%s199 + $0x730] sm:$0xff]
        %v565 = vld [vmem:[%s199 + $0x738] sm:$0xff]
        %v566 = vld [vmem:[%s199 + $0x740] sm:$0xff]
        %v567 = vld [vmem:[%s199 + $0x748] sm:$0xff]
        %v568 = vld [vmem:[%s199 + $0x750] sm:$0xff]
        %v569 = vld [vmem:[%s199 + $0x758] sm:$0xff]
        %v570 = vld [vmem:[%s199 + $0x760] sm:$0xff]
        %v571 = vld [vmem:[%s199 + $0x768] sm:$0xff]
        %v572 = vld [vmem:[%s199 + $0x770] sm:$0xff]
        %v573 = vld [vmem:[%s199 + $0x778] sm:$0xff]
        %v574 = vld [vmem:[%s199 + $0x780] sm:$0xff]
        %v575 = vld [vmem:[%s199 + $0x788] sm:$0xff]
        %v576 = vld [vmem:[%s199 + $0x790] sm:$0xff]
        %v577 = vld [vmem:[%s199 + $0x798] sm:$0xff]
        %v578 = vld [vmem:[%s199 + $0x7a0] sm:$0xff]
        %v579 = vld [vmem:[%s199 + $0x7a8] sm:$0xff]
        %v580 = vld [vmem:[%s199 + $0x7b0] sm:$0xff]
        %v581 = vld [vmem:[%s199 + $0x7b8] sm:$0xff]
        %v582 = vld [vmem:[%s199 + $0x7c0] sm:$0xff]
        %v583 = vld [vmem:[%s199 + $0x7c8] sm:$0xff]
        %v584 = vld [vmem:[%s199 + $0x7d0] sm:$0xff]
        %v585 = vld [vmem:[%s199 + $0x7d8] sm:$0xff]
        %v586 = vld [vmem:[%s199 + $0x7e0] sm:$0xff]
        %v587 = vld [vmem:[%s199 + $0x7e8] sm:$0xff]
        %v588 = vld [vmem:[%s199 + $0x7f0] sm:$0xff]
        %v589 = vld [vmem:[%s199 + $0x7f8] sm:$0xff]
        %590 = vmatprep.subr.mxu0 0.0
        %591 = vmatpush1.msra.mxu0 %v334
        %592 = vmatprep.subr.mxu0 0.0
        %593 = vmatpush1.msra.mxu0 %v335
        %594 = vmatprep.subr.mxu0 0.0
        %595 = vmatpush1.msra.mxu0 %v336
        %596 = vmatprep.subr.mxu0 0.0
        %597 = vmatpush1.msra.mxu0 %v337
        %598 = vmatprep.subr.mxu0 0.0
        %599 = vmatpush1.msra.mxu0 %v338
        %600 = vmatprep.subr.mxu0 0.0
        %601 = vmatpush1.msra.mxu0 %v339
        %602 = vmatprep.subr.mxu0 0.0
        %603 = vmatpush1.msra.mxu0 %v340
        %604 = vmatprep.subr.mxu0 0.0
        %605 = vmatpush1.msra.mxu0 %v341
        %606 = vmatprep.subr.mxu0 0.0
        %607 = vmatpush1.msra.mxu0 %v342
        %608 = vmatprep.subr.mxu0 0.0
        %609 = vmatpush1.msra.mxu0 %v343
        %610 = vmatprep.subr.mxu0 0.0
        %611 = vmatpush1.msra.mxu0 %v344
        %612 = vmatprep.subr.mxu0 0.0
        %613 = vmatpush1.msra.mxu0 %v345
        %614 = vmatprep.subr.mxu0 0.0
        %615 = vmatpush1.msra.mxu0 %v346
        %616 = vmatprep.subr.mxu0 0.0
        %617 = vmatpush1.msra.mxu0 %v347
        %618 = vmatprep.subr.mxu0 0.0
        %619 = vmatpush1.msra.mxu0 %v348
        %620 = vmatprep.subr.mxu0 0.0
        %621 = vmatpush1.msra.mxu0 %v349
        %622 = vmatprep.subr.mxu0 0.0
        %623 = vmatpush1.msra.mxu0 %v350
        %624 = vmatprep.subr.mxu0 0.0
        %625 = vmatpush1.msra.mxu0 %v351
        %626 = vmatprep.subr.mxu0 0.0
        %627 = vmatpush1.msra.mxu0 %v352
        %628 = vmatprep.subr.mxu0 0.0
        %629 = vmatpush1.msra.mxu0 %v353
        %630 = vmatprep.subr.mxu0 0.0
        %631 = vmatpush1.msra.mxu0 %v354
        %632 = vmatprep.subr.mxu0 0.0
        %633 = vmatpush1.msra.mxu0 %v355
        %634 = vmatprep.subr.mxu0 0.0
        %635 = vmatpush1.msra.mxu0 %v356
        %636 = vmatprep.subr.mxu0 0.0
        %637 = vmatpush1.msra.mxu0 %v357
        %638 = vmatprep.subr.mxu0 0.0
        %639 = vmatpush1.msra.mxu0 %v358
        %640 = vmatprep.subr.mxu0 0.0
        %641 = vmatpush1.msra.mxu0 %v359
        %642 = vmatprep.subr.mxu0 0.0
        %643 = vmatpush1.msra.mxu0 %v360
        %644 = vmatprep.subr.mxu0 0.0
        %645 = vmatpush1.msra.mxu0 %v361
        %646 = vmatprep.subr.mxu0 0.0
        %647 = vmatpush1.msra.mxu0 %v362
        %648 = vmatprep.subr.mxu0 0.0
        %649 = vmatpush1.msra.mxu0 %v363
        %650 = vmatprep.subr.mxu0 0.0
        %651 = vmatpush1.msra.mxu0 %v364
        %652 = vmatprep.subr.mxu0 0.0
        %653 = vmatpush1.msra.mxu0 %v365
        %654 = vmatprep.mubr.f32.mxu0 %v207
        %655 = vmatmul.mubr.f32.gmra.mrb[0].mxu0 %v206
        %v656 = vpop.f32.mrb[0].mxu0
        %v657 = vadd.f32 0.0, %v656
        %v658 = vpop.f32.mrb[0].mxu0
        %659 = vmatprep.mubr.f32.mxu0 %v223
        %660 = vmatmul.mubr.f32.gmra.mrb[0].mxu0 %v222
        %v661 = vpop.f32.mrb[0].mxu0
        %v662 = vadd.f32 0.0, %v661
        %v663 = vpop.f32.mrb[0].mxu0
        %664 = vmatprep.mubr.f32.mxu0 %v239
        %665 = vmatmul.mubr.f32.gmra.mrb[0].mxu0 %v238
        %v666 = vpop.f32.mrb[0].mxu0
        %v667 = vadd.f32 0.0, %v666
        %v668 = vpop.f32.mrb[0].mxu0
        %669 = vmatprep.mubr.f32.mxu0 %v255
        %670 = vmatmul.mubr.f32.gmra.mrb[0].mxu0 %v254
        %v671 = vpop.f32.mrb[0].mxu0
        %v672 = vadd.f32 0.0, %v671
        %v673 = vpop.f32.mrb[0].mxu0
        %674 = vmatprep.mubr.f32.mxu0 %v271
        %675 = vmatmul.mubr.f32.gmra.mrb[0].mxu0 %v270
        %v676 = vpop.f32.mrb[0].mxu0
        %v677 = vadd.f32 0.0, %v676
        %v678 = vpop.f32.mrb[0].mxu0
        %679 = vmatprep.mubr.f32.mxu0 %v287
        %680 = vmatmul.mubr.f32.gmra.mrb[0].mxu0 %v286
        %v681 = vpop.f32.mrb[0].mxu0
        %v682 = vadd.f32 0.0, %v681
        %v683 = vpop.f32.mrb[0].mxu0
        %684 = vmatprep.mubr.f32.mxu0 %v303
        %685 = vmatmul.mubr.f32.gmra.mrb[0].mxu0 %v302
        %v686 = vpop.f32.mrb[0].mxu0
        %v687 = vadd.f32 0.0, %v686
        %v688 = vpop.f32.mrb[0].mxu0
        %689 = vmatprep.mubr.f32.mxu0 %v319
        %690 = vmatmul.mubr.f32.gmra.mrb[0].mxu0 %v318
        %v691 = vpop.f32.mrb[0].mxu0
        %v692 = vadd.f32 0.0, %v691
        %v693 = vpop.f32.mrb[0].mxu0
        %694 = vdwg.mxu0
        %695 = vmatprep.subr.mxu0 0.0
        %696 = vmatpush1.msra.mxu0 %v366
        %697 = vmatprep.subr.mxu0 0.0
        %698 = vmatpush1.msra.mxu0 %v367
        %699 = vmatprep.subr.mxu0 0.0
        %700 = vmatpush1.msra.mxu0 %v368
        %701 = vmatprep.subr.mxu0 0.0
        %702 = vmatpush1.msra.mxu0 %v369
        %703 = vmatprep.subr.mxu0 0.0
        %704 = vmatpush1.msra.mxu0 %v370
        %705 = vmatprep.subr.mxu0 0.0
        %706 = vmatpush1.msra.mxu0 %v371
        %707 = vmatprep.subr.mxu0 0.0
        %708 = vmatpush1.msra.mxu0 %v372
        %709 = vmatprep.subr.mxu0 0.0
        %710 = vmatpush1.msra.mxu0 %v373
        %711 = vmatprep.subr.mxu0 0.0
        %712 = vmatpush1.msra.mxu0 %v374
        %713 = vmatprep.subr.mxu0 0.0
        %714 = vmatpush1.msra.mxu0 %v375
        %715 = vmatprep.subr.mxu0 0.0
        %716 = vmatpush1.msra.mxu0 %v376
        %717 = vmatprep.subr.mxu0 0.0
        %718 = vmatpush1.msra.mxu0 %v377
        %719 = vmatprep.subr.mxu0 0.0
        %720 = vmatpush1.msra.mxu0 %v378
        %721 = vmatprep.subr.mxu0 0.0
        %722 = vmatpush1.msra.mxu0 %v379
        %723 = vmatprep.subr.mxu0 0.0
        %724 = vmatpush1.msra.mxu0 %v380
        %725 = vmatprep.subr.mxu0 0.0
        %726 = vmatpush1.msra.mxu0 %v381
        %727 = vmatprep.subr.mxu0 0.0
        %728 = vmatpush1.msra.mxu0 %v382
        %729 = vmatprep.subr.mxu0 0.0
        %730 = vmatpush1.msra.mxu0 %v383
        %731 = vmatprep.subr.mxu0 0.0
        %732 = vmatpush1.msra.mxu0 %v384
        %733 = vmatprep.subr.mxu0 0.0
        %734 = vmatpush1.msra.mxu0 %v385
        %735 = vmatprep.subr.mxu0 0.0
        %736 = vmatpush1.msra.mxu0 %v386
        %737 = vmatprep.subr.mxu0 0.0
        %738 = vmatpush1.msra.mxu0 %v387
        %739 = vmatprep.subr.mxu0 0.0
        %740 = vmatpush1.msra.mxu0 %v388
        %741 = vmatprep.subr.mxu0 0.0
        %742 = vmatpush1.msra.mxu0 %v389
        %743 = vmatprep.subr.mxu0 0.0
        %744 = vmatpush1.msra.mxu0 %v390
        %745 = vmatprep.subr.mxu0 0.0
        %746 = vmatpush1.msra.mxu0 %v391
        %747 = vmatprep.subr.mxu0 0.0
        %748 = vmatpush1.msra.mxu0 %v392
        %749 = vmatprep.subr.mxu0 0.0
        %750 = vmatpush1.msra.mxu0 %v393
        %751 = vmatprep.subr.mxu0 0.0
        %752 = vmatpush1.msra.mxu0 %v394
        %753 = vmatprep.subr.mxu0 0.0
        %754 = vmatpush1.msra.mxu0 %v395
        %755 = vmatprep.subr.mxu0 0.0
        %756 = vmatpush1.msra.mxu0 %v396
        %757 = vmatprep.subr.mxu0 0.0
        %758 = vmatpush1.msra.mxu0 %v397
        %759 = vmatprep.mubr.f32.mxu0 %v209
        %760 = vmatmul.mubr.f32.gmra.mrb[0].mxu0 %v208
        %v761 = vpop.f32.mrb[0].mxu0
        %v762 = vadd.f32 %v657, %v761
        %v763 = vpop.f32.mrb[0].mxu0
        %764 = vmatprep.mubr.f32.mxu0 %v225
        %765 = vmatmul.mubr.f32.gmra.mrb[0].mxu0 %v224
        %v766 = vpop.f32.mrb[0].mxu0
        %v767 = vadd.f32 %v662, %v766
        %v768 = vpop.f32.mrb[0].mxu0
        %769 = vmatprep.mubr.f32.mxu0 %v241
        %770 = vmatmul.mubr.f32.gmra.mrb[0].mxu0 %v240
        %v771 = vpop.f32.mrb[0].mxu0
        %v772 = vadd.f32 %v667, %v771
        %v773 = vpop.f32.mrb[0].mxu0
        %774 = vmatprep.mubr.f32.mxu0 %v257
        %775 = vmatmul.mubr.f32.gmra.mrb[0].mxu0 %v256
        %v776 = vpop.f32.mrb[0].mxu0
        %v777 = vadd.f32 %v672, %v776
        %v778 = vpop.f32.mrb[0].mxu0
        %779 = vmatprep.mubr.f32.mxu0 %v273
        %780 = vmatmul.mubr.f32.gmra.mrb[0].mxu0 %v272
        %v781 = vpop.f32.mrb[0].mxu0
        %v782 = vadd.f32 %v677, %v781
        %v783 = vpop.f32.mrb[0].mxu0
        %784 = vmatprep.mubr.f32.mxu0 %v289
        %785 = vmatmul.mubr.f32.gmra.mrb[0].mxu0 %v288
        %v786 = vpop.f32.mrb[0].mxu0
        %v787 = vadd.f32 %v682, %v786
        %v788 = vpop.f32.mrb[0].mxu0
        %789 = vmatprep.mubr.f32.mxu0 %v305
        %790 = vmatmul.mubr.f32.gmra.mrb[0].mxu0 %v304
        %v791 = vpop.f32.mrb[0].mxu0
        %v792 = vadd.f32 %v687, %v791
        %v793 = vpop.f32.mrb[0].mxu0
        %794 = vmatprep.mubr.f32.mxu0 %v321
        %795 = vmatmul.mubr.f32.gmra.mrb[0].mxu0 %v320
        %v796 = vpop.f32.mrb[0].mxu0
        %v797 = vadd.f32 %v692, %v796
        %v798 = vpop.f32.mrb[0].mxu0
        %799 = vdwg.mxu0
        %800 = vmatprep.subr.mxu0 0.0
        %801 = vmatpush1.msra.mxu0 %v398
        %802 = vmatprep.subr.mxu0 0.0
        %803 = vmatpush1.msra.mxu0 %v399
        %804 = vmatprep.subr.mxu0 0.0
        %805 = vmatpush1.msra.mxu0 %v400
        %806 = vmatprep.subr.mxu0 0.0
        %807 = vmatpush1.msra.mxu0 %v401
        %808 = vmatprep.subr.mxu0 0.0
        %809 = vmatpush1.msra.mxu0 %v402
        %810 = vmatprep.subr.mxu0 0.0
        %811 = vmatpush1.msra.mxu0 %v403
        %812 = vmatprep.subr.mxu0 0.0
        %813 = vmatpush1.msra.mxu0 %v404
        %814 = vmatprep.subr.mxu0 0.0
        %815 = vmatpush1.msra.mxu0 %v405
        %816 = vmatprep.subr.mxu0 0.0
        %817 = vmatpush1.msra.mxu0 %v406
        %818 = vmatprep.subr.mxu0 0.0
        %819 = vmatpush1.msra.mxu0 %v407
        %820 = vmatprep.subr.mxu0 0.0
        %821 = vmatpush1.msra.mxu0 %v408
        %822 = vmatprep.subr.mxu0 0.0
        %823 = vmatpush1.msra.mxu0 %v409
        %824 = vmatprep.subr.mxu0 0.0
        %825 = vmatpush1.msra.mxu0 %v410
        %826 = vmatprep.subr.mxu0 0.0
        %827 = vmatpush1.msra.mxu0 %v411
        %828 = vmatprep.subr.mxu0 0.0
        %829 = vmatpush1.msra.mxu0 %v412
        %830 = vmatprep.subr.mxu0 0.0
        %831 = vmatpush1.msra.mxu0 %v413
        %832 = vmatprep.subr.mxu0 0.0
        %833 = vmatpush1.msra.mxu0 %v414
        %834 = vmatprep.subr.mxu0 0.0
        %835 = vmatpush1.msra.mxu0 %v415
        %836 = vmatprep.subr.mxu0 0.0
        %837 = vmatpush1.msra.mxu0 %v416
        %838 = vmatprep.subr.mxu0 0.0
        %839 = vmatpush1.msra.mxu0 %v417
        %840 = vmatprep.subr.mxu0 0.0
        %841 = vmatpush1.msra.mxu0 %v418
        %842 = vmatprep.subr.mxu0 0.0
        %843 = vmatpush1.msra.mxu0 %v419
        %844 = vmatprep.subr.mxu0 0.0
        %845 = vmatpush1.msra.mxu0 %v420
        %846 = vmatprep.subr.mxu0 0.0
        %847 = vmatpush1.msra.mxu0 %v421
        %848 = vmatprep.subr.mxu0 0.0
        %849 = vmatpush1.msra.mxu0 %v422
        %850 = vmatprep.subr.mxu0 0.0
        %851 = vmatpush1.msra.mxu0 %v423
        %852 = vmatprep.subr.mxu0 0.0
        %853 = vmatpush1.msra.mxu0 %v424
        %854 = vmatprep.subr.mxu0 0.0
        %855 = vmatpush1.msra.mxu0 %v425
        %856 = vmatprep.subr.mxu0 0.0
        %857 = vmatpush1.msra.mxu0 %v426
        %858 = vmatprep.subr.mxu0 0.0
        %859 = vmatpush1.msra.mxu0 %v427
        %860 = vmatprep.subr.mxu0 0.0
        %861 = vmatpush1.msra.mxu0 %v428
        %862 = vmatprep.subr.mxu0 0.0
        %863 = vmatpush1.msra.mxu0 %v429
        %864 = vmatprep.mubr.f32.mxu0 %v211
        %865 = vmatmul.mubr.f32.gmra.mrb[0].mxu0 %v210
        %v866 = vpop.f32.mrb[0].mxu0
        %v867 = vadd.f32 %v762, %v866
        %v868 = vpop.f32.mrb[0].mxu0
        %869 = vmatprep.mubr.f32.mxu0 %v227
        %870 = vmatmul.mubr.f32.gmra.mrb[0].mxu0 %v226
        %v871 = vpop.f32.mrb[0].mxu0
        %v872 = vadd.f32 %v767, %v871
        %v873 = vpop.f32.mrb[0].mxu0
        %874 = vmatprep.mubr.f32.mxu0 %v243
        %875 = vmatmul.mubr.f32.gmra.mrb[0].mxu0 %v242
        %v876 = vpop.f32.mrb[0].mxu0
        %v877 = vadd.f32 %v772, %v876
        %v878 = vpop.f32.mrb[0].mxu0
        %879 = vmatprep.mubr.f32.mxu0 %v259
        %880 = vmatmul.mubr.f32.gmra.mrb[0].mxu0 %v258
        %v881 = vpop.f32.mrb[0].mxu0
        %v882 = vadd.f32 %v777, %v881
        %v883 = vpop.f32.mrb[0].mxu0
        %884 = vmatprep.mubr.f32.mxu0 %v275
        %885 = vmatmul.mubr.f32.gmra.mrb[0].mxu0 %v274
        %v886 = vpop.f32.mrb[0].mxu0
        %v887 = vadd.f32 %v782, %v886
        %v888 = vpop.f32.mrb[0].mxu0
        %889 = vmatprep.mubr.f32.mxu0 %v291
        %890 = vmatmul.mubr.f32.gmra.mrb[0].mxu0 %v290
        %v891 = vpop.f32.mrb[0].mxu0
        %v892 = vadd.f32 %v787, %v891
        %v893 = vpop.f32.mrb[0].mxu0
        %894 = vmatprep.mubr.f32.mxu0 %v307
        %895 = vmatmul.mubr.f32.gmra.mrb[0].mxu0 %v306
        %v896 = vpop.f32.mrb[0].mxu0
        %v897 = vadd.f32 %v792, %v896
        %v898 = vpop.f32.mrb[0].mxu0
        %899 = vmatprep.mubr.f32.mxu0 %v323
        %900 = vmatmul.mubr.f32.gmra.mrb[0].mxu0 %v322
        %v901 = vpop.f32.mrb[0].mxu0
        %v902 = vadd.f32 %v797, %v901
        %v903 = vpop.f32.mrb[0].mxu0
        %904 = vdwg.mxu0
        %905 = vmatprep.subr.mxu0 0.0
        %906 = vmatpush1.msra.mxu0 %v430
        %907 = vmatprep.subr.mxu0 0.0
        %908 = vmatpush1.msra.mxu0 %v431
        %909 = vmatprep.subr.mxu0 0.0
        %910 = vmatpush1.msra.mxu0 %v432
        %911 = vmatprep.subr.mxu0 0.0
        %912 = vmatpush1.msra.mxu0 %v433
        %913 = vmatprep.subr.mxu0 0.0
        %914 = vmatpush1.msra.mxu0 %v434
        %915 = vmatprep.subr.mxu0 0.0
        %916 = vmatpush1.msra.mxu0 %v435
        %917 = vmatprep.subr.mxu0 0.0
        %918 = vmatpush1.msra.mxu0 %v436
        %919 = vmatprep.subr.mxu0 0.0
        %920 = vmatpush1.msra.mxu0 %v437
        %921 = vmatprep.subr.mxu0 0.0
        %922 = vmatpush1.msra.mxu0 %v438
        %923 = vmatprep.subr.mxu0 0.0
        %924 = vmatpush1.msra.mxu0 %v439
        %925 = vmatprep.subr.mxu0 0.0
        %926 = vmatpush1.msra.mxu0 %v440
        %927 = vmatprep.subr.mxu0 0.0
        %928 = vmatpush1.msra.mxu0 %v441
        %929 = vmatprep.subr.mxu0 0.0
        %930 = vmatpush1.msra.mxu0 %v442
        %931 = vmatprep.subr.mxu0 0.0
        %932 = vmatpush1.msra.mxu0 %v443
        %933 = vmatprep.subr.mxu0 0.0
        %934 = vmatpush1.msra.mxu0 %v444
        %935 = vmatprep.subr.mxu0 0.0
        %936 = vmatpush1.msra.mxu0 %v445
        %937 = vmatprep.subr.mxu0 0.0
        %938 = vmatpush1.msra.mxu0 %v446
        %939 = vmatprep.subr.mxu0 0.0
        %940 = vmatpush1.msra.mxu0 %v447
        %941 = vmatprep.subr.mxu0 0.0
        %942 = vmatpush1.msra.mxu0 %v448
        %943 = vmatprep.subr.mxu0 0.0
        %944 = vmatpush1.msra.mxu0 %v449
        %945 = vmatprep.subr.mxu0 0.0
        %946 = vmatpush1.msra.mxu0 %v450
        %947 = vmatprep.subr.mxu0 0.0
        %948 = vmatpush1.msra.mxu0 %v451
        %949 = vmatprep.subr.mxu0 0.0
        %950 = vmatpush1.msra.mxu0 %v452
        %951 = vmatprep.subr.mxu0 0.0
        %952 = vmatpush1.msra.mxu0 %v453
        %953 = vmatprep.subr.mxu0 0.0
        %954 = vmatpush1.msra.mxu0 %v454
        %955 = vmatprep.subr.mxu0 0.0
        %956 = vmatpush1.msra.mxu0 %v455
        %957 = vmatprep.subr.mxu0 0.0
        %958 = vmatpush1.msra.mxu0 %v456
        %959 = vmatprep.subr.mxu0 0.0
        %960 = vmatpush1.msra.mxu0 %v457
        %961 = vmatprep.subr.mxu0 0.0
        %962 = vmatpush1.msra.mxu0 %v458
        %963 = vmatprep.subr.mxu0 0.0
        %964 = vmatpush1.msra.mxu0 %v459
        %965 = vmatprep.subr.mxu0 0.0
        %966 = vmatpush1.msra.mxu0 %v460
        %967 = vmatprep.subr.mxu0 0.0
        %968 = vmatpush1.msra.mxu0 %v461
        %969 = vmatprep.mubr.f32.mxu0 %v213
        %970 = vmatmul.mubr.f32.gmra.mrb[0].mxu0 %v212
        %v971 = vpop.f32.mrb[0].mxu0
        %v972 = vadd.f32 %v867, %v971
        %v973 = vpop.f32.mrb[0].mxu0
        %974 = vmatprep.mubr.f32.mxu0 %v229
        %975 = vmatmul.mubr.f32.gmra.mrb[0].mxu0 %v228
        %v976 = vpop.f32.mrb[0].mxu0
        %v977 = vadd.f32 %v872, %v976
        %v978 = vpop.f32.mrb[0].mxu0
        %979 = vmatprep.mubr.f32.mxu0 %v245
        %980 = vmatmul.mubr.f32.gmra.mrb[0].mxu0 %v244
        %v981 = vpop.f32.mrb[0].mxu0
        %v982 = vadd.f32 %v877, %v981
        %v983 = vpop.f32.mrb[0].mxu0
        %984 = vmatprep.mubr.f32.mxu0 %v261
        %985 = vmatmul.mubr.f32.gmra.mrb[0].mxu0 %v260
        %v986 = vpop.f32.mrb[0].mxu0
        %v987 = vadd.f32 %v882, %v986
        %v988 = vpop.f32.mrb[0].mxu0
        %989 = vmatprep.mubr.f32.mxu0 %v277
        %990 = vmatmul.mubr.f32.gmra.mrb[0].mxu0 %v276
        %v991 = vpop.f32.mrb[0].mxu0
        %v992 = vadd.f32 %v887, %v991
        %v993 = vpop.f32.mrb[0].mxu0
        %994 = vmatprep.mubr.f32.mxu0 %v293
        %995 = vmatmul.mubr.f32.gmra.mrb[0].mxu0 %v292
        %v996 = vpop.f32.mrb[0].mxu0
        %v997 = vadd.f32 %v892, %v996
        %v998 = vpop.f32.mrb[0].mxu0
        %999 = vmatprep.mubr.f32.mxu0 %v309
        %1000 = vmatmul.mubr.f32.gmra.mrb[0].mxu0 %v308
        %v1001 = vpop.f32.mrb[0].mxu0
        %v1002 = vadd.f32 %v897, %v1001
        %v1003 = vpop.f32.mrb[0].mxu0
        %1004 = vmatprep.mubr.f32.mxu0 %v325
        %1005 = vmatmul.mubr.f32.gmra.mrb[0].mxu0 %v324
        %v1006 = vpop.f32.mrb[0].mxu0
        %v1007 = vadd.f32 %v902, %v1006
        %v1008 = vpop.f32.mrb[0].mxu0
        %1009 = vdwg.mxu0
        %1010 = vmatprep.subr.mxu0 0.0
        %1011 = vmatpush1.msra.mxu0 %v462
        %1012 = vmatprep.subr.mxu0 0.0
        %1013 = vmatpush1.msra.mxu0 %v463
        %1014 = vmatprep.subr.mxu0 0.0
        %1015 = vmatpush1.msra.mxu0 %v464
        %1016 = vmatprep.subr.mxu0 0.0
        %1017 = vmatpush1.msra.mxu0 %v465
        %1018 = vmatprep.subr.mxu0 0.0
        %1019 = vmatpush1.msra.mxu0 %v466
        %1020 = vmatprep.subr.mxu0 0.0
        %1021 = vmatpush1.msra.mxu0 %v467
        %1022 = vmatprep.subr.mxu0 0.0
        %1023 = vmatpush1.msra.mxu0 %v468
        %1024 = vmatprep.subr.mxu0 0.0
        %1025 = vmatpush1.msra.mxu0 %v469
        %1026 = vmatprep.subr.mxu0 0.0
        %1027 = vmatpush1.msra.mxu0 %v470
        %1028 = vmatprep.subr.mxu0 0.0
        %1029 = vmatpush1.msra.mxu0 %v471
        %1030 = vmatprep.subr.mxu0 0.0
        %1031 = vmatpush1.msra.mxu0 %v472
        %1032 = vmatprep.subr.mxu0 0.0
        %1033 = vmatpush1.msra.mxu0 %v473
        %1034 = vmatprep.subr.mxu0 0.0
        %1035 = vmatpush1.msra.mxu0 %v474
        %1036 = vmatprep.subr.mxu0 0.0
        %1037 = vmatpush1.msra.mxu0 %v475
        %1038 = vmatprep.subr.mxu0 0.0
        %1039 = vmatpush1.msra.mxu0 %v476
        %1040 = vmatprep.subr.mxu0 0.0
        %1041 = vmatpush1.msra.mxu0 %v477
        %1042 = vmatprep.subr.mxu0 0.0
        %1043 = vmatpush1.msra.mxu0 %v478
        %1044 = vmatprep.subr.mxu0 0.0
        %1045 = vmatpush1.msra.mxu0 %v479
        %1046 = vmatprep.subr.mxu0 0.0
        %1047 = vmatpush1.msra.mxu0 %v480
        %1048 = vmatprep.subr.mxu0 0.0
        %1049 = vmatpush1.msra.mxu0 %v481
        %1050 = vmatprep.subr.mxu0 0.0
        %1051 = vmatpush1.msra.mxu0 %v482
        %1052 = vmatprep.subr.mxu0 0.0
        %1053 = vmatpush1.msra.mxu0 %v483
        %1054 = vmatprep.subr.mxu0 0.0
        %1055 = vmatpush1.msra.mxu0 %v484
        %1056 = vmatprep.subr.mxu0 0.0
        %1057 = vmatpush1.msra.mxu0 %v485
        %1058 = vmatprep.subr.mxu0 0.0
        %1059 = vmatpush1.msra.mxu0 %v486
        %1060 = vmatprep.subr.mxu0 0.0
        %1061 = vmatpush1.msra.mxu0 %v487
        %1062 = vmatprep.subr.mxu0 0.0
        %1063 = vmatpush1.msra.mxu0 %v488
        %1064 = vmatprep.subr.mxu0 0.0
        %1065 = vmatpush1.msra.mxu0 %v489
        %1066 = vmatprep.subr.mxu0 0.0
        %1067 = vmatpush1.msra.mxu0 %v490
        %1068 = vmatprep.subr.mxu0 0.0
        %1069 = vmatpush1.msra.mxu0 %v491
        %1070 = vmatprep.subr.mxu0 0.0
        %1071 = vmatpush1.msra.mxu0 %v492
        %1072 = vmatprep.subr.mxu0 0.0
        %1073 = vmatpush1.msra.mxu0 %v493
        %1074 = vmatprep.mubr.f32.mxu0 %v215
        %1075 = vmatmul.mubr.f32.gmra.mrb[0].mxu0 %v214
        %v1076 = vpop.f32.mrb[0].mxu0
        %v1077 = vadd.f32 %v972, %v1076
        %v1078 = vpop.f32.mrb[0].mxu0
        %1079 = vmatprep.mubr.f32.mxu0 %v231
        %1080 = vmatmul.mubr.f32.gmra.mrb[0].mxu0 %v230
        %v1081 = vpop.f32.mrb[0].mxu0
        %v1082 = vadd.f32 %v977, %v1081
        %v1083 = vpop.f32.mrb[0].mxu0
        %1084 = vmatprep.mubr.f32.mxu0 %v247
        %1085 = vmatmul.mubr.f32.gmra.mrb[0].mxu0 %v246
        %v1086 = vpop.f32.mrb[0].mxu0
        %v1087 = vadd.f32 %v982, %v1086
        %v1088 = vpop.f32.mrb[0].mxu0
        %1089 = vmatprep.mubr.f32.mxu0 %v263
        %1090 = vmatmul.mubr.f32.gmra.mrb[0].mxu0 %v262
        %v1091 = vpop.f32.mrb[0].mxu0
        %v1092 = vadd.f32 %v987, %v1091
        %v1093 = vpop.f32.mrb[0].mxu0
        %1094 = vmatprep.mubr.f32.mxu0 %v279
        %1095 = vmatmul.mubr.f32.gmra.mrb[0].mxu0 %v278
        %v1096 = vpop.f32.mrb[0].mxu0
        %v1097 = vadd.f32 %v992, %v1096
        %v1098 = vpop.f32.mrb[0].mxu0
        %1099 = vmatprep.mubr.f32.mxu0 %v295
        %1100 = vmatmul.mubr.f32.gmra.mrb[0].mxu0 %v294
        %v1101 = vpop.f32.mrb[0].mxu0
        %v1102 = vadd.f32 %v997, %v1101
        %v1103 = vpop.f32.mrb[0].mxu0
        %1104 = vmatprep.mubr.f32.mxu0 %v311
        %1105 = vmatmul.mubr.f32.gmra.mrb[0].mxu0 %v310
        %v1106 = vpop.f32.mrb[0].mxu0
        %v1107 = vadd.f32 %v1002, %v1106
        %v1108 = vpop.f32.mrb[0].mxu0
        %1109 = vmatprep.mubr.f32.mxu0 %v327
        %1110 = vmatmul.mubr.f32.gmra.mrb[0].mxu0 %v326
        %v1111 = vpop.f32.mrb[0].mxu0
        %v1112 = vadd.f32 %v1007, %v1111
        %v1113 = vpop.f32.mrb[0].mxu0
        %1114 = vdwg.mxu0
        %1115 = vmatprep.subr.mxu0 0.0
        %1116 = vmatpush1.msra.mxu0 %v494
        %1117 = vmatprep.subr.mxu0 0.0
        %1118 = vmatpush1.msra.mxu0 %v495
        %1119 = vmatprep.subr.mxu0 0.0
        %1120 = vmatpush1.msra.mxu0 %v496
        %1121 = vmatprep.subr.mxu0 0.0
        %1122 = vmatpush1.msra.mxu0 %v497
        %1123 = vmatprep.subr.mxu0 0.0
        %1124 = vmatpush1.msra.mxu0 %v498
        %1125 = vmatprep.subr.mxu0 0.0
        %1126 = vmatpush1.msra.mxu0 %v499
        %1127 = vmatprep.subr.mxu0 0.0
        %1128 = vmatpush1.msra.mxu0 %v500
        %1129 = vmatprep.subr.mxu0 0.0
        %1130 = vmatpush1.msra.mxu0 %v501
        %1131 = vmatprep.subr.mxu0 0.0
        %1132 = vmatpush1.msra.mxu0 %v502
        %1133 = vmatprep.subr.mxu0 0.0
        %1134 = vmatpush1.msra.mxu0 %v503
        %1135 = vmatprep.subr.mxu0 0.0
        %1136 = vmatpush1.msra.mxu0 %v504
        %1137 = vmatprep.subr.mxu0 0.0
        %1138 = vmatpush1.msra.mxu0 %v505
        %1139 = vmatprep.subr.mxu0 0.0
        %1140 = vmatpush1.msra.mxu0 %v506
        %1141 = vmatprep.subr.mxu0 0.0
        %1142 = vmatpush1.msra.mxu0 %v507
        %1143 = vmatprep.subr.mxu0 0.0
        %1144 = vmatpush1.msra.mxu0 %v508
        %1145 = vmatprep.subr.mxu0 0.0
        %1146 = vmatpush1.msra.mxu0 %v509
        %1147 = vmatprep.subr.mxu0 0.0
        %1148 = vmatpush1.msra.mxu0 %v510
        %1149 = vmatprep.subr.mxu0 0.0
        %1150 = vmatpush1.msra.mxu0 %v511
        %1151 = vmatprep.subr.mxu0 0.0
        %1152 = vmatpush1.msra.mxu0 %v512
        %1153 = vmatprep.subr.mxu0 0.0
        %1154 = vmatpush1.msra.mxu0 %v513
        %1155 = vmatprep.subr.mxu0 0.0
        %1156 = vmatpush1.msra.mxu0 %v514
        %1157 = vmatprep.subr.mxu0 0.0
        %1158 = vmatpush1.msra.mxu0 %v515
        %1159 = vmatprep.subr.mxu0 0.0
        %1160 = vmatpush1.msra.mxu0 %v516
        %1161 = vmatprep.subr.mxu0 0.0
        %1162 = vmatpush1.msra.mxu0 %v517
        %1163 = vmatprep.subr.mxu0 0.0
        %1164 = vmatpush1.msra.mxu0 %v518
        %1165 = vmatprep.subr.mxu0 0.0
        %1166 = vmatpush1.msra.mxu0 %v519
        %1167 = vmatprep.subr.mxu0 0.0
        %1168 = vmatpush1.msra.mxu0 %v520
        %1169 = vmatprep.subr.mxu0 0.0
        %1170 = vmatpush1.msra.mxu0 %v521
        %1171 = vmatprep.subr.mxu0 0.0
        %1172 = vmatpush1.msra.mxu0 %v522
        %1173 = vmatprep.subr.mxu0 0.0
        %1174 = vmatpush1.msra.mxu0 %v523
        %1175 = vmatprep.subr.mxu0 0.0
        %1176 = vmatpush1.msra.mxu0 %v524
        %1177 = vmatprep.subr.mxu0 0.0
        %1178 = vmatpush1.msra.mxu0 %v525
        %1179 = vmatprep.mubr.f32.mxu0 %v217
        %1180 = vmatmul.mubr.f32.gmra.mrb[0].mxu0 %v216
        %v1181 = vpop.f32.mrb[0].mxu0
        %v1182 = vadd.f32 %v1077, %v1181
        %v1183 = vpop.f32.mrb[0].mxu0
        %1184 = vmatprep.mubr.f32.mxu0 %v233
        %1185 = vmatmul.mubr.f32.gmra.mrb[0].mxu0 %v232
        %v1186 = vpop.f32.mrb[0].mxu0
        %v1187 = vadd.f32 %v1082, %v1186
        %v1188 = vpop.f32.mrb[0].mxu0
        %1189 = vmatprep.mubr.f32.mxu0 %v249
        %1190 = vmatmul.mubr.f32.gmra.mrb[0].mxu0 %v248
        %v1191 = vpop.f32.mrb[0].mxu0
        %v1192 = vadd.f32 %v1087, %v1191
        %v1193 = vpop.f32.mrb[0].mxu0
        %1194 = vmatprep.mubr.f32.mxu0 %v265
        %1195 = vmatmul.mubr.f32.gmra.mrb[0].mxu0 %v264
        %v1196 = vpop.f32.mrb[0].mxu0
        %v1197 = vadd.f32 %v1092, %v1196
        %v1198 = vpop.f32.mrb[0].mxu0
        %1199 = vmatprep.mubr.f32.mxu0 %v281
        %1200 = vmatmul.mubr.f32.gmra.mrb[0].mxu0 %v280
        %v1201 = vpop.f32.mrb[0].mxu0
        %v1202 = vadd.f32 %v1097, %v1201
        %v1203 = vpop.f32.mrb[0].mxu0
        %1204 = vmatprep.mubr.f32.mxu0 %v297
        %1205 = vmatmul.mubr.f32.gmra.mrb[0].mxu0 %v296
        %v1206 = vpop.f32.mrb[0].mxu0
        %v1207 = vadd.f32 %v1102, %v1206
        %v1208 = vpop.f32.mrb[0].mxu0
        %1209 = vmatprep.mubr.f32.mxu0 %v313
        %1210 = vmatmul.mubr.f32.gmra.mrb[0].mxu0 %v312
        %v1211 = vpop.f32.mrb[0].mxu0
        %v1212 = vadd.f32 %v1107, %v1211
        %v1213 = vpop.f32.mrb[0].mxu0
        %1214 = vmatprep.mubr.f32.mxu0 %v329
        %1215 = vmatmul.mubr.f32.gmra.mrb[0].mxu0 %v328
        %v1216 = vpop.f32.mrb[0].mxu0
        %v1217 = vadd.f32 %v1112, %v1216
        %v1218 = vpop.f32.mrb[0].mxu0
        %1219 = vdwg.mxu0
        %1220 = vmatprep.subr.mxu0 0.0
        %1221 = vmatpush1.msra.mxu0 %v526
        %1222 = vmatprep.subr.mxu0 0.0
        %1223 = vmatpush1.msra.mxu0 %v527
        %1224 = vmatprep.subr.mxu0 0.0
        %1225 = vmatpush1.msra.mxu0 %v528
        %1226 = vmatprep.subr.mxu0 0.0
        %1227 = vmatpush1.msra.mxu0 %v529
        %1228 = vmatprep.subr.mxu0 0.0
        %1229 = vmatpush1.msra.mxu0 %v530
        %1230 = vmatprep.subr.mxu0 0.0
        %1231 = vmatpush1.msra.mxu0 %v531
        %1232 = vmatprep.subr.mxu0 0.0
        %1233 = vmatpush1.msra.mxu0 %v532
        %1234 = vmatprep.subr.mxu0 0.0
        %1235 = vmatpush1.msra.mxu0 %v533
        %1236 = vmatprep.subr.mxu0 0.0
        %1237 = vmatpush1.msra.mxu0 %v534
        %1238 = vmatprep.subr.mxu0 0.0
        %1239 = vmatpush1.msra.mxu0 %v535
        %1240 = vmatprep.subr.mxu0 0.0
        %1241 = vmatpush1.msra.mxu0 %v536
        %1242 = vmatprep.subr.mxu0 0.0
        %1243 = vmatpush1.msra.mxu0 %v537
        %1244 = vmatprep.subr.mxu0 0.0
        %1245 = vmatpush1.msra.mxu0 %v538
        %1246 = vmatprep.subr.mxu0 0.0
        %1247 = vmatpush1.msra.mxu0 %v539
        %1248 = vmatprep.subr.mxu0 0.0
        %1249 = vmatpush1.msra.mxu0 %v540
        %1250 = vmatprep.subr.mxu0 0.0
        %1251 = vmatpush1.msra.mxu0 %v541
        %1252 = vmatprep.subr.mxu0 0.0
        %1253 = vmatpush1.msra.mxu0 %v542
        %1254 = vmatprep.subr.mxu0 0.0
        %1255 = vmatpush1.msra.mxu0 %v543
        %1256 = vmatprep.subr.mxu0 0.0
        %1257 = vmatpush1.msra.mxu0 %v544
        %1258 = vmatprep.subr.mxu0 0.0
        %1259 = vmatpush1.msra.mxu0 %v545
        %1260 = vmatprep.subr.mxu0 0.0
        %1261 = vmatpush1.msra.mxu0 %v546
        %1262 = vmatprep.subr.mxu0 0.0
        %1263 = vmatpush1.msra.mxu0 %v547
        %1264 = vmatprep.subr.mxu0 0.0
        %1265 = vmatpush1.msra.mxu0 %v548
        %1266 = vmatprep.subr.mxu0 0.0
        %1267 = vmatpush1.msra.mxu0 %v549
        %1268 = vmatprep.subr.mxu0 0.0
        %1269 = vmatpush1.msra.mxu0 %v550
        %1270 = vmatprep.subr.mxu0 0.0
        %1271 = vmatpush1.msra.mxu0 %v551
        %1272 = vmatprep.subr.mxu0 0.0
        %1273 = vmatpush1.msra.mxu0 %v552
        %1274 = vmatprep.subr.mxu0 0.0
        %1275 = vmatpush1.msra.mxu0 %v553
        %1276 = vmatprep.subr.mxu0 0.0
        %1277 = vmatpush1.msra.mxu0 %v554
        %1278 = vmatprep.subr.mxu0 0.0
        %1279 = vmatpush1.msra.mxu0 %v555
        %1280 = vmatprep.subr.mxu0 0.0
        %1281 = vmatpush1.msra.mxu0 %v556
        %1282 = vmatprep.subr.mxu0 0.0
        %1283 = vmatpush1.msra.mxu0 %v557
        %1284 = vmatprep.mubr.f32.mxu0 %v219
        %1285 = vmatmul.mubr.f32.gmra.mrb[0].mxu0 %v218
        %v1286 = vpop.f32.mrb[0].mxu0
        %v1287 = vadd.f32 %v1182, %v1286
        %v1288 = vpop.f32.mrb[0].mxu0
        %1289 = vmatprep.mubr.f32.mxu0 %v235
        %1290 = vmatmul.mubr.f32.gmra.mrb[0].mxu0 %v234
        %v1291 = vpop.f32.mrb[0].mxu0
        %v1292 = vadd.f32 %v1187, %v1291
        %v1293 = vpop.f32.mrb[0].mxu0
        %1294 = vmatprep.mubr.f32.mxu0 %v251
        %1295 = vmatmul.mubr.f32.gmra.mrb[0].mxu0 %v250
        %v1296 = vpop.f32.mrb[0].mxu0
        %v1297 = vadd.f32 %v1192, %v1296
        %v1298 = vpop.f32.mrb[0].mxu0
        %1299 = vmatprep.mubr.f32.mxu0 %v267
        %1300 = vmatmul.mubr.f32.gmra.mrb[0].mxu0 %v266
        %v1301 = vpop.f32.mrb[0].mxu0
        %v1302 = vadd.f32 %v1197, %v1301
        %v1303 = vpop.f32.mrb[0].mxu0
        %1304 = vmatprep.mubr.f32.mxu0 %v283
        %1305 = vmatmul.mubr.f32.gmra.mrb[0].mxu0 %v282
        %v1306 = vpop.f32.mrb[0].mxu0
        %v1307 = vadd.f32 %v1202, %v1306
        %v1308 = vpop.f32.mrb[0].mxu0
        %1309 = vmatprep.mubr.f32.mxu0 %v299
        %1310 = vmatmul.mubr.f32.gmra.mrb[0].mxu0 %v298
        %v1311 = vpop.f32.mrb[0].mxu0
        %v1312 = vadd.f32 %v1207, %v1311
        %v1313 = vpop.f32.mrb[0].mxu0
        %1314 = vmatprep.mubr.f32.mxu0 %v315
        %1315 = vmatmul.mubr.f32.gmra.mrb[0].mxu0 %v314
        %v1316 = vpop.f32.mrb[0].mxu0
        %v1317 = vadd.f32 %v1212, %v1316
        %v1318 = vpop.f32.mrb[0].mxu0
        %1319 = vmatprep.mubr.f32.mxu0 %v331
        %1320 = vmatmul.mubr.f32.gmra.mrb[0].mxu0 %v330
        %v1321 = vpop.f32.mrb[0].mxu0
        %v1322 = vadd.f32 %v1217, %v1321
        %v1323 = vpop.f32.mrb[0].mxu0
        %1324 = vdwg.mxu0
        %1325 = vmatprep.subr.mxu0 0.0
        %1326 = vmatpush1.msra.mxu0 %v558
        %1327 = vmatprep.subr.mxu0 0.0
        %1328 = vmatpush1.msra.mxu0 %v559
        %1329 = vmatprep.subr.mxu0 0.0
        %1330 = vmatpush1.msra.mxu0 %v560
        %1331 = vmatprep.subr.mxu0 0.0
        %1332 = vmatpush1.msra.mxu0 %v561
        %1333 = vmatprep.subr.mxu0 0.0
        %1334 = vmatpush1.msra.mxu0 %v562
        %1335 = vmatprep.subr.mxu0 0.0
        %1336 = vmatpush1.msra.mxu0 %v563
        %1337 = vmatprep.subr.mxu0 0.0
        %1338 = vmatpush1.msra.mxu0 %v564
        %1339 = vmatprep.subr.mxu0 0.0
        %1340 = vmatpush1.msra.mxu0 %v565
        %1341 = vmatprep.subr.mxu0 0.0
        %1342 = vmatpush1.msra.mxu0 %v566
        %1343 = vmatprep.subr.mxu0 0.0
        %1344 = vmatpush1.msra.mxu0 %v567
        %1345 = vmatprep.subr.mxu0 0.0
        %1346 = vmatpush1.msra.mxu0 %v568
        %1347 = vmatprep.subr.mxu0 0.0
        %1348 = vmatpush1.msra.mxu0 %v569
        %1349 = vmatprep.subr.mxu0 0.0
        %1350 = vmatpush1.msra.mxu0 %v570
        %1351 = vmatprep.subr.mxu0 0.0
        %1352 = vmatpush1.msra.mxu0 %v571
        %1353 = vmatprep.subr.mxu0 0.0
        %1354 = vmatpush1.msra.mxu0 %v572
        %1355 = vmatprep.subr.mxu0 0.0
        %1356 = vmatpush1.msra.mxu0 %v573
        %1357 = vmatprep.subr.mxu0 0.0
        %1358 = vmatpush1.msra.mxu0 %v574
        %1359 = vmatprep.subr.mxu0 0.0
        %1360 = vmatpush1.msra.mxu0 %v575
        %1361 = vmatprep.subr.mxu0 0.0
        %1362 = vmatpush1.msra.mxu0 %v576
        %1363 = vmatprep.subr.mxu0 0.0
        %1364 = vmatpush1.msra.mxu0 %v577
        %1365 = vmatprep.subr.mxu0 0.0
        %1366 = vmatpush1.msra.mxu0 %v578
        %1367 = vmatprep.subr.mxu0 0.0
        %1368 = vmatpush1.msra.mxu0 %v579
        %1369 = vmatprep.subr.mxu0 0.0
        %1370 = vmatpush1.msra.mxu0 %v580
        %1371 = vmatprep.subr.mxu0 0.0
        %1372 = vmatpush1.msra.mxu0 %v581
        %1373 = vmatprep.subr.mxu0 0.0
        %1374 = vmatpush1.msra.mxu0 %v582
        %1375 = vmatprep.subr.mxu0 0.0
        %1376 = vmatpush1.msra.mxu0 %v583
        %1377 = vmatprep.subr.mxu0 0.0
        %1378 = vmatpush1.msra.mxu0 %v584
        %1379 = vmatprep.subr.mxu0 0.0
        %1380 = vmatpush1.msra.mxu0 %v585
        %1381 = vmatprep.subr.mxu0 0.0
        %1382 = vmatpush1.msra.mxu0 %v586
        %1383 = vmatprep.subr.mxu0 0.0
        %1384 = vmatpush1.msra.mxu0 %v587
        %1385 = vmatprep.subr.mxu0 0.0
        %1386 = vmatpush1.msra.mxu0 %v588
        %1387 = vmatprep.subr.mxu0 0.0
        %1388 = vmatpush1.msra.mxu0 %v589
        %1389 = vmatprep.mubr.f32.mxu0 %v221
        %1390 = vmatmul.mubr.f32.gmra.mrb[0].mxu0 %v220
        %v1391 = vpop.f32.mrb[0].mxu0
        %v1392 = vadd.f32 %v1287, %v1391
        %v1393 = vpop.f32.mrb[0].mxu0
        %1394 = vmatprep.mubr.f32.mxu0 %v237
        %1395 = vmatmul.mubr.f32.gmra.mrb[0].mxu0 %v236
        %v1396 = vpop.f32.mrb[0].mxu0
        %v1397 = vadd.f32 %v1292, %v1396
        %v1398 = vpop.f32.mrb[0].mxu0
        %1399 = vmatprep.mubr.f32.mxu0 %v253
        %1400 = vmatmul.mubr.f32.gmra.mrb[0].mxu0 %v252
        %v1401 = vpop.f32.mrb[0].mxu0
        %v1402 = vadd.f32 %v1297, %v1401
        %v1403 = vpop.f32.mrb[0].mxu0
        %1404 = vmatprep.mubr.f32.mxu0 %v269
        %1405 = vmatmul.mubr.f32.gmra.mrb[0].mxu0 %v268
        %v1406 = vpop.f32.mrb[0].mxu0
        %v1407 = vadd.f32 %v1302, %v1406
        %v1408 = vpop.f32.mrb[0].mxu0
        %1409 = vmatprep.mubr.f32.mxu0 %v285
        %1410 = vmatmul.mubr.f32.gmra.mrb[0].mxu0 %v284
        %v1411 = vpop.f32.mrb[0].mxu0
        %v1412 = vadd.f32 %v1307, %v1411
        %v1413 = vpop.f32.mrb[0].mxu0
        %1414 = vmatprep.mubr.f32.mxu0 %v301
        %1415 = vmatmul.mubr.f32.gmra.mrb[0].mxu0 %v300
        %v1416 = vpop.f32.mrb[0].mxu0
        %v1417 = vadd.f32 %v1312, %v1416
        %v1418 = vpop.f32.mrb[0].mxu0
        %1419 = vmatprep.mubr.f32.mxu0 %v317
        %1420 = vmatmul.mubr.f32.gmra.mrb[0].mxu0 %v316
        %v1421 = vpop.f32.mrb[0].mxu0
        %v1422 = vadd.f32 %v1317, %v1421
        %v1423 = vpop.f32.mrb[0].mxu0
        %1424 = vmatprep.mubr.f32.mxu0 %v333
        %1425 = vmatmul.mubr.f32.gmra.mrb[0].mxu0 %v332
        %v1426 = vpop.f32.mrb[0].mxu0
        %v1427 = vadd.f32 %v1322, %v1426
        %v1428 = vpop.f32.mrb[0].mxu0
        %1429 = vdwg.mxu0
        %v1430 = vld [vmem:[%s2] sm:$0xff]
        %v1431 = vld [vmem:[%s2 + $0x8] sm:$0xff]
        %v1432 = vld [vmem:[%s2 + $0x10] sm:$0xff]
        %v1433 = vld [vmem:[%s2 + $0x18] sm:$0xff]
        %1435 = vset.pattern.permute.xlu0 0
        %1436 = vperm.xlu0 %1435, %v202
        %v1437 = vpop.permute.xlu0 %1436
        %1440 = vset.pattern.permute.xlu0 0
        %1441 = vperm.xlu0 %1440, %v203
        %v1442 = vpop.permute.xlu0 %1441
        %1445 = vset.pattern.permute.xlu0 0
        %1446 = vperm.xlu0 %1445, %v204
        %v1447 = vpop.permute.xlu0 %1446
        %1450 = vset.pattern.permute.xlu0 0
        %1451 = vperm.xlu0 %1450, %v205
        %v1452 = vpop.permute.xlu0 %1451
        %vm1454 = vcmask 400384
        %v1456 = vsel %vm1454, %v1430, 0
        %v1459 = vsel %vm1454, %v1431, 0
        %v1462 = vsel %vm1454, %v1432, 0
        %v1465 = vsel %vm1454, %v1433, 0
        %v1468 = vsel %vm1454, %v1392, 0
        %v1471 = vsel %vm1454, %v1397, 0
        %v1474 = vsel %vm1454, %v1402, 0
        %v1477 = vsel %vm1454, %v1407, 0
        %v1480 = vsel %vm1454, %v1412, 0
        %v1483 = vsel %vm1454, %v1417, 0
        %v1486 = vsel %vm1454, %v1422, 0
        %v1489 = vsel %vm1454, %v1427, 0
        %1491 = vmatprep.subr.mxu0 0.0
        %1492 = vmatpush1.xpose.msra.mxu0 %v1468
        %1493 = vmatprep.subr.mxu0 0.0
        %1494 = vmatpush1.xpose.msra.mxu0 %v1471
        %1495 = vmatprep.subr.mxu0 0.0
        %1496 = vmatpush1.xpose.msra.mxu0 %v1474
        %1497 = vmatprep.subr.mxu0 0.0
        %1498 = vmatpush1.xpose.msra.mxu0 %v1477
        %1499 = vmatprep.subr.mxu0 0.0
        %1500 = vmatpush1.xpose.msra.mxu0 %v1480
        %1501 = vmatprep.subr.mxu0 0.0
        %1502 = vmatpush1.xpose.msra.mxu0 %v1483
        %1503 = vmatprep.subr.mxu0 0.0
        %1504 = vmatpush1.xpose.msra.mxu0 %v1486
        %1505 = vmatprep.subr.mxu0 0.0
        %1506 = vmatpush1.xpose.msra.mxu0 %v1489
        %1507 = vmatprep.subr.mxu0 0.0
        %1508 = vmatpush1.xpose.msra.mxu0 0.0
        %1509 = vmatprep.subr.mxu0 0.0
        %1510 = vmatpush1.xpose.msra.mxu0 0.0
        %1511 = vmatprep.subr.mxu0 0.0
        %1512 = vmatpush1.xpose.msra.mxu0 0.0
        %1513 = vmatprep.subr.mxu0 0.0
        %1514 = vmatpush1.xpose.msra.mxu0 0.0
        %1515 = vmatprep.subr.mxu0 0.0
        %1516 = vmatpush1.xpose.msra.mxu0 0.0
        %1517 = vmatprep.subr.mxu0 0.0
        %1518 = vmatpush1.xpose.msra.mxu0 0.0
        %1519 = vmatprep.subr.mxu0 0.0
        %1520 = vmatpush1.xpose.msra.mxu0 0.0
        %1521 = vmatprep.subr.mxu0 0.0
        %1522 = vmatpush1.xpose.msra.mxu0 0.0
        %1523 = vmatprep.subr.mxu0 0.0
        %1524 = vmatpush1.xpose.msra.mxu0 0.0
        %1525 = vmatprep.subr.mxu0 0.0
        %1526 = vmatpush1.xpose.msra.mxu0 0.0
        %1527 = vmatprep.subr.mxu0 0.0
        %1528 = vmatpush1.xpose.msra.mxu0 0.0
        %1529 = vmatprep.subr.mxu0 0.0
        %1530 = vmatpush1.xpose.msra.mxu0 0.0
        %1531 = vmatprep.subr.mxu0 0.0
        %1532 = vmatpush1.xpose.msra.mxu0 0.0
        %1533 = vmatprep.subr.mxu0 0.0
        %1534 = vmatpush1.xpose.msra.mxu0 0.0
        %1535 = vmatprep.subr.mxu0 0.0
        %1536 = vmatpush1.xpose.msra.mxu0 0.0
        %1537 = vmatprep.subr.mxu0 0.0
        %1538 = vmatpush1.xpose.msra.mxu0 0.0
        %1539 = vmatprep.subr.mxu0 0.0
        %1540 = vmatpush1.xpose.msra.mxu0 0.0
        %1541 = vmatprep.subr.mxu0 0.0
        %1542 = vmatpush1.xpose.msra.mxu0 0.0
        %1543 = vmatprep.subr.mxu0 0.0
        %1544 = vmatpush1.xpose.msra.mxu0 0.0
        %1545 = vmatprep.subr.mxu0 0.0
        %1546 = vmatpush1.xpose.msra.mxu0 0.0
        %1547 = vmatprep.subr.mxu0 0.0
        %1548 = vmatpush1.xpose.msra.mxu0 0.0
        %1549 = vmatprep.subr.mxu0 0.0
        %1550 = vmatpush1.xpose.msra.mxu0 0.0
        %1551 = vmatprep.subr.mxu0 0.0
        %1552 = vmatpush1.xpose.msra.mxu0 0.0
        %1553 = vmatprep.subr.mxu0 0.0
        %1554 = vmatpush1.xpose.msra.mxu0 0.0
        %1555 = vmatprep.mubr.f32.mxu0 0.0
        %1556 = vmatmul.mubr.f32.gmra.mrb[0].mxu0 %v1456
        %v1557 = vpop.f32.mrb[0].mxu0
        %v1558 = vadd.f32 %v1437, %v1557
        %v1559 = vpop.f32.mrb[0].mxu0
        %1560 = vmatprep.mubr.f32.mxu0 0.0
        %1561 = vmatmul.mubr.f32.gmra.mrb[0].mxu0 %v1459
        %v1562 = vpop.f32.mrb[0].mxu0
        %v1563 = vadd.f32 %v1442, %v1562
        %v1564 = vpop.f32.mrb[0].mxu0
        %1565 = vmatprep.mubr.f32.mxu0 0.0
        %1566 = vmatmul.mubr.f32.gmra.mrb[0].mxu0 %v1462
        %v1567 = vpop.f32.mrb[0].mxu0
        %v1568 = vadd.f32 %v1447, %v1567
        %v1569 = vpop.f32.mrb[0].mxu0
        %1570 = vmatprep.mubr.f32.mxu0 0.0
        %1571 = vmatmul.mubr.f32.gmra.mrb[0].mxu0 %v1465
        %v1572 = vpop.f32.mrb[0].mxu0
        %v1573 = vadd.f32 %v1452, %v1572
        %v1574 = vpop.f32.mrb[0].mxu0
        %1575 = vdwg.mxu0
        %vm1576 = vcmask 523264
        %1577 = vst.msk [vmem:[%s193] sm:$0xff] %vm1576, %v1558
        %1578 = vst.msk [vmem:[%s193 + $0x8] sm:$0xff] %vm1576, %v1563
        %1579 = vst.msk [vmem:[%s193 + $0x10] sm:$0xff] %vm1576, %v1568
        %1580 = vst.msk [vmem:[%s193 + $0x18] sm:$0xff] %vm1576, %v1573
        %v1581 = vld [vmem:[%s1] sm:$0xff]
        %v1582 = vld [vmem:[%s1 + $0x8] sm:$0xff]
        %v1583 = vld [vmem:[%s1 + $0x10] sm:$0xff]
        %v1584 = vld [vmem:[%s1 + $0x18] sm:$0xff]
        %v1585 = vld [vmem:[%s1 + $0x20] sm:$0xff]
        %v1586 = vld [vmem:[%s1 + $0x28] sm:$0xff]
        %v1587 = vld [vmem:[%s1 + $0x30] sm:$0xff]
        %v1588 = vld [vmem:[%s1 + $0x38] sm:$0xff]
        %v1589 = vld [vmem:[%s1 + $0x40] sm:$0xff]
        %v1590 = vld [vmem:[%s1 + $0x48] sm:$0xff]
        %v1591 = vld [vmem:[%s1 + $0x50] sm:$0xff]
        %v1592 = vld [vmem:[%s1 + $0x58] sm:$0xff]
        %v1593 = vld [vmem:[%s1 + $0x60] sm:$0xff]
        %v1594 = vld [vmem:[%s1 + $0x68] sm:$0xff]
        %v1595 = vld [vmem:[%s1 + $0x70] sm:$0xff]
        %v1596 = vld [vmem:[%s1 + $0x78] sm:$0xff]
        %v1597 = vld [vmem:[%s1 + $0x80] sm:$0xff]
        %v1598 = vld [vmem:[%s1 + $0x88] sm:$0xff]
        %v1599 = vld [vmem:[%s1 + $0x90] sm:$0xff]
        %v1600 = vld [vmem:[%s1 + $0x98] sm:$0xff]
        %v1601 = vld [vmem:[%s1 + $0xa0] sm:$0xff]
        %v1602 = vld [vmem:[%s1 + $0xa8] sm:$0xff]
        %v1603 = vld [vmem:[%s1 + $0xb0] sm:$0xff]
        %v1604 = vld [vmem:[%s1 + $0xb8] sm:$0xff]
        %v1605 = vld [vmem:[%s1 + $0xc0] sm:$0xff]
        %v1606 = vld [vmem:[%s1 + $0xc8] sm:$0xff]
        %v1607 = vld [vmem:[%s1 + $0xd0] sm:$0xff]
        %v1608 = vld [vmem:[%s1 + $0xd8] sm:$0xff]
        %v1609 = vld [vmem:[%s1 + $0xe0] sm:$0xff]
        %v1610 = vld [vmem:[%s1 + $0xe8] sm:$0xff]
        %v1611 = vld [vmem:[%s1 + $0xf0] sm:$0xff]
        %v1612 = vld [vmem:[%s1 + $0xf8] sm:$0xff]
        %v1613 = vld [vmem:[%s1 + $0x100] sm:$0xff]
        %v1614 = vld [vmem:[%s1 + $0x108] sm:$0xff]
        %v1615 = vld [vmem:[%s1 + $0x110] sm:$0xff]
        %v1616 = vld [vmem:[%s1 + $0x118] sm:$0xff]
        %v1617 = vld [vmem:[%s1 + $0x120] sm:$0xff]
        %v1618 = vld [vmem:[%s1 + $0x128] sm:$0xff]
        %v1619 = vld [vmem:[%s1 + $0x130] sm:$0xff]
        %v1620 = vld [vmem:[%s1 + $0x138] sm:$0xff]
        %v1621 = vld [vmem:[%s1 + $0x140] sm:$0xff]
        %v1622 = vld [vmem:[%s1 + $0x148] sm:$0xff]
        %v1623 = vld [vmem:[%s1 + $0x150] sm:$0xff]
        %v1624 = vld [vmem:[%s1 + $0x158] sm:$0xff]
        %v1625 = vld [vmem:[%s1 + $0x160] sm:$0xff]
        %v1626 = vld [vmem:[%s1 + $0x168] sm:$0xff]
        %v1627 = vld [vmem:[%s1 + $0x170] sm:$0xff]
        %v1628 = vld [vmem:[%s1 + $0x178] sm:$0xff]
        %v1629 = vld [vmem:[%s1 + $0x180] sm:$0xff]
        %v1630 = vld [vmem:[%s1 + $0x188] sm:$0xff]
        %v1631 = vld [vmem:[%s1 + $0x190] sm:$0xff]
        %v1632 = vld [vmem:[%s1 + $0x198] sm:$0xff]
        %v1633 = vld [vmem:[%s1 + $0x1a0] sm:$0xff]
        %v1634 = vld [vmem:[%s1 + $0x1a8] sm:$0xff]
        %v1635 = vld [vmem:[%s1 + $0x1b0] sm:$0xff]
        %v1636 = vld [vmem:[%s1 + $0x1b8] sm:$0xff]
        %v1637 = vld [vmem:[%s1 + $0x1c0] sm:$0xff]
        %v1638 = vld [vmem:[%s1 + $0x1c8] sm:$0xff]
        %v1639 = vld [vmem:[%s1 + $0x1d0] sm:$0xff]
        %v1640 = vld [vmem:[%s1 + $0x1d8] sm:$0xff]
        %v1641 = vld [vmem:[%s1 + $0x1e0] sm:$0xff]
        %v1642 = vld [vmem:[%s1 + $0x1e8] sm:$0xff]
        %v1643 = vld [vmem:[%s1 + $0x1f0] sm:$0xff]
        %v1644 = vld [vmem:[%s1 + $0x1f8] sm:$0xff]
        %v1645 = vld [vmem:[%s1 + $0x200] sm:$0xff]
        %v1646 = vld [vmem:[%s1 + $0x208] sm:$0xff]
        %v1647 = vld [vmem:[%s1 + $0x210] sm:$0xff]
        %v1648 = vld [vmem:[%s1 + $0x218] sm:$0xff]
        %v1649 = vld [vmem:[%s1 + $0x220] sm:$0xff]
        %v1650 = vld [vmem:[%s1 + $0x228] sm:$0xff]
        %v1651 = vld [vmem:[%s1 + $0x230] sm:$0xff]
        %v1652 = vld [vmem:[%s1 + $0x238] sm:$0xff]
        %v1653 = vld [vmem:[%s1 + $0x240] sm:$0xff]
        %v1654 = vld [vmem:[%s1 + $0x248] sm:$0xff]
        %v1655 = vld [vmem:[%s1 + $0x250] sm:$0xff]
        %v1656 = vld [vmem:[%s1 + $0x258] sm:$0xff]
        %v1657 = vld [vmem:[%s1 + $0x260] sm:$0xff]
        %v1658 = vld [vmem:[%s1 + $0x268] sm:$0xff]
        %v1659 = vld [vmem:[%s1 + $0x270] sm:$0xff]
        %v1660 = vld [vmem:[%s1 + $0x278] sm:$0xff]
        %v1661 = vld [vmem:[%s1 + $0x280] sm:$0xff]
        %v1662 = vld [vmem:[%s1 + $0x288] sm:$0xff]
        %v1663 = vld [vmem:[%s1 + $0x290] sm:$0xff]
        %v1664 = vld [vmem:[%s1 + $0x298] sm:$0xff]
        %v1665 = vld [vmem:[%s1 + $0x2a0] sm:$0xff]
        %v1666 = vld [vmem:[%s1 + $0x2a8] sm:$0xff]
        %v1667 = vld [vmem:[%s1 + $0x2b0] sm:$0xff]
        %v1668 = vld [vmem:[%s1 + $0x2b8] sm:$0xff]
        %v1669 = vld [vmem:[%s1 + $0x2c0] sm:$0xff]
        %v1670 = vld [vmem:[%s1 + $0x2c8] sm:$0xff]
        %v1671 = vld [vmem:[%s1 + $0x2d0] sm:$0xff]
        %v1672 = vld [vmem:[%s1 + $0x2d8] sm:$0xff]
        %v1673 = vld [vmem:[%s1 + $0x2e0] sm:$0xff]
        %v1674 = vld [vmem:[%s1 + $0x2e8] sm:$0xff]
        %v1675 = vld [vmem:[%s1 + $0x2f0] sm:$0xff]
        %v1676 = vld [vmem:[%s1 + $0x2f8] sm:$0xff]
        %v1677 = vld [vmem:[%s1 + $0x300] sm:$0xff]
        %v1678 = vld [vmem:[%s1 + $0x308] sm:$0xff]
        %v1679 = vld [vmem:[%s1 + $0x310] sm:$0xff]
        %v1680 = vld [vmem:[%s1 + $0x318] sm:$0xff]
        %v1681 = vld [vmem:[%s1 + $0x320] sm:$0xff]
        %v1682 = vld [vmem:[%s1 + $0x328] sm:$0xff]
        %v1683 = vld [vmem:[%s1 + $0x330] sm:$0xff]
        %v1684 = vld [vmem:[%s1 + $0x338] sm:$0xff]
        %v1685 = vld [vmem:[%s1 + $0x340] sm:$0xff]
        %v1686 = vld [vmem:[%s1 + $0x348] sm:$0xff]
        %v1687 = vld [vmem:[%s1 + $0x350] sm:$0xff]
        %v1688 = vld [vmem:[%s1 + $0x358] sm:$0xff]
        %v1689 = vld [vmem:[%s1 + $0x360] sm:$0xff]
        %v1690 = vld [vmem:[%s1 + $0x368] sm:$0xff]
        %v1691 = vld [vmem:[%s1 + $0x370] sm:$0xff]
        %v1692 = vld [vmem:[%s1 + $0x378] sm:$0xff]
        %v1693 = vld [vmem:[%s1 + $0x380] sm:$0xff]
        %v1694 = vld [vmem:[%s1 + $0x388] sm:$0xff]
        %v1695 = vld [vmem:[%s1 + $0x390] sm:$0xff]
        %v1696 = vld [vmem:[%s1 + $0x398] sm:$0xff]
        %v1697 = vld [vmem:[%s1 + $0x3a0] sm:$0xff]
        %v1698 = vld [vmem:[%s1 + $0x3a8] sm:$0xff]
        %v1699 = vld [vmem:[%s1 + $0x3b0] sm:$0xff]
        %v1700 = vld [vmem:[%s1 + $0x3b8] sm:$0xff]
        %v1701 = vld [vmem:[%s1 + $0x3c0] sm:$0xff]
        %v1702 = vld [vmem:[%s1 + $0x3c8] sm:$0xff]
        %v1703 = vld [vmem:[%s1 + $0x3d0] sm:$0xff]
        %v1704 = vld [vmem:[%s1 + $0x3d8] sm:$0xff]
        %v1705 = vld [vmem:[%s1 + $0x3e0] sm:$0xff]
        %v1706 = vld [vmem:[%s1 + $0x3e8] sm:$0xff]
        %v1707 = vld [vmem:[%s1 + $0x3f0] sm:$0xff]
        %v1708 = vld [vmem:[%s1 + $0x3f8] sm:$0xff]
        %s1709 = scalar_lea.vmem %s199, 2048
        %v1710 = vld [vmem:[%s1709] sm:$0xff]
        %v1711 = vld [vmem:[%s1709 + $0x8] sm:$0xff]
        %v1712 = vld [vmem:[%s1709 + $0x10] sm:$0xff]
        %v1713 = vld [vmem:[%s1709 + $0x18] sm:$0xff]
        %v1714 = vld [vmem:[%s1709 + $0x20] sm:$0xff]
        %v1715 = vld [vmem:[%s1709 + $0x28] sm:$0xff]
        %v1716 = vld [vmem:[%s1709 + $0x30] sm:$0xff]
        %v1717 = vld [vmem:[%s1709 + $0x38] sm:$0xff]
        %v1718 = vld [vmem:[%s1709 + $0x40] sm:$0xff]
        %v1719 = vld [vmem:[%s1709 + $0x48] sm:$0xff]
        %v1720 = vld [vmem:[%s1709 + $0x50] sm:$0xff]
        %v1721 = vld [vmem:[%s1709 + $0x58] sm:$0xff]
        %v1722 = vld [vmem:[%s1709 + $0x60] sm:$0xff]
        %v1723 = vld [vmem:[%s1709 + $0x68] sm:$0xff]
        %v1724 = vld [vmem:[%s1709 + $0x70] sm:$0xff]
        %v1725 = vld [vmem:[%s1709 + $0x78] sm:$0xff]
        %v1726 = vld [vmem:[%s1709 + $0x80] sm:$0xff]
        %v1727 = vld [vmem:[%s1709 + $0x88] sm:$0xff]
        %v1728 = vld [vmem:[%s1709 + $0x90] sm:$0xff]
        %v1729 = vld [vmem:[%s1709 + $0x98] sm:$0xff]
        %v1730 = vld [vmem:[%s1709 + $0xa0] sm:$0xff]
        %v1731 = vld [vmem:[%s1709 + $0xa8] sm:$0xff]
        %v1732 = vld [vmem:[%s1709 + $0xb0] sm:$0xff]
        %v1733 = vld [vmem:[%s1709 + $0xb8] sm:$0xff]
        %v1734 = vld [vmem:[%s1709 + $0xc0] sm:$0xff]
        %v1735 = vld [vmem:[%s1709 + $0xc8] sm:$0xff]
        %v1736 = vld [vmem:[%s1709 + $0xd0] sm:$0xff]
        %v1737 = vld [vmem:[%s1709 + $0xd8] sm:$0xff]
        %v1738 = vld [vmem:[%s1709 + $0xe0] sm:$0xff]
        %v1739 = vld [vmem:[%s1709 + $0xe8] sm:$0xff]
        %v1740 = vld [vmem:[%s1709 + $0xf0] sm:$0xff]
        %v1741 = vld [vmem:[%s1709 + $0xf8] sm:$0xff]
        %v1742 = vld [vmem:[%s1709 + $0x100] sm:$0xff]
        %v1743 = vld [vmem:[%s1709 + $0x108] sm:$0xff]
        %v1744 = vld [vmem:[%s1709 + $0x110] sm:$0xff]
        %v1745 = vld [vmem:[%s1709 + $0x118] sm:$0xff]
        %v1746 = vld [vmem:[%s1709 + $0x120] sm:$0xff]
        %v1747 = vld [vmem:[%s1709 + $0x128] sm:$0xff]
        %v1748 = vld [vmem:[%s1709 + $0x130] sm:$0xff]
        %v1749 = vld [vmem:[%s1709 + $0x138] sm:$0xff]
        %v1750 = vld [vmem:[%s1709 + $0x140] sm:$0xff]
        %v1751 = vld [vmem:[%s1709 + $0x148] sm:$0xff]
        %v1752 = vld [vmem:[%s1709 + $0x150] sm:$0xff]
        %v1753 = vld [vmem:[%s1709 + $0x158] sm:$0xff]
        %v1754 = vld [vmem:[%s1709 + $0x160] sm:$0xff]
        %v1755 = vld [vmem:[%s1709 + $0x168] sm:$0xff]
        %v1756 = vld [vmem:[%s1709 + $0x170] sm:$0xff]
        %v1757 = vld [vmem:[%s1709 + $0x178] sm:$0xff]
        %v1758 = vld [vmem:[%s1709 + $0x180] sm:$0xff]
        %v1759 = vld [vmem:[%s1709 + $0x188] sm:$0xff]
        %v1760 = vld [vmem:[%s1709 + $0x190] sm:$0xff]
        %v1761 = vld [vmem:[%s1709 + $0x198] sm:$0xff]
        %v1762 = vld [vmem:[%s1709 + $0x1a0] sm:$0xff]
        %v1763 = vld [vmem:[%s1709 + $0x1a8] sm:$0xff]
        %v1764 = vld [vmem:[%s1709 + $0x1b0] sm:$0xff]
        %v1765 = vld [vmem:[%s1709 + $0x1b8] sm:$0xff]
        %v1766 = vld [vmem:[%s1709 + $0x1c0] sm:$0xff]
        %v1767 = vld [vmem:[%s1709 + $0x1c8] sm:$0xff]
        %v1768 = vld [vmem:[%s1709 + $0x1d0] sm:$0xff]
        %v1769 = vld [vmem:[%s1709 + $0x1d8] sm:$0xff]
        %v1770 = vld [vmem:[%s1709 + $0x1e0] sm:$0xff]
        %v1771 = vld [vmem:[%s1709 + $0x1e8] sm:$0xff]
        %v1772 = vld [vmem:[%s1709 + $0x1f0] sm:$0xff]
        %v1773 = vld [vmem:[%s1709 + $0x1f8] sm:$0xff]
        %v1774 = vld [vmem:[%s1709 + $0x200] sm:$0xff]
        %v1775 = vld [vmem:[%s1709 + $0x208] sm:$0xff]
        %v1776 = vld [vmem:[%s1709 + $0x210] sm:$0xff]
        %v1777 = vld [vmem:[%s1709 + $0x218] sm:$0xff]
        %v1778 = vld [vmem:[%s1709 + $0x220] sm:$0xff]
        %v1779 = vld [vmem:[%s1709 + $0x228] sm:$0xff]
        %v1780 = vld [vmem:[%s1709 + $0x230] sm:$0xff]
        %v1781 = vld [vmem:[%s1709 + $0x238] sm:$0xff]
        %v1782 = vld [vmem:[%s1709 + $0x240] sm:$0xff]
        %v1783 = vld [vmem:[%s1709 + $0x248] sm:$0xff]
        %v1784 = vld [vmem:[%s1709 + $0x250] sm:$0xff]
        %v1785 = vld [vmem:[%s1709 + $0x258] sm:$0xff]
        %v1786 = vld [vmem:[%s1709 + $0x260] sm:$0xff]
        %v1787 = vld [vmem:[%s1709 + $0x268] sm:$0xff]
        %v1788 = vld [vmem:[%s1709 + $0x270] sm:$0xff]
        %v1789 = vld [vmem:[%s1709 + $0x278] sm:$0xff]
        %v1790 = vld [vmem:[%s1709 + $0x280] sm:$0xff]
        %v1791 = vld [vmem:[%s1709 + $0x288] sm:$0xff]
        %v1792 = vld [vmem:[%s1709 + $0x290] sm:$0xff]
        %v1793 = vld [vmem:[%s1709 + $0x298] sm:$0xff]
        %v1794 = vld [vmem:[%s1709 + $0x2a0] sm:$0xff]
        %v1795 = vld [vmem:[%s1709 + $0x2a8] sm:$0xff]
        %v1796 = vld [vmem:[%s1709 + $0x2b0] sm:$0xff]
        %v1797 = vld [vmem:[%s1709 + $0x2b8] sm:$0xff]
        %v1798 = vld [vmem:[%s1709 + $0x2c0] sm:$0xff]
        %v1799 = vld [vmem:[%s1709 + $0x2c8] sm:$0xff]
        %v1800 = vld [vmem:[%s1709 + $0x2d0] sm:$0xff]
        %v1801 = vld [vmem:[%s1709 + $0x2d8] sm:$0xff]
        %v1802 = vld [vmem:[%s1709 + $0x2e0] sm:$0xff]
        %v1803 = vld [vmem:[%s1709 + $0x2e8] sm:$0xff]
        %v1804 = vld [vmem:[%s1709 + $0x2f0] sm:$0xff]
        %v1805 = vld [vmem:[%s1709 + $0x2f8] sm:$0xff]
        %v1806 = vld [vmem:[%s1709 + $0x300] sm:$0xff]
        %v1807 = vld [vmem:[%s1709 + $0x308] sm:$0xff]
        %v1808 = vld [vmem:[%s1709 + $0x310] sm:$0xff]
        %v1809 = vld [vmem:[%s1709 + $0x318] sm:$0xff]
        %v1810 = vld [vmem:[%s1709 + $0x320] sm:$0xff]
        %v1811 = vld [vmem:[%s1709 + $0x328] sm:$0xff]
        %v1812 = vld [vmem:[%s1709 + $0x330] sm:$0xff]
        %v1813 = vld [vmem:[%s1709 + $0x338] sm:$0xff]
        %v1814 = vld [vmem:[%s1709 + $0x340] sm:$0xff]
        %v1815 = vld [vmem:[%s1709 + $0x348] sm:$0xff]
        %v1816 = vld [vmem:[%s1709 + $0x350] sm:$0xff]
        %v1817 = vld [vmem:[%s1709 + $0x358] sm:$0xff]
        %v1818 = vld [vmem:[%s1709 + $0x360] sm:$0xff]
        %v1819 = vld [vmem:[%s1709 + $0x368] sm:$0xff]
        %v1820 = vld [vmem:[%s1709 + $0x370] sm:$0xff]
        %v1821 = vld [vmem:[%s1709 + $0x378] sm:$0xff]
        %v1822 = vld [vmem:[%s1709 + $0x380] sm:$0xff]
        %v1823 = vld [vmem:[%s1709 + $0x388] sm:$0xff]
        %v1824 = vld [vmem:[%s1709 + $0x390] sm:$0xff]
        %v1825 = vld [vmem:[%s1709 + $0x398] sm:$0xff]
        %v1826 = vld [vmem:[%s1709 + $0x3a0] sm:$0xff]
        %v1827 = vld [vmem:[%s1709 + $0x3a8] sm:$0xff]
        %v1828 = vld [vmem:[%s1709 + $0x3b0] sm:$0xff]
        %v1829 = vld [vmem:[%s1709 + $0x3b8] sm:$0xff]
        %v1830 = vld [vmem:[%s1709 + $0x3c0] sm:$0xff]
        %v1831 = vld [vmem:[%s1709 + $0x3c8] sm:$0xff]
        %v1832 = vld [vmem:[%s1709 + $0x3d0] sm:$0xff]
        %v1833 = vld [vmem:[%s1709 + $0x3d8] sm:$0xff]
        %v1834 = vld [vmem:[%s1709 + $0x3e0] sm:$0xff]
        %v1835 = vld [vmem:[%s1709 + $0x3e8] sm:$0xff]
        %v1836 = vld [vmem:[%s1709 + $0x3f0] sm:$0xff]
        %v1837 = vld [vmem:[%s1709 + $0x3f8] sm:$0xff]
        %v1838 = vld [vmem:[%s1709 + $0x400] sm:$0xff]
        %v1839 = vld [vmem:[%s1709 + $0x408] sm:$0xff]
        %v1840 = vld [vmem:[%s1709 + $0x410] sm:$0xff]
        %v1841 = vld [vmem:[%s1709 + $0x418] sm:$0xff]
        %v1842 = vld [vmem:[%s1709 + $0x420] sm:$0xff]
        %v1843 = vld [vmem:[%s1709 + $0x428] sm:$0xff]
        %v1844 = vld [vmem:[%s1709 + $0x430] sm:$0xff]
        %v1845 = vld [vmem:[%s1709 + $0x438] sm:$0xff]
        %v1846 = vld [vmem:[%s1709 + $0x440] sm:$0xff]
        %v1847 = vld [vmem:[%s1709 + $0x448] sm:$0xff]
        %v1848 = vld [vmem:[%s1709 + $0x450] sm:$0xff]
        %v1849 = vld [vmem:[%s1709 + $0x458] sm:$0xff]
        %v1850 = vld [vmem:[%s1709 + $0x460] sm:$0xff]
        %v1851 = vld [vmem:[%s1709 + $0x468] sm:$0xff]
        %v1852 = vld [vmem:[%s1709 + $0x470] sm:$0xff]
        %v1853 = vld [vmem:[%s1709 + $0x478] sm:$0xff]
        %v1854 = vld [vmem:[%s1709 + $0x480] sm:$0xff]
        %v1855 = vld [vmem:[%s1709 + $0x488] sm:$0xff]
        %v1856 = vld [vmem:[%s1709 + $0x490] sm:$0xff]
        %v1857 = vld [vmem:[%s1709 + $0x498] sm:$0xff]
        %v1858 = vld [vmem:[%s1709 + $0x4a0] sm:$0xff]
        %v1859 = vld [vmem:[%s1709 + $0x4a8] sm:$0xff]
        %v1860 = vld [vmem:[%s1709 + $0x4b0] sm:$0xff]
        %v1861 = vld [vmem:[%s1709 + $0x4b8] sm:$0xff]
        %v1862 = vld [vmem:[%s1709 + $0x4c0] sm:$0xff]
        %v1863 = vld [vmem:[%s1709 + $0x4c8] sm:$0xff]
        %v1864 = vld [vmem:[%s1709 + $0x4d0] sm:$0xff]
        %v1865 = vld [vmem:[%s1709 + $0x4d8] sm:$0xff]
        %v1866 = vld [vmem:[%s1709 + $0x4e0] sm:$0xff]
        %v1867 = vld [vmem:[%s1709 + $0x4e8] sm:$0xff]
        %v1868 = vld [vmem:[%s1709 + $0x4f0] sm:$0xff]
        %v1869 = vld [vmem:[%s1709 + $0x4f8] sm:$0xff]
        %v1870 = vld [vmem:[%s1709 + $0x500] sm:$0xff]
        %v1871 = vld [vmem:[%s1709 + $0x508] sm:$0xff]
        %v1872 = vld [vmem:[%s1709 + $0x510] sm:$0xff]
        %v1873 = vld [vmem:[%s1709 + $0x518] sm:$0xff]
        %v1874 = vld [vmem:[%s1709 + $0x520] sm:$0xff]
        %v1875 = vld [vmem:[%s1709 + $0x528] sm:$0xff]
        %v1876 = vld [vmem:[%s1709 + $0x530] sm:$0xff]
        %v1877 = vld [vmem:[%s1709 + $0x538] sm:$0xff]
        %v1878 = vld [vmem:[%s1709 + $0x540] sm:$0xff]
        %v1879 = vld [vmem:[%s1709 + $0x548] sm:$0xff]
        %v1880 = vld [vmem:[%s1709 + $0x550] sm:$0xff]
        %v1881 = vld [vmem:[%s1709 + $0x558] sm:$0xff]
        %v1882 = vld [vmem:[%s1709 + $0x560] sm:$0xff]
        %v1883 = vld [vmem:[%s1709 + $0x568] sm:$0xff]
        %v1884 = vld [vmem:[%s1709 + $0x570] sm:$0xff]
        %v1885 = vld [vmem:[%s1709 + $0x578] sm:$0xff]
        %v1886 = vld [vmem:[%s1709 + $0x580] sm:$0xff]
        %v1887 = vld [vmem:[%s1709 + $0x588] sm:$0xff]
        %v1888 = vld [vmem:[%s1709 + $0x590] sm:$0xff]
        %v1889 = vld [vmem:[%s1709 + $0x598] sm:$0xff]
        %v1890 = vld [vmem:[%s1709 + $0x5a0] sm:$0xff]
        %v1891 = vld [vmem:[%s1709 + $0x5a8] sm:$0xff]
        %v1892 = vld [vmem:[%s1709 + $0x5b0] sm:$0xff]
        %v1893 = vld [vmem:[%s1709 + $0x5b8] sm:$0xff]
        %v1894 = vld [vmem:[%s1709 + $0x5c0] sm:$0xff]
        %v1895 = vld [vmem:[%s1709 + $0x5c8] sm:$0xff]
        %v1896 = vld [vmem:[%s1709 + $0x5d0] sm:$0xff]
        %v1897 = vld [vmem:[%s1709 + $0x5d8] sm:$0xff]
        %v1898 = vld [vmem:[%s1709 + $0x5e0] sm:$0xff]
        %v1899 = vld [vmem:[%s1709 + $0x5e8] sm:$0xff]
        %v1900 = vld [vmem:[%s1709 + $0x5f0] sm:$0xff]
        %v1901 = vld [vmem:[%s1709 + $0x5f8] sm:$0xff]
        %v1902 = vld [vmem:[%s1709 + $0x600] sm:$0xff]
        %v1903 = vld [vmem:[%s1709 + $0x608] sm:$0xff]
        %v1904 = vld [vmem:[%s1709 + $0x610] sm:$0xff]
        %v1905 = vld [vmem:[%s1709 + $0x618] sm:$0xff]
        %v1906 = vld [vmem:[%s1709 + $0x620] sm:$0xff]
        %v1907 = vld [vmem:[%s1709 + $0x628] sm:$0xff]
        %v1908 = vld [vmem:[%s1709 + $0x630] sm:$0xff]
        %v1909 = vld [vmem:[%s1709 + $0x638] sm:$0xff]
        %v1910 = vld [vmem:[%s1709 + $0x640] sm:$0xff]
        %v1911 = vld [vmem:[%s1709 + $0x648] sm:$0xff]
        %v1912 = vld [vmem:[%s1709 + $0x650] sm:$0xff]
        %v1913 = vld [vmem:[%s1709 + $0x658] sm:$0xff]
        %v1914 = vld [vmem:[%s1709 + $0x660] sm:$0xff]
        %v1915 = vld [vmem:[%s1709 + $0x668] sm:$0xff]
        %v1916 = vld [vmem:[%s1709 + $0x670] sm:$0xff]
        %v1917 = vld [vmem:[%s1709 + $0x678] sm:$0xff]
        %v1918 = vld [vmem:[%s1709 + $0x680] sm:$0xff]
        %v1919 = vld [vmem:[%s1709 + $0x688] sm:$0xff]
        %v1920 = vld [vmem:[%s1709 + $0x690] sm:$0xff]
        %v1921 = vld [vmem:[%s1709 + $0x698] sm:$0xff]
        %v1922 = vld [vmem:[%s1709 + $0x6a0] sm:$0xff]
        %v1923 = vld [vmem:[%s1709 + $0x6a8] sm:$0xff]
        %v1924 = vld [vmem:[%s1709 + $0x6b0] sm:$0xff]
        %v1925 = vld [vmem:[%s1709 + $0x6b8] sm:$0xff]
        %v1926 = vld [vmem:[%s1709 + $0x6c0] sm:$0xff]
        %v1927 = vld [vmem:[%s1709 + $0x6c8] sm:$0xff]
        %v1928 = vld [vmem:[%s1709 + $0x6d0] sm:$0xff]
        %v1929 = vld [vmem:[%s1709 + $0x6d8] sm:$0xff]
        %v1930 = vld [vmem:[%s1709 + $0x6e0] sm:$0xff]
        %v1931 = vld [vmem:[%s1709 + $0x6e8] sm:$0xff]
        %v1932 = vld [vmem:[%s1709 + $0x6f0] sm:$0xff]
        %v1933 = vld [vmem:[%s1709 + $0x6f8] sm:$0xff]
        %v1934 = vld [vmem:[%s1709 + $0x700] sm:$0xff]
        %v1935 = vld [vmem:[%s1709 + $0x708] sm:$0xff]
        %v1936 = vld [vmem:[%s1709 + $0x710] sm:$0xff]
        %v1937 = vld [vmem:[%s1709 + $0x718] sm:$0xff]
        %v1938 = vld [vmem:[%s1709 + $0x720] sm:$0xff]
        %v1939 = vld [vmem:[%s1709 + $0x728] sm:$0xff]
        %v1940 = vld [vmem:[%s1709 + $0x730] sm:$0xff]
        %v1941 = vld [vmem:[%s1709 + $0x738] sm:$0xff]
        %v1942 = vld [vmem:[%s1709 + $0x740] sm:$0xff]
        %v1943 = vld [vmem:[%s1709 + $0x748] sm:$0xff]
        %v1944 = vld [vmem:[%s1709 + $0x750] sm:$0xff]
        %v1945 = vld [vmem:[%s1709 + $0x758] sm:$0xff]
        %v1946 = vld [vmem:[%s1709 + $0x760] sm:$0xff]
        %v1947 = vld [vmem:[%s1709 + $0x768] sm:$0xff]
        %v1948 = vld [vmem:[%s1709 + $0x770] sm:$0xff]
        %v1949 = vld [vmem:[%s1709 + $0x778] sm:$0xff]
        %v1950 = vld [vmem:[%s1709 + $0x780] sm:$0xff]
        %v1951 = vld [vmem:[%s1709 + $0x788] sm:$0xff]
        %v1952 = vld [vmem:[%s1709 + $0x790] sm:$0xff]
        %v1953 = vld [vmem:[%s1709 + $0x798] sm:$0xff]
        %v1954 = vld [vmem:[%s1709 + $0x7a0] sm:$0xff]
        %v1955 = vld [vmem:[%s1709 + $0x7a8] sm:$0xff]
        %v1956 = vld [vmem:[%s1709 + $0x7b0] sm:$0xff]
        %v1957 = vld [vmem:[%s1709 + $0x7b8] sm:$0xff]
        %v1958 = vld [vmem:[%s1709 + $0x7c0] sm:$0xff]
        %v1959 = vld [vmem:[%s1709 + $0x7c8] sm:$0xff]
        %v1960 = vld [vmem:[%s1709 + $0x7d0] sm:$0xff]
        %v1961 = vld [vmem:[%s1709 + $0x7d8] sm:$0xff]
        %v1962 = vld [vmem:[%s1709 + $0x7e0] sm:$0xff]
        %v1963 = vld [vmem:[%s1709 + $0x7e8] sm:$0xff]
        %v1964 = vld [vmem:[%s1709 + $0x7f0] sm:$0xff]
        %v1965 = vld [vmem:[%s1709 + $0x7f8] sm:$0xff]
        %1966 = vmatprep.subr.mxu0 0.0
        %1967 = vmatpush1.msra.mxu0 %v1710
        %1968 = vmatprep.subr.mxu0 0.0
        %1969 = vmatpush1.msra.mxu0 %v1711
        %1970 = vmatprep.subr.mxu0 0.0
        %1971 = vmatpush1.msra.mxu0 %v1712
        %1972 = vmatprep.subr.mxu0 0.0
        %1973 = vmatpush1.msra.mxu0 %v1713
        %1974 = vmatprep.subr.mxu0 0.0
        %1975 = vmatpush1.msra.mxu0 %v1714
        %1976 = vmatprep.subr.mxu0 0.0
        %1977 = vmatpush1.msra.mxu0 %v1715
        %1978 = vmatprep.subr.mxu0 0.0
        %1979 = vmatpush1.msra.mxu0 %v1716
        %1980 = vmatprep.subr.mxu0 0.0
        %1981 = vmatpush1.msra.mxu0 %v1717
        %1982 = vmatprep.subr.mxu0 0.0
        %1983 = vmatpush1.msra.mxu0 %v1718
        %1984 = vmatprep.subr.mxu0 0.0
        %1985 = vmatpush1.msra.mxu0 %v1719
        %1986 = vmatprep.subr.mxu0 0.0
        %1987 = vmatpush1.msra.mxu0 %v1720
        %1988 = vmatprep.subr.mxu0 0.0
        %1989 = vmatpush1.msra.mxu0 %v1721
        %1990 = vmatprep.subr.mxu0 0.0
        %1991 = vmatpush1.msra.mxu0 %v1722
        %1992 = vmatprep.subr.mxu0 0.0
        %1993 = vmatpush1.msra.mxu0 %v1723
        %1994 = vmatprep.subr.mxu0 0.0
        %1995 = vmatpush1.msra.mxu0 %v1724
        %1996 = vmatprep.subr.mxu0 0.0
        %1997 = vmatpush1.msra.mxu0 %v1725
        %1998 = vmatprep.subr.mxu0 0.0
        %1999 = vmatpush1.msra.mxu0 %v1726
        %2000 = vmatprep.subr.mxu0 0.0
        %2001 = vmatpush1.msra.mxu0 %v1727
        %2002 = vmatprep.subr.mxu0 0.0
        %2003 = vmatpush1.msra.mxu0 %v1728
        %2004 = vmatprep.subr.mxu0 0.0
        %2005 = vmatpush1.msra.mxu0 %v1729
        %2006 = vmatprep.subr.mxu0 0.0
        %2007 = vmatpush1.msra.mxu0 %v1730
        %2008 = vmatprep.subr.mxu0 0.0
        %2009 = vmatpush1.msra.mxu0 %v1731
        %2010 = vmatprep.subr.mxu0 0.0
        %2011 = vmatpush1.msra.mxu0 %v1732
        %2012 = vmatprep.subr.mxu0 0.0
        %2013 = vmatpush1.msra.mxu0 %v1733
        %2014 = vmatprep.subr.mxu0 0.0
        %2015 = vmatpush1.msra.mxu0 %v1734
        %2016 = vmatprep.subr.mxu0 0.0
        %2017 = vmatpush1.msra.mxu0 %v1735
        %2018 = vmatprep.subr.mxu0 0.0
        %2019 = vmatpush1.msra.mxu0 %v1736
        %2020 = vmatprep.subr.mxu0 0.0
        %2021 = vmatpush1.msra.mxu0 %v1737
        %2022 = vmatprep.subr.mxu0 0.0
        %2023 = vmatpush1.msra.mxu0 %v1738
        %2024 = vmatprep.subr.mxu0 0.0
        %2025 = vmatpush1.msra.mxu0 %v1739
        %2026 = vmatprep.subr.mxu0 0.0
        %2027 = vmatpush1.msra.mxu0 %v1740
        %2028 = vmatprep.subr.mxu0 0.0
        %2029 = vmatpush1.msra.mxu0 %v1741
        %2030 = vmatprep.mubr.f32.mxu0 %v1582
        %2031 = vmatmul.mubr.f32.gmra.mrb[0].mxu0 %v1581
        %v2032 = vpop.f32.mrb[0].mxu0
        %v2033 = vadd.f32 0.0, %v2032
        %v2034 = vpop.f32.mrb[0].mxu0
        %2035 = vmatprep.mubr.f32.mxu0 %v1598
        %2036 = vmatmul.mubr.f32.gmra.mrb[0].mxu0 %v1597
        %v2037 = vpop.f32.mrb[0].mxu0
        %v2038 = vadd.f32 0.0, %v2037
        %v2039 = vpop.f32.mrb[0].mxu0
        %2040 = vmatprep.mubr.f32.mxu0 %v1614
        %2041 = vmatmul.mubr.f32.gmra.mrb[0].mxu0 %v1613
        %v2042 = vpop.f32.mrb[0].mxu0
        %v2043 = vadd.f32 0.0, %v2042
        %v2044 = vpop.f32.mrb[0].mxu0
        %2045 = vmatprep.mubr.f32.mxu0 %v1630
        %2046 = vmatmul.mubr.f32.gmra.mrb[0].mxu0 %v1629
        %v2047 = vpop.f32.mrb[0].mxu0
        %v2048 = vadd.f32 0.0, %v2047
        %v2049 = vpop.f32.mrb[0].mxu0
        %2050 = vmatprep.mubr.f32.mxu0 %v1646
        %2051 = vmatmul.mubr.f32.gmra.mrb[0].mxu0 %v1645
        %v2052 = vpop.f32.mrb[0].mxu0
        %v2053 = vadd.f32 0.0, %v2052
        %v2054 = vpop.f32.mrb[0].mxu0
        %2055 = vmatprep.mubr.f32.mxu0 %v1662
        %2056 = vmatmul.mubr.f32.gmra.mrb[0].mxu0 %v1661
        %v2057 = vpop.f32.mrb[0].mxu0
        %v2058 = vadd.f32 0.0, %v2057
        %v2059 = vpop.f32.mrb[0].mxu0
        %2060 = vmatprep.mubr.f32.mxu0 %v1678
        %2061 = vmatmul.mubr.f32.gmra.mrb[0].mxu0 %v1677
        %v2062 = vpop.f32.mrb[0].mxu0
        %v2063 = vadd.f32 0.0, %v2062
        %v2064 = vpop.f32.mrb[0].mxu0
        %2065 = vmatprep.mubr.f32.mxu0 %v1694
        %2066 = vmatmul.mubr.f32.gmra.mrb[0].mxu0 %v1693
        %v2067 = vpop.f32.mrb[0].mxu0
        %v2068 = vadd.f32 0.0, %v2067
        %v2069 = vpop.f32.mrb[0].mxu0
        %2070 = vdwg.mxu0
        %2071 = vmatprep.subr.mxu0 0.0
        %2072 = vmatpush1.msra.mxu0 %v1742
        %2073 = vmatprep.subr.mxu0 0.0
        %2074 = vmatpush1.msra.mxu0 %v1743
        %2075 = vmatprep.subr.mxu0 0.0
        %2076 = vmatpush1.msra.mxu0 %v1744
        %2077 = vmatprep.subr.mxu0 0.0
        %2078 = vmatpush1.msra.mxu0 %v1745
        %2079 = vmatprep.subr.mxu0 0.0
        %2080 = vmatpush1.msra.mxu0 %v1746
        %2081 = vmatprep.subr.mxu0 0.0
        %2082 = vmatpush1.msra.mxu0 %v1747
        %2083 = vmatprep.subr.mxu0 0.0
        %2084 = vmatpush1.msra.mxu0 %v1748
        %2085 = vmatprep.subr.mxu0 0.0
        %2086 = vmatpush1.msra.mxu0 %v1749
        %2087 = vmatprep.subr.mxu0 0.0
        %2088 = vmatpush1.msra.mxu0 %v1750
        %2089 = vmatprep.subr.mxu0 0.0
        %2090 = vmatpush1.msra.mxu0 %v1751
        %2091 = vmatprep.subr.mxu0 0.0
        %2092 = vmatpush1.msra.mxu0 %v1752
        %2093 = vmatprep.subr.mxu0 0.0
        %2094 = vmatpush1.msra.mxu0 %v1753
        %2095 = vmatprep.subr.mxu0 0.0
        %2096 = vmatpush1.msra.mxu0 %v1754
        %2097 = vmatprep.subr.mxu0 0.0
        %2098 = vmatpush1.msra.mxu0 %v1755
        %2099 = vmatprep.subr.mxu0 0.0
        %2100 = vmatpush1.msra.mxu0 %v1756
        %2101 = vmatprep.subr.mxu0 0.0
        %2102 = vmatpush1.msra.mxu0 %v1757
        %2103 = vmatprep.subr.mxu0 0.0
        %2104 = vmatpush1.msra.mxu0 %v1758
        %2105 = vmatprep.subr.mxu0 0.0
        %2106 = vmatpush1.msra.mxu0 %v1759
        %2107 = vmatprep.subr.mxu0 0.0
        %2108 = vmatpush1.msra.mxu0 %v1760
        %2109 = vmatprep.subr.mxu0 0.0
        %2110 = vmatpush1.msra.mxu0 %v1761
        %2111 = vmatprep.subr.mxu0 0.0
        %2112 = vmatpush1.msra.mxu0 %v1762
        %2113 = vmatprep.subr.mxu0 0.0
        %2114 = vmatpush1.msra.mxu0 %v1763
        %2115 = vmatprep.subr.mxu0 0.0
        %2116 = vmatpush1.msra.mxu0 %v1764
        %2117 = vmatprep.subr.mxu0 0.0
        %2118 = vmatpush1.msra.mxu0 %v1765
        %2119 = vmatprep.subr.mxu0 0.0
        %2120 = vmatpush1.msra.mxu0 %v1766
        %2121 = vmatprep.subr.mxu0 0.0
        %2122 = vmatpush1.msra.mxu0 %v1767
        %2123 = vmatprep.subr.mxu0 0.0
        %2124 = vmatpush1.msra.mxu0 %v1768
        %2125 = vmatprep.subr.mxu0 0.0
        %2126 = vmatpush1.msra.mxu0 %v1769
        %2127 = vmatprep.subr.mxu0 0.0
        %2128 = vmatpush1.msra.mxu0 %v1770
        %2129 = vmatprep.subr.mxu0 0.0
        %2130 = vmatpush1.msra.mxu0 %v1771
        %2131 = vmatprep.subr.mxu0 0.0
        %2132 = vmatpush1.msra.mxu0 %v1772
        %2133 = vmatprep.subr.mxu0 0.0
        %2134 = vmatpush1.msra.mxu0 %v1773
        %2135 = vmatprep.mubr.f32.mxu0 %v1584
        %2136 = vmatmul.mubr.f32.gmra.mrb[0].mxu0 %v1583
        %v2137 = vpop.f32.mrb[0].mxu0
        %v2138 = vadd.f32 %v2033, %v2137
        %v2139 = vpop.f32.mrb[0].mxu0
        %2140 = vmatprep.mubr.f32.mxu0 %v1600
        %2141 = vmatmul.mubr.f32.gmra.mrb[0].mxu0 %v1599
        %v2142 = vpop.f32.mrb[0].mxu0
        %v2143 = vadd.f32 %v2038, %v2142
        %v2144 = vpop.f32.mrb[0].mxu0
        %2145 = vmatprep.mubr.f32.mxu0 %v1616
        %2146 = vmatmul.mubr.f32.gmra.mrb[0].mxu0 %v1615
        %v2147 = vpop.f32.mrb[0].mxu0
        %v2148 = vadd.f32 %v2043, %v2147
        %v2149 = vpop.f32.mrb[0].mxu0
        %2150 = vmatprep.mubr.f32.mxu0 %v1632
        %2151 = vmatmul.mubr.f32.gmra.mrb[0].mxu0 %v1631
        %v2152 = vpop.f32.mrb[0].mxu0
        %v2153 = vadd.f32 %v2048, %v2152
        %v2154 = vpop.f32.mrb[0].mxu0
        %2155 = vmatprep.mubr.f32.mxu0 %v1648
        %2156 = vmatmul.mubr.f32.gmra.mrb[0].mxu0 %v1647
        %v2157 = vpop.f32.mrb[0].mxu0
        %v2158 = vadd.f32 %v2053, %v2157
        %v2159 = vpop.f32.mrb[0].mxu0
        %2160 = vmatprep.mubr.f32.mxu0 %v1664
        %2161 = vmatmul.mubr.f32.gmra.mrb[0].mxu0 %v1663
        %v2162 = vpop.f32.mrb[0].mxu0
        %v2163 = vadd.f32 %v2058, %v2162
        %v2164 = vpop.f32.mrb[0].mxu0
        %2165 = vmatprep.mubr.f32.mxu0 %v1680
        %2166 = vmatmul.mubr.f32.gmra.mrb[0].mxu0 %v1679
        %v2167 = vpop.f32.mrb[0].mxu0
        %v2168 = vadd.f32 %v2063, %v2167
        %v2169 = vpop.f32.mrb[0].mxu0
        %2170 = vmatprep.mubr.f32.mxu0 %v1696
        %2171 = vmatmul.mubr.f32.gmra.mrb[0].mxu0 %v1695
        %v2172 = vpop.f32.mrb[0].mxu0
        %v2173 = vadd.f32 %v2068, %v2172
        %v2174 = vpop.f32.mrb[0].mxu0
        %2175 = vdwg.mxu0
        %2176 = vmatprep.subr.mxu0 0.0
        %2177 = vmatpush1.msra.mxu0 %v1774
        %2178 = vmatprep.subr.mxu0 0.0
        %2179 = vmatpush1.msra.mxu0 %v1775
        %2180 = vmatprep.subr.mxu0 0.0
        %2181 = vmatpush1.msra.mxu0 %v1776
        %2182 = vmatprep.subr.mxu0 0.0
        %2183 = vmatpush1.msra.mxu0 %v1777
        %2184 = vmatprep.subr.mxu0 0.0
        %2185 = vmatpush1.msra.mxu0 %v1778
        %2186 = vmatprep.subr.mxu0 0.0
        %2187 = vmatpush1.msra.mxu0 %v1779
        %2188 = vmatprep.subr.mxu0 0.0
        %2189 = vmatpush1.msra.mxu0 %v1780
        %2190 = vmatprep.subr.mxu0 0.0
        %2191 = vmatpush1.msra.mxu0 %v1781
        %2192 = vmatprep.subr.mxu0 0.0
        %2193 = vmatpush1.msra.mxu0 %v1782
        %2194 = vmatprep.subr.mxu0 0.0
        %2195 = vmatpush1.msra.mxu0 %v1783
        %2196 = vmatprep.subr.mxu0 0.0
        %2197 = vmatpush1.msra.mxu0 %v1784
        %2198 = vmatprep.subr.mxu0 0.0
        %2199 = vmatpush1.msra.mxu0 %v1785
        %2200 = vmatprep.subr.mxu0 0.0
        %2201 = vmatpush1.msra.mxu0 %v1786
        %2202 = vmatprep.subr.mxu0 0.0
        %2203 = vmatpush1.msra.mxu0 %v1787
        %2204 = vmatprep.subr.mxu0 0.0
        %2205 = vmatpush1.msra.mxu0 %v1788
        %2206 = vmatprep.subr.mxu0 0.0
        %2207 = vmatpush1.msra.mxu0 %v1789
        %2208 = vmatprep.subr.mxu0 0.0
        %2209 = vmatpush1.msra.mxu0 %v1790
        %2210 = vmatprep.subr.mxu0 0.0
        %2211 = vmatpush1.msra.mxu0 %v1791
        %2212 = vmatprep.subr.mxu0 0.0
        %2213 = vmatpush1.msra.mxu0 %v1792
        %2214 = vmatprep.subr.mxu0 0.0
        %2215 = vmatpush1.msra.mxu0 %v1793
        %2216 = vmatprep.subr.mxu0 0.0
        %2217 = vmatpush1.msra.mxu0 %v1794
        %2218 = vmatprep.subr.mxu0 0.0
        %2219 = vmatpush1.msra.mxu0 %v1795
        %2220 = vmatprep.subr.mxu0 0.0
        %2221 = vmatpush1.msra.mxu0 %v1796
        %2222 = vmatprep.subr.mxu0 0.0
        %2223 = vmatpush1.msra.mxu0 %v1797
        %2224 = vmatprep.subr.mxu0 0.0
        %2225 = vmatpush1.msra.mxu0 %v1798
        %2226 = vmatprep.subr.mxu0 0.0
        %2227 = vmatpush1.msra.mxu0 %v1799
        %2228 = vmatprep.subr.mxu0 0.0
        %2229 = vmatpush1.msra.mxu0 %v1800
        %2230 = vmatprep.subr.mxu0 0.0
        %2231 = vmatpush1.msra.mxu0 %v1801
        %2232 = vmatprep.subr.mxu0 0.0
        %2233 = vmatpush1.msra.mxu0 %v1802
        %2234 = vmatprep.subr.mxu0 0.0
        %2235 = vmatpush1.msra.mxu0 %v1803
        %2236 = vmatprep.subr.mxu0 0.0
        %2237 = vmatpush1.msra.mxu0 %v1804
        %2238 = vmatprep.subr.mxu0 0.0
        %2239 = vmatpush1.msra.mxu0 %v1805
        %2240 = vmatprep.mubr.f32.mxu0 %v1586
        %2241 = vmatmul.mubr.f32.gmra.mrb[0].mxu0 %v1585
        %v2242 = vpop.f32.mrb[0].mxu0
        %v2243 = vadd.f32 %v2138, %v2242
        %v2244 = vpop.f32.mrb[0].mxu0
        %2245 = vmatprep.mubr.f32.mxu0 %v1602
        %2246 = vmatmul.mubr.f32.gmra.mrb[0].mxu0 %v1601
        %v2247 = vpop.f32.mrb[0].mxu0
        %v2248 = vadd.f32 %v2143, %v2247
        %v2249 = vpop.f32.mrb[0].mxu0
        %2250 = vmatprep.mubr.f32.mxu0 %v1618
        %2251 = vmatmul.mubr.f32.gmra.mrb[0].mxu0 %v1617
        %v2252 = vpop.f32.mrb[0].mxu0
        %v2253 = vadd.f32 %v2148, %v2252
        %v2254 = vpop.f32.mrb[0].mxu0
        %2255 = vmatprep.mubr.f32.mxu0 %v1634
        %2256 = vmatmul.mubr.f32.gmra.mrb[0].mxu0 %v1633
        %v2257 = vpop.f32.mrb[0].mxu0
        %v2258 = vadd.f32 %v2153, %v2257
        %v2259 = vpop.f32.mrb[0].mxu0
        %2260 = vmatprep.mubr.f32.mxu0 %v1650
        %2261 = vmatmul.mubr.f32.gmra.mrb[0].mxu0 %v1649
        %v2262 = vpop.f32.mrb[0].mxu0
        %v2263 = vadd.f32 %v2158, %v2262
        %v2264 = vpop.f32.mrb[0].mxu0
        %2265 = vmatprep.mubr.f32.mxu0 %v1666
        %2266 = vmatmul.mubr.f32.gmra.mrb[0].mxu0 %v1665
        %v2267 = vpop.f32.mrb[0].mxu0
        %v2268 = vadd.f32 %v2163, %v2267
        %v2269 = vpop.f32.mrb[0].mxu0
        %2270 = vmatprep.mubr.f32.mxu0 %v1682
        %2271 = vmatmul.mubr.f32.gmra.mrb[0].mxu0 %v1681
        %v2272 = vpop.f32.mrb[0].mxu0
        %v2273 = vadd.f32 %v2168, %v2272
        %v2274 = vpop.f32.mrb[0].mxu0
        %2275 = vmatprep.mubr.f32.mxu0 %v1698
        %2276 = vmatmul.mubr.f32.gmra.mrb[0].mxu0 %v1697
        %v2277 = vpop.f32.mrb[0].mxu0
        %v2278 = vadd.f32 %v2173, %v2277
        %v2279 = vpop.f32.mrb[0].mxu0
        %2280 = vdwg.mxu0
        %2281 = vmatprep.subr.mxu0 0.0
        %2282 = vmatpush1.msra.mxu0 %v1806
        %2283 = vmatprep.subr.mxu0 0.0
        %2284 = vmatpush1.msra.mxu0 %v1807
        %2285 = vmatprep.subr.mxu0 0.0
        %2286 = vmatpush1.msra.mxu0 %v1808
        %2287 = vmatprep.subr.mxu0 0.0
        %2288 = vmatpush1.msra.mxu0 %v1809
        %2289 = vmatprep.subr.mxu0 0.0
        %2290 = vmatpush1.msra.mxu0 %v1810
        %2291 = vmatprep.subr.mxu0 0.0
        %2292 = vmatpush1.msra.mxu0 %v1811
        %2293 = vmatprep.subr.mxu0 0.0
        %2294 = vmatpush1.msra.mxu0 %v1812
        %2295 = vmatprep.subr.mxu0 0.0
        %2296 = vmatpush1.msra.mxu0 %v1813
        %2297 = vmatprep.subr.mxu0 0.0
        %2298 = vmatpush1.msra.mxu0 %v1814
        %2299 = vmatprep.subr.mxu0 0.0
        %2300 = vmatpush1.msra.mxu0 %v1815
        %2301 = vmatprep.subr.mxu0 0.0
        %2302 = vmatpush1.msra.mxu0 %v1816
        %2303 = vmatprep.subr.mxu0 0.0
        %2304 = vmatpush1.msra.mxu0 %v1817
        %2305 = vmatprep.subr.mxu0 0.0
        %2306 = vmatpush1.msra.mxu0 %v1818
        %2307 = vmatprep.subr.mxu0 0.0
        %2308 = vmatpush1.msra.mxu0 %v1819
        %2309 = vmatprep.subr.mxu0 0.0
        %2310 = vmatpush1.msra.mxu0 %v1820
        %2311 = vmatprep.subr.mxu0 0.0
        %2312 = vmatpush1.msra.mxu0 %v1821
        %2313 = vmatprep.subr.mxu0 0.0
        %2314 = vmatpush1.msra.mxu0 %v1822
        %2315 = vmatprep.subr.mxu0 0.0
        %2316 = vmatpush1.msra.mxu0 %v1823
        %2317 = vmatprep.subr.mxu0 0.0
        %2318 = vmatpush1.msra.mxu0 %v1824
        %2319 = vmatprep.subr.mxu0 0.0
        %2320 = vmatpush1.msra.mxu0 %v1825
        %2321 = vmatprep.subr.mxu0 0.0
        %2322 = vmatpush1.msra.mxu0 %v1826
        %2323 = vmatprep.subr.mxu0 0.0
        %2324 = vmatpush1.msra.mxu0 %v1827
        %2325 = vmatprep.subr.mxu0 0.0
        %2326 = vmatpush1.msra.mxu0 %v1828
        %2327 = vmatprep.subr.mxu0 0.0
        %2328 = vmatpush1.msra.mxu0 %v1829
        %2329 = vmatprep.subr.mxu0 0.0
        %2330 = vmatpush1.msra.mxu0 %v1830
        %2331 = vmatprep.subr.mxu0 0.0
        %2332 = vmatpush1.msra.mxu0 %v1831
        %2333 = vmatprep.subr.mxu0 0.0
        %2334 = vmatpush1.msra.mxu0 %v1832
        %2335 = vmatprep.subr.mxu0 0.0
        %2336 = vmatpush1.msra.mxu0 %v1833
        %2337 = vmatprep.subr.mxu0 0.0
        %2338 = vmatpush1.msra.mxu0 %v1834
        %2339 = vmatprep.subr.mxu0 0.0
        %2340 = vmatpush1.msra.mxu0 %v1835
        %2341 = vmatprep.subr.mxu0 0.0
        %2342 = vmatpush1.msra.mxu0 %v1836
        %2343 = vmatprep.subr.mxu0 0.0
        %2344 = vmatpush1.msra.mxu0 %v1837
        %2345 = vmatprep.mubr.f32.mxu0 %v1588
        %2346 = vmatmul.mubr.f32.gmra.mrb[0].mxu0 %v1587
        %v2347 = vpop.f32.mrb[0].mxu0
        %v2348 = vadd.f32 %v2243, %v2347
        %v2349 = vpop.f32.mrb[0].mxu0
        %2350 = vmatprep.mubr.f32.mxu0 %v1604
        %2351 = vmatmul.mubr.f32.gmra.mrb[0].mxu0 %v1603
        %v2352 = vpop.f32.mrb[0].mxu0
        %v2353 = vadd.f32 %v2248, %v2352
        %v2354 = vpop.f32.mrb[0].mxu0
        %2355 = vmatprep.mubr.f32.mxu0 %v1620
        %2356 = vmatmul.mubr.f32.gmra.mrb[0].mxu0 %v1619
        %v2357 = vpop.f32.mrb[0].mxu0
        %v2358 = vadd.f32 %v2253, %v2357
        %v2359 = vpop.f32.mrb[0].mxu0
        %2360 = vmatprep.mubr.f32.mxu0 %v1636
        %2361 = vmatmul.mubr.f32.gmra.mrb[0].mxu0 %v1635
        %v2362 = vpop.f32.mrb[0].mxu0
        %v2363 = vadd.f32 %v2258, %v2362
        %v2364 = vpop.f32.mrb[0].mxu0
        %2365 = vmatprep.mubr.f32.mxu0 %v1652
        %2366 = vmatmul.mubr.f32.gmra.mrb[0].mxu0 %v1651
        %v2367 = vpop.f32.mrb[0].mxu0
        %v2368 = vadd.f32 %v2263, %v2367
        %v2369 = vpop.f32.mrb[0].mxu0
        %2370 = vmatprep.mubr.f32.mxu0 %v1668
        %2371 = vmatmul.mubr.f32.gmra.mrb[0].mxu0 %v1667
        %v2372 = vpop.f32.mrb[0].mxu0
        %v2373 = vadd.f32 %v2268, %v2372
        %v2374 = vpop.f32.mrb[0].mxu0
        %2375 = vmatprep.mubr.f32.mxu0 %v1684
        %2376 = vmatmul.mubr.f32.gmra.mrb[0].mxu0 %v1683
        %v2377 = vpop.f32.mrb[0].mxu0
        %v2378 = vadd.f32 %v2273, %v2377
        %v2379 = vpop.f32.mrb[0].mxu0
        %2380 = vmatprep.mubr.f32.mxu0 %v1700
        %2381 = vmatmul.mubr.f32.gmra.mrb[0].mxu0 %v1699
        %v2382 = vpop.f32.mrb[0].mxu0
        %v2383 = vadd.f32 %v2278, %v2382
        %v2384 = vpop.f32.mrb[0].mxu0
        %2385 = vdwg.mxu0
        %2386 = vmatprep.subr.mxu0 0.0
        %2387 = vmatpush1.msra.mxu0 %v1838
        %2388 = vmatprep.subr.mxu0 0.0
        %2389 = vmatpush1.msra.mxu0 %v1839
        %2390 = vmatprep.subr.mxu0 0.0
        %2391 = vmatpush1.msra.mxu0 %v1840
        %2392 = vmatprep.subr.mxu0 0.0
        %2393 = vmatpush1.msra.mxu0 %v1841
        %2394 = vmatprep.subr.mxu0 0.0
        %2395 = vmatpush1.msra.mxu0 %v1842
        %2396 = vmatprep.subr.mxu0 0.0
        %2397 = vmatpush1.msra.mxu0 %v1843
        %2398 = vmatprep.subr.mxu0 0.0
        %2399 = vmatpush1.msra.mxu0 %v1844
        %2400 = vmatprep.subr.mxu0 0.0
        %2401 = vmatpush1.msra.mxu0 %v1845
        %2402 = vmatprep.subr.mxu0 0.0
        %2403 = vmatpush1.msra.mxu0 %v1846
        %2404 = vmatprep.subr.mxu0 0.0
        %2405 = vmatpush1.msra.mxu0 %v1847
        %2406 = vmatprep.subr.mxu0 0.0
        %2407 = vmatpush1.msra.mxu0 %v1848
        %2408 = vmatprep.subr.mxu0 0.0
        %2409 = vmatpush1.msra.mxu0 %v1849
        %2410 = vmatprep.subr.mxu0 0.0
        %2411 = vmatpush1.msra.mxu0 %v1850
        %2412 = vmatprep.subr.mxu0 0.0
        %2413 = vmatpush1.msra.mxu0 %v1851
        %2414 = vmatprep.subr.mxu0 0.0
        %2415 = vmatpush1.msra.mxu0 %v1852
        %2416 = vmatprep.subr.mxu0 0.0
        %2417 = vmatpush1.msra.mxu0 %v1853
        %2418 = vmatprep.subr.mxu0 0.0
        %2419 = vmatpush1.msra.mxu0 %v1854
        %2420 = vmatprep.subr.mxu0 0.0
        %2421 = vmatpush1.msra.mxu0 %v1855
        %2422 = vmatprep.subr.mxu0 0.0
        %2423 = vmatpush1.msra.mxu0 %v1856
        %2424 = vmatprep.subr.mxu0 0.0
        %2425 = vmatpush1.msra.mxu0 %v1857
        %2426 = vmatprep.subr.mxu0 0.0
        %2427 = vmatpush1.msra.mxu0 %v1858
        %2428 = vmatprep.subr.mxu0 0.0
        %2429 = vmatpush1.msra.mxu0 %v1859
        %2430 = vmatprep.subr.mxu0 0.0
        %2431 = vmatpush1.msra.mxu0 %v1860
        %2432 = vmatprep.subr.mxu0 0.0
        %2433 = vmatpush1.msra.mxu0 %v1861
        %2434 = vmatprep.subr.mxu0 0.0
        %2435 = vmatpush1.msra.mxu0 %v1862
        %2436 = vmatprep.subr.mxu0 0.0
        %2437 = vmatpush1.msra.mxu0 %v1863
        %2438 = vmatprep.subr.mxu0 0.0
        %2439 = vmatpush1.msra.mxu0 %v1864
        %2440 = vmatprep.subr.mxu0 0.0
        %2441 = vmatpush1.msra.mxu0 %v1865
        %2442 = vmatprep.subr.mxu0 0.0
        %2443 = vmatpush1.msra.mxu0 %v1866
        %2444 = vmatprep.subr.mxu0 0.0
        %2445 = vmatpush1.msra.mxu0 %v1867
        %2446 = vmatprep.subr.mxu0 0.0
        %2447 = vmatpush1.msra.mxu0 %v1868
        %2448 = vmatprep.subr.mxu0 0.0
        %2449 = vmatpush1.msra.mxu0 %v1869
        %2450 = vmatprep.mubr.f32.mxu0 %v1590
        %2451 = vmatmul.mubr.f32.gmra.mrb[0].mxu0 %v1589
        %v2452 = vpop.f32.mrb[0].mxu0
        %v2453 = vadd.f32 %v2348, %v2452
        %v2454 = vpop.f32.mrb[0].mxu0
        %2455 = vmatprep.mubr.f32.mxu0 %v1606
        %2456 = vmatmul.mubr.f32.gmra.mrb[0].mxu0 %v1605
        %v2457 = vpop.f32.mrb[0].mxu0
        %v2458 = vadd.f32 %v2353, %v2457
        %v2459 = vpop.f32.mrb[0].mxu0
        %2460 = vmatprep.mubr.f32.mxu0 %v1622
        %2461 = vmatmul.mubr.f32.gmra.mrb[0].mxu0 %v1621
        %v2462 = vpop.f32.mrb[0].mxu0
        %v2463 = vadd.f32 %v2358, %v2462
        %v2464 = vpop.f32.mrb[0].mxu0
        %2465 = vmatprep.mubr.f32.mxu0 %v1638
        %2466 = vmatmul.mubr.f32.gmra.mrb[0].mxu0 %v1637
        %v2467 = vpop.f32.mrb[0].mxu0
        %v2468 = vadd.f32 %v2363, %v2467
        %v2469 = vpop.f32.mrb[0].mxu0
        %2470 = vmatprep.mubr.f32.mxu0 %v1654
        %2471 = vmatmul.mubr.f32.gmra.mrb[0].mxu0 %v1653
        %v2472 = vpop.f32.mrb[0].mxu0
        %v2473 = vadd.f32 %v2368, %v2472
        %v2474 = vpop.f32.mrb[0].mxu0
        %2475 = vmatprep.mubr.f32.mxu0 %v1670
        %2476 = vmatmul.mubr.f32.gmra.mrb[0].mxu0 %v1669
        %v2477 = vpop.f32.mrb[0].mxu0
        %v2478 = vadd.f32 %v2373, %v2477
        %v2479 = vpop.f32.mrb[0].mxu0
        %2480 = vmatprep.mubr.f32.mxu0 %v1686
        %2481 = vmatmul.mubr.f32.gmra.mrb[0].mxu0 %v1685
        %v2482 = vpop.f32.mrb[0].mxu0
        %v2483 = vadd.f32 %v2378, %v2482
        %v2484 = vpop.f32.mrb[0].mxu0
        %2485 = vmatprep.mubr.f32.mxu0 %v1702
        %2486 = vmatmul.mubr.f32.gmra.mrb[0].mxu0 %v1701
        %v2487 = vpop.f32.mrb[0].mxu0
        %v2488 = vadd.f32 %v2383, %v2487
        %v2489 = vpop.f32.mrb[0].mxu0
        %2490 = vdwg.mxu0
        %2491 = vmatprep.subr.mxu0 0.0
        %2492 = vmatpush1.msra.mxu0 %v1870
        %2493 = vmatprep.subr.mxu0 0.0
        %2494 = vmatpush1.msra.mxu0 %v1871
        %2495 = vmatprep.subr.mxu0 0.0
        %2496 = vmatpush1.msra.mxu0 %v1872
        %2497 = vmatprep.subr.mxu0 0.0
        %2498 = vmatpush1.msra.mxu0 %v1873
        %2499 = vmatprep.subr.mxu0 0.0
        %2500 = vmatpush1.msra.mxu0 %v1874
        %2501 = vmatprep.subr.mxu0 0.0
        %2502 = vmatpush1.msra.mxu0 %v1875
        %2503 = vmatprep.subr.mxu0 0.0
        %2504 = vmatpush1.msra.mxu0 %v1876
        %2505 = vmatprep.subr.mxu0 0.0
        %2506 = vmatpush1.msra.mxu0 %v1877
        %2507 = vmatprep.subr.mxu0 0.0
        %2508 = vmatpush1.msra.mxu0 %v1878
        %2509 = vmatprep.subr.mxu0 0.0
        %2510 = vmatpush1.msra.mxu0 %v1879
        %2511 = vmatprep.subr.mxu0 0.0
        %2512 = vmatpush1.msra.mxu0 %v1880
        %2513 = vmatprep.subr.mxu0 0.0
        %2514 = vmatpush1.msra.mxu0 %v1881
        %2515 = vmatprep.subr.mxu0 0.0
        %2516 = vmatpush1.msra.mxu0 %v1882
        %2517 = vmatprep.subr.mxu0 0.0
        %2518 = vmatpush1.msra.mxu0 %v1883
        %2519 = vmatprep.subr.mxu0 0.0
        %2520 = vmatpush1.msra.mxu0 %v1884
        %2521 = vmatprep.subr.mxu0 0.0
        %2522 = vmatpush1.msra.mxu0 %v1885
        %2523 = vmatprep.subr.mxu0 0.0
        %2524 = vmatpush1.msra.mxu0 %v1886
        %2525 = vmatprep.subr.mxu0 0.0
        %2526 = vmatpush1.msra.mxu0 %v1887
        %2527 = vmatprep.subr.mxu0 0.0
        %2528 = vmatpush1.msra.mxu0 %v1888
        %2529 = vmatprep.subr.mxu0 0.0
        %2530 = vmatpush1.msra.mxu0 %v1889
        %2531 = vmatprep.subr.mxu0 0.0
        %2532 = vmatpush1.msra.mxu0 %v1890
        %2533 = vmatprep.subr.mxu0 0.0
        %2534 = vmatpush1.msra.mxu0 %v1891
        %2535 = vmatprep.subr.mxu0 0.0
        %2536 = vmatpush1.msra.mxu0 %v1892
        %2537 = vmatprep.subr.mxu0 0.0
        %2538 = vmatpush1.msra.mxu0 %v1893
        %2539 = vmatprep.subr.mxu0 0.0
        %2540 = vmatpush1.msra.mxu0 %v1894
        %2541 = vmatprep.subr.mxu0 0.0
        %2542 = vmatpush1.msra.mxu0 %v1895
        %2543 = vmatprep.subr.mxu0 0.0
        %2544 = vmatpush1.msra.mxu0 %v1896
        %2545 = vmatprep.subr.mxu0 0.0
        %2546 = vmatpush1.msra.mxu0 %v1897
        %2547 = vmatprep.subr.mxu0 0.0
        %2548 = vmatpush1.msra.mxu0 %v1898
        %2549 = vmatprep.subr.mxu0 0.0
        %2550 = vmatpush1.msra.mxu0 %v1899
        %2551 = vmatprep.subr.mxu0 0.0
        %2552 = vmatpush1.msra.mxu0 %v1900
        %2553 = vmatprep.subr.mxu0 0.0
        %2554 = vmatpush1.msra.mxu0 %v1901
        %2555 = vmatprep.mubr.f32.mxu0 %v1592
        %2556 = vmatmul.mubr.f32.gmra.mrb[0].mxu0 %v1591
        %v2557 = vpop.f32.mrb[0].mxu0
        %v2558 = vadd.f32 %v2453, %v2557
        %v2559 = vpop.f32.mrb[0].mxu0
        %2560 = vmatprep.mubr.f32.mxu0 %v1608
        %2561 = vmatmul.mubr.f32.gmra.mrb[0].mxu0 %v1607
        %v2562 = vpop.f32.mrb[0].mxu0
        %v2563 = vadd.f32 %v2458, %v2562
        %v2564 = vpop.f32.mrb[0].mxu0
        %2565 = vmatprep.mubr.f32.mxu0 %v1624
        %2566 = vmatmul.mubr.f32.gmra.mrb[0].mxu0 %v1623
        %v2567 = vpop.f32.mrb[0].mxu0
        %v2568 = vadd.f32 %v2463, %v2567
        %v2569 = vpop.f32.mrb[0].mxu0
        %2570 = vmatprep.mubr.f32.mxu0 %v1640
        %2571 = vmatmul.mubr.f32.gmra.mrb[0].mxu0 %v1639
        %v2572 = vpop.f32.mrb[0].mxu0
        %v2573 = vadd.f32 %v2468, %v2572
        %v2574 = vpop.f32.mrb[0].mxu0
        %2575 = vmatprep.mubr.f32.mxu0 %v1656
        %2576 = vmatmul.mubr.f32.gmra.mrb[0].mxu0 %v1655
        %v2577 = vpop.f32.mrb[0].mxu0
        %v2578 = vadd.f32 %v2473, %v2577
        %v2579 = vpop.f32.mrb[0].mxu0
        %2580 = vmatprep.mubr.f32.mxu0 %v1672
        %2581 = vmatmul.mubr.f32.gmra.mrb[0].mxu0 %v1671
        %v2582 = vpop.f32.mrb[0].mxu0
        %v2583 = vadd.f32 %v2478, %v2582
        %v2584 = vpop.f32.mrb[0].mxu0
        %2585 = vmatprep.mubr.f32.mxu0 %v1688
        %2586 = vmatmul.mubr.f32.gmra.mrb[0].mxu0 %v1687
        %v2587 = vpop.f32.mrb[0].mxu0
        %v2588 = vadd.f32 %v2483, %v2587
        %v2589 = vpop.f32.mrb[0].mxu0
        %2590 = vmatprep.mubr.f32.mxu0 %v1704
        %2591 = vmatmul.mubr.f32.gmra.mrb[0].mxu0 %v1703
        %v2592 = vpop.f32.mrb[0].mxu0
        %v2593 = vadd.f32 %v2488, %v2592
        %v2594 = vpop.f32.mrb[0].mxu0
        %2595 = vdwg.mxu0
        %2596 = vmatprep.subr.mxu0 0.0
        %2597 = vmatpush1.msra.mxu0 %v1902
        %2598 = vmatprep.subr.mxu0 0.0
        %2599 = vmatpush1.msra.mxu0 %v1903
        %2600 = vmatprep.subr.mxu0 0.0
        %2601 = vmatpush1.msra.mxu0 %v1904
        %2602 = vmatprep.subr.mxu0 0.0
        %2603 = vmatpush1.msra.mxu0 %v1905
        %2604 = vmatprep.subr.mxu0 0.0
        %2605 = vmatpush1.msra.mxu0 %v1906
        %2606 = vmatprep.subr.mxu0 0.0
        %2607 = vmatpush1.msra.mxu0 %v1907
        %2608 = vmatprep.subr.mxu0 0.0
        %2609 = vmatpush1.msra.mxu0 %v1908
        %2610 = vmatprep.subr.mxu0 0.0
        %2611 = vmatpush1.msra.mxu0 %v1909
        %2612 = vmatprep.subr.mxu0 0.0
        %2613 = vmatpush1.msra.mxu0 %v1910
        %2614 = vmatprep.subr.mxu0 0.0
        %2615 = vmatpush1.msra.mxu0 %v1911
        %2616 = vmatprep.subr.mxu0 0.0
        %2617 = vmatpush1.msra.mxu0 %v1912
        %2618 = vmatprep.subr.mxu0 0.0
        %2619 = vmatpush1.msra.mxu0 %v1913
        %2620 = vmatprep.subr.mxu0 0.0
        %2621 = vmatpush1.msra.mxu0 %v1914
        %2622 = vmatprep.subr.mxu0 0.0
        %2623 = vmatpush1.msra.mxu0 %v1915
        %2624 = vmatprep.subr.mxu0 0.0
        %2625 = vmatpush1.msra.mxu0 %v1916
        %2626 = vmatprep.subr.mxu0 0.0
        %2627 = vmatpush1.msra.mxu0 %v1917
        %2628 = vmatprep.subr.mxu0 0.0
        %2629 = vmatpush1.msra.mxu0 %v1918
        %2630 = vmatprep.subr.mxu0 0.0
        %2631 = vmatpush1.msra.mxu0 %v1919
        %2632 = vmatprep.subr.mxu0 0.0
        %2633 = vmatpush1.msra.mxu0 %v1920
        %2634 = vmatprep.subr.mxu0 0.0
        %2635 = vmatpush1.msra.mxu0 %v1921
        %2636 = vmatprep.subr.mxu0 0.0
        %2637 = vmatpush1.msra.mxu0 %v1922
        %2638 = vmatprep.subr.mxu0 0.0
        %2639 = vmatpush1.msra.mxu0 %v1923
        %2640 = vmatprep.subr.mxu0 0.0
        %2641 = vmatpush1.msra.mxu0 %v1924
        %2642 = vmatprep.subr.mxu0 0.0
        %2643 = vmatpush1.msra.mxu0 %v1925
        %2644 = vmatprep.subr.mxu0 0.0
        %2645 = vmatpush1.msra.mxu0 %v1926
        %2646 = vmatprep.subr.mxu0 0.0
        %2647 = vmatpush1.msra.mxu0 %v1927
        %2648 = vmatprep.subr.mxu0 0.0
        %2649 = vmatpush1.msra.mxu0 %v1928
        %2650 = vmatprep.subr.mxu0 0.0
        %2651 = vmatpush1.msra.mxu0 %v1929
        %2652 = vmatprep.subr.mxu0 0.0
        %2653 = vmatpush1.msra.mxu0 %v1930
        %2654 = vmatprep.subr.mxu0 0.0
        %2655 = vmatpush1.msra.mxu0 %v1931
        %2656 = vmatprep.subr.mxu0 0.0
        %2657 = vmatpush1.msra.mxu0 %v1932
        %2658 = vmatprep.subr.mxu0 0.0
        %2659 = vmatpush1.msra.mxu0 %v1933
        %2660 = vmatprep.mubr.f32.mxu0 %v1594
        %2661 = vmatmul.mubr.f32.gmra.mrb[0].mxu0 %v1593
        %v2662 = vpop.f32.mrb[0].mxu0
        %v2663 = vadd.f32 %v2558, %v2662
        %v2664 = vpop.f32.mrb[0].mxu0
        %2665 = vmatprep.mubr.f32.mxu0 %v1610
        %2666 = vmatmul.mubr.f32.gmra.mrb[0].mxu0 %v1609
        %v2667 = vpop.f32.mrb[0].mxu0
        %v2668 = vadd.f32 %v2563, %v2667
        %v2669 = vpop.f32.mrb[0].mxu0
        %2670 = vmatprep.mubr.f32.mxu0 %v1626
        %2671 = vmatmul.mubr.f32.gmra.mrb[0].mxu0 %v1625
        %v2672 = vpop.f32.mrb[0].mxu0
        %v2673 = vadd.f32 %v2568, %v2672
        %v2674 = vpop.f32.mrb[0].mxu0
        %2675 = vmatprep.mubr.f32.mxu0 %v1642
        %2676 = vmatmul.mubr.f32.gmra.mrb[0].mxu0 %v1641
        %v2677 = vpop.f32.mrb[0].mxu0
        %v2678 = vadd.f32 %v2573, %v2677
        %v2679 = vpop.f32.mrb[0].mxu0
        %2680 = vmatprep.mubr.f32.mxu0 %v1658
        %2681 = vmatmul.mubr.f32.gmra.mrb[0].mxu0 %v1657
        %v2682 = vpop.f32.mrb[0].mxu0
        %v2683 = vadd.f32 %v2578, %v2682
        %v2684 = vpop.f32.mrb[0].mxu0
        %2685 = vmatprep.mubr.f32.mxu0 %v1674
        %2686 = vmatmul.mubr.f32.gmra.mrb[0].mxu0 %v1673
        %v2687 = vpop.f32.mrb[0].mxu0
        %v2688 = vadd.f32 %v2583, %v2687
        %v2689 = vpop.f32.mrb[0].mxu0
        %2690 = vmatprep.mubr.f32.mxu0 %v1690
        %2691 = vmatmul.mubr.f32.gmra.mrb[0].mxu0 %v1689
        %v2692 = vpop.f32.mrb[0].mxu0
        %v2693 = vadd.f32 %v2588, %v2692
        %v2694 = vpop.f32.mrb[0].mxu0
        %2695 = vmatprep.mubr.f32.mxu0 %v1706
        %2696 = vmatmul.mubr.f32.gmra.mrb[0].mxu0 %v1705
        %v2697 = vpop.f32.mrb[0].mxu0
        %v2698 = vadd.f32 %v2593, %v2697
        %v2699 = vpop.f32.mrb[0].mxu0
        %2700 = vdwg.mxu0
        %2701 = vmatprep.subr.mxu0 0.0
        %2702 = vmatpush1.msra.mxu0 %v1934
        %2703 = vmatprep.subr.mxu0 0.0
        %2704 = vmatpush1.msra.mxu0 %v1935
        %2705 = vmatprep.subr.mxu0 0.0
        %2706 = vmatpush1.msra.mxu0 %v1936
        %2707 = vmatprep.subr.mxu0 0.0
        %2708 = vmatpush1.msra.mxu0 %v1937
        %2709 = vmatprep.subr.mxu0 0.0
        %2710 = vmatpush1.msra.mxu0 %v1938
        %2711 = vmatprep.subr.mxu0 0.0
        %2712 = vmatpush1.msra.mxu0 %v1939
        %2713 = vmatprep.subr.mxu0 0.0
        %2714 = vmatpush1.msra.mxu0 %v1940
        %2715 = vmatprep.subr.mxu0 0.0
        %2716 = vmatpush1.msra.mxu0 %v1941
        %2717 = vmatprep.subr.mxu0 0.0
        %2718 = vmatpush1.msra.mxu0 %v1942
        %2719 = vmatprep.subr.mxu0 0.0
        %2720 = vmatpush1.msra.mxu0 %v1943
        %2721 = vmatprep.subr.mxu0 0.0
        %2722 = vmatpush1.msra.mxu0 %v1944
        %2723 = vmatprep.subr.mxu0 0.0
        %2724 = vmatpush1.msra.mxu0 %v1945
        %2725 = vmatprep.subr.mxu0 0.0
        %2726 = vmatpush1.msra.mxu0 %v1946
        %2727 = vmatprep.subr.mxu0 0.0
        %2728 = vmatpush1.msra.mxu0 %v1947
        %2729 = vmatprep.subr.mxu0 0.0
        %2730 = vmatpush1.msra.mxu0 %v1948
        %2731 = vmatprep.subr.mxu0 0.0
        %2732 = vmatpush1.msra.mxu0 %v1949
        %2733 = vmatprep.subr.mxu0 0.0
        %2734 = vmatpush1.msra.mxu0 %v1950
        %2735 = vmatprep.subr.mxu0 0.0
        %2736 = vmatpush1.msra.mxu0 %v1951
        %2737 = vmatprep.subr.mxu0 0.0
        %2738 = vmatpush1.msra.mxu0 %v1952
        %2739 = vmatprep.subr.mxu0 0.0
        %2740 = vmatpush1.msra.mxu0 %v1953
        %2741 = vmatprep.subr.mxu0 0.0
        %2742 = vmatpush1.msra.mxu0 %v1954
        %2743 = vmatprep.subr.mxu0 0.0
        %2744 = vmatpush1.msra.mxu0 %v1955
        %2745 = vmatprep.subr.mxu0 0.0
        %2746 = vmatpush1.msra.mxu0 %v1956
        %2747 = vmatprep.subr.mxu0 0.0
        %2748 = vmatpush1.msra.mxu0 %v1957
        %2749 = vmatprep.subr.mxu0 0.0
        %2750 = vmatpush1.msra.mxu0 %v1958
        %2751 = vmatprep.subr.mxu0 0.0
        %2752 = vmatpush1.msra.mxu0 %v1959
        %2753 = vmatprep.subr.mxu0 0.0
        %2754 = vmatpush1.msra.mxu0 %v1960
        %2755 = vmatprep.subr.mxu0 0.0
        %2756 = vmatpush1.msra.mxu0 %v1961
        %2757 = vmatprep.subr.mxu0 0.0
        %2758 = vmatpush1.msra.mxu0 %v1962
        %2759 = vmatprep.subr.mxu0 0.0
        %2760 = vmatpush1.msra.mxu0 %v1963
        %2761 = vmatprep.subr.mxu0 0.0
        %2762 = vmatpush1.msra.mxu0 %v1964
        %2763 = vmatprep.subr.mxu0 0.0
        %2764 = vmatpush1.msra.mxu0 %v1965
        %2765 = vmatprep.mubr.f32.mxu0 %v1596
        %2766 = vmatmul.mubr.f32.gmra.mrb[0].mxu0 %v1595
        %v2767 = vpop.f32.mrb[0].mxu0
        %v2768 = vadd.f32 %v2663, %v2767
        %v2769 = vpop.f32.mrb[0].mxu0
        %2770 = vmatprep.mubr.f32.mxu0 %v1612
        %2771 = vmatmul.mubr.f32.gmra.mrb[0].mxu0 %v1611
        %v2772 = vpop.f32.mrb[0].mxu0
        %v2773 = vadd.f32 %v2668, %v2772
        %v2774 = vpop.f32.mrb[0].mxu0
        %2775 = vmatprep.mubr.f32.mxu0 %v1628
        %2776 = vmatmul.mubr.f32.gmra.mrb[0].mxu0 %v1627
        %v2777 = vpop.f32.mrb[0].mxu0
        %v2778 = vadd.f32 %v2673, %v2777
        %v2779 = vpop.f32.mrb[0].mxu0
        %2780 = vmatprep.mubr.f32.mxu0 %v1644
        %2781 = vmatmul.mubr.f32.gmra.mrb[0].mxu0 %v1643
        %v2782 = vpop.f32.mrb[0].mxu0
        %v2783 = vadd.f32 %v2678, %v2782
        %v2784 = vpop.f32.mrb[0].mxu0
        %2785 = vmatprep.mubr.f32.mxu0 %v1660
        %2786 = vmatmul.mubr.f32.gmra.mrb[0].mxu0 %v1659
        %v2787 = vpop.f32.mrb[0].mxu0
        %v2788 = vadd.f32 %v2683, %v2787
        %v2789 = vpop.f32.mrb[0].mxu0
        %2790 = vmatprep.mubr.f32.mxu0 %v1676
        %2791 = vmatmul.mubr.f32.gmra.mrb[0].mxu0 %v1675
        %v2792 = vpop.f32.mrb[0].mxu0
        %v2793 = vadd.f32 %v2688, %v2792
        %v2794 = vpop.f32.mrb[0].mxu0
        %2795 = vmatprep.mubr.f32.mxu0 %v1692
        %2796 = vmatmul.mubr.f32.gmra.mrb[0].mxu0 %v1691
        %v2797 = vpop.f32.mrb[0].mxu0
        %v2798 = vadd.f32 %v2693, %v2797
        %v2799 = vpop.f32.mrb[0].mxu0
        %2800 = vmatprep.mubr.f32.mxu0 %v1708
        %2801 = vmatmul.mubr.f32.gmra.mrb[0].mxu0 %v1707
        %v2802 = vpop.f32.mrb[0].mxu0
        %v2803 = vadd.f32 %v2698, %v2802
        %v2804 = vpop.f32.mrb[0].mxu0
        %2805 = vdwg.mxu0
        %v2806 = vld [vmem:[%s2] sm:$0xff]
        %v2807 = vld [vmem:[%s2 + $0x8] sm:$0xff]
        %v2808 = vld [vmem:[%s2 + $0x10] sm:$0xff]
        %v2809 = vld [vmem:[%s2 + $0x18] sm:$0xff]
        %v2811 = vsel %vm1454, %v2806, 0
        %v2814 = vsel %vm1454, %v2807, 0
        %v2817 = vsel %vm1454, %v2808, 0
        %v2820 = vsel %vm1454, %v2809, 0
        %v2823 = vsel %vm1454, %v2768, 0
        %v2826 = vsel %vm1454, %v2773, 0
        %v2829 = vsel %vm1454, %v2778, 0
        %v2832 = vsel %vm1454, %v2783, 0
        %v2835 = vsel %vm1454, %v2788, 0
        %v2838 = vsel %vm1454, %v2793, 0
        %v2841 = vsel %vm1454, %v2798, 0
        %v2844 = vsel %vm1454, %v2803, 0
        %2846 = vmatprep.subr.mxu0 0.0
        %2847 = vmatpush1.xpose.msra.mxu0 %v2823
        %2848 = vmatprep.subr.mxu0 0.0
        %2849 = vmatpush1.xpose.msra.mxu0 %v2826
        %2850 = vmatprep.subr.mxu0 0.0
        %2851 = vmatpush1.xpose.msra.mxu0 %v2829
        %2852 = vmatprep.subr.mxu0 0.0
        %2853 = vmatpush1.xpose.msra.mxu0 %v2832
        %2854 = vmatprep.subr.mxu0 0.0
        %2855 = vmatpush1.xpose.msra.mxu0 %v2835
        %2856 = vmatprep.subr.mxu0 0.0
        %2857 = vmatpush1.xpose.msra.mxu0 %v2838
        %2858 = vmatprep.subr.mxu0 0.0
        %2859 = vmatpush1.xpose.msra.mxu0 %v2841
        %2860 = vmatprep.subr.mxu0 0.0
        %2861 = vmatpush1.xpose.msra.mxu0 %v2844
        %2862 = vmatprep.subr.mxu0 0.0
        %2863 = vmatpush1.xpose.msra.mxu0 0.0
        %2864 = vmatprep.subr.mxu0 0.0
        %2865 = vmatpush1.xpose.msra.mxu0 0.0
        %2866 = vmatprep.subr.mxu0 0.0
        %2867 = vmatpush1.xpose.msra.mxu0 0.0
        %2868 = vmatprep.subr.mxu0 0.0
        %2869 = vmatpush1.xpose.msra.mxu0 0.0
        %2870 = vmatprep.subr.mxu0 0.0
        %2871 = vmatpush1.xpose.msra.mxu0 0.0
        %2872 = vmatprep.subr.mxu0 0.0
        %2873 = vmatpush1.xpose.msra.mxu0 0.0
        %2874 = vmatprep.subr.mxu0 0.0
        %2875 = vmatpush1.xpose.msra.mxu0 0.0
        %2876 = vmatprep.subr.mxu0 0.0
        %2877 = vmatpush1.xpose.msra.mxu0 0.0
        %2878 = vmatprep.subr.mxu0 0.0
        %2879 = vmatpush1.xpose.msra.mxu0 0.0
        %2880 = vmatprep.subr.mxu0 0.0
        %2881 = vmatpush1.xpose.msra.mxu0 0.0
        %2882 = vmatprep.subr.mxu0 0.0
        %2883 = vmatpush1.xpose.msra.mxu0 0.0
        %2884 = vmatprep.subr.mxu0 0.0
        %2885 = vmatpush1.xpose.msra.mxu0 0.0
        %2886 = vmatprep.subr.mxu0 0.0
        %2887 = vmatpush1.xpose.msra.mxu0 0.0
        %2888 = vmatprep.subr.mxu0 0.0
        %2889 = vmatpush1.xpose.msra.mxu0 0.0
        %2890 = vmatprep.subr.mxu0 0.0
        %2891 = vmatpush1.xpose.msra.mxu0 0.0
        %2892 = vmatprep.subr.mxu0 0.0
        %2893 = vmatpush1.xpose.msra.mxu0 0.0
        %2894 = vmatprep.subr.mxu0 0.0
        %2895 = vmatpush1.xpose.msra.mxu0 0.0
        %2896 = vmatprep.subr.mxu0 0.0
        %2897 = vmatpush1.xpose.msra.mxu0 0.0
        %2898 = vmatprep.subr.mxu0 0.0
        %2899 = vmatpush1.xpose.msra.mxu0 0.0
        %2900 = vmatprep.subr.mxu0 0.0
        %2901 = vmatpush1.xpose.msra.mxu0 0.0
        %2902 = vmatprep.subr.mxu0 0.0
        %2903 = vmatpush1.xpose.msra.mxu0 0.0
        %2904 = vmatprep.subr.mxu0 0.0
        %2905 = vmatpush1.xpose.msra.mxu0 0.0
        %2906 = vmatprep.subr.mxu0 0.0
        %2907 = vmatpush1.xpose.msra.mxu0 0.0
        %2908 = vmatprep.subr.mxu0 0.0
        %2909 = vmatpush1.xpose.msra.mxu0 0.0
        %2910 = vmatprep.mubr.f32.mxu0 0.0
        %2911 = vmatmul.mubr.f32.gmra.mrb[0].mxu0 %v2811
        %v2912 = vpop.f32.mrb[0].mxu0
        %v2913 = vadd.f32 %v1437, %v2912
        %v2914 = vpop.f32.mrb[0].mxu0
        %2915 = vmatprep.mubr.f32.mxu0 0.0
        %2916 = vmatmul.mubr.f32.gmra.mrb[0].mxu0 %v2814
        %v2917 = vpop.f32.mrb[0].mxu0
        %v2918 = vadd.f32 %v1442, %v2917
        %v2919 = vpop.f32.mrb[0].mxu0
        %2920 = vmatprep.mubr.f32.mxu0 0.0
        %2921 = vmatmul.mubr.f32.gmra.mrb[0].mxu0 %v2817
        %v2922 = vpop.f32.mrb[0].mxu0
        %v2923 = vadd.f32 %v1447, %v2922
        %v2924 = vpop.f32.mrb[0].mxu0
        %2925 = vmatprep.mubr.f32.mxu0 0.0
        %2926 = vmatmul.mubr.f32.gmra.mrb[0].mxu0 %v2820
        %v2927 = vpop.f32.mrb[0].mxu0
        %v2928 = vadd.f32 %v1452, %v2927
        %v2929 = vpop.f32.mrb[0].mxu0
        %2930 = vdwg.mxu0
        %s2931 = scalar_lea.vmem %s193, 32 [#allocation2]
        %2932 = vst.msk [vmem:[%s2931] sm:$0xff] %vm1576, %v2913
        %2933 = vst.msk [vmem:[%s2931 + $0x8] sm:$0xff] %vm1576, %v2918
        %2934 = vst.msk [vmem:[%s2931 + $0x10] sm:$0xff] %vm1576, %v2923
        %2935 = vst.msk [vmem:[%s2931 + $0x18] sm:$0xff] %vm1576, %v2928
        %s2936 = sand.u32 %s115, 1
        %s2937 = scalar_lea.sflag [#allocation3], %s2936
        %s2938 = sand.u32 %s115, 1
        %s2939 = smul.addr %s2938, 64
        %s2940 = scalar_lea.vmem [#allocation2], %s2939
        // Predicated region
        $region37: #{tpu_custom_call.1} parent=35 // pred_check
          %p2941 = pneg %p125
        $region38: #{tpu_custom_call.1} parent=35 // pred_check_branch
          %2943 = sbr.rel (%p2941) target = $region40
        $region39: #{tpu_custom_call.1} parent=35 // pred_region
          %s2944 = smul.u32 2, %s18
          %s2946 = ssub.s32 1024, 1024
          %2947 = vsyncadd %s2937, %s2946
          %s2948 = smul.addr %s2944, 4
          %s2949 = smul.addr %s2948, 128
          %s2950 = scalar_lea.hbm %s4, %s2949
          %s2951 = sshll.u32 %s2940, 4
          %s2952 = int_to_ptr.vmem [resolvable:$true] %s2951
          %2957 = dma.vmem_to_hbm [thread:$0]  %s2952, 1024, %s2950, %s2937, 128, 128, 8
        $region40: #{tpu_custom_call.1} parent=35 // pred_fallthru
          _
      $region36: #{tpu_custom_call.1} parent=5 // pred_fallthru
        _
      %p2958 = scmp.le.s32.totalorder 2, %s13
      // Predicated region
      $region41: #{tpu_custom_call.1} parent=5 // pred_check
        %p2959 = pneg %p2958
      $region42: #{tpu_custom_call.1} parent=5 // pred_check_branch
        %2961 = sbr.rel (%p2959) target = $region44
      $region43: #{tpu_custom_call.1} parent=5 // pred_region
        %s2962 = ssub.s32 %s13, 2
        // Predicated region
        $region45: #{tpu_custom_call.1} parent=43 // pred_check
          %p2963 = pneg %p131
        $region46: #{tpu_custom_call.1} parent=43 // pred_check_branch
          %2965 = sbr.rel (%p2963) target = $region48
        $region47: #{tpu_custom_call.1} parent=43 // pred_region
          %s2966 = sand.u32 %s116, 1
          %s2967 = scalar_lea.sflag [#allocation3], %s2966
          %s2968 = sand.u32 %s116, 1
          %s2969 = smul.addr %s2968, 64
          %s2970 = scalar_lea.vmem [#allocation2], %s2969
          %2971 = dma.done %s2967, 1024
        $region48: #{tpu_custom_call.1} parent=43 // pred_fallthru
          _
      $region44: #{tpu_custom_call.1} parent=5 // pred_fallthru
        _
    $region6: #{tpu_custom_call.1} parent=1 // loop_footer
      %s17 = sadd.s32 1, %s13
    $region7: #{tpu_custom_call.1} parent=1 // loop_footer_branch
      %12 = sbr.rel target = $region3
    $region8: #{tpu_custom_call.1} parent=1 // loop_exit
      _
    %2972 = vsyncpa [#allocation3], 1
    %s2973 = scalar_lea.sflag [#allocation3], 1
    %2974 = vsyncpa %s2973, 1

</llo_original>
